<compile_context>
chip_gen: v7x
topology: tpu7x:2x2x1
jax: 0.10.0
libtpu: 0.0.40
codegen_flags: <defaults>
</compile_context>

<pallas_src>
import math

import jax
import jax.numpy as jnp
import numpy as np
from jax.experimental import pallas as pl
from jax.experimental.pallas import tpu as pltpu

LN_EPS = 1e-5


def _layernorm(x, gamma, beta):
    mu = jnp.mean(x, axis=-1, keepdims=True)
    xc = x - mu
    var = jnp.mean(xc * xc, axis=-1, keepdims=True)
    inv = jax.lax.rsqrt(var + LN_EPS)
    return xc * inv * gamma + beta


def _gelu_exact(x):
    # PyTorch nn.GELU() default (approximate='none'): 0.5*x*(1+erf(x/sqrt(2)))
    return 0.5 * x * (1.0 + jax.lax.erf(x * (1.0 / math.sqrt(2.0))))


def make_encoder_block_kernel(num_heads, embed_dim, seq_len, kv_rows, ffn_chunk):
    E = embed_dim
    H = num_heads
    Dh = E // H
    S = seq_len
    H4 = 4 * E
    NT = (((1,), (1,)), ((), ()))  # q @ k^T: contract last dims, no batch dims

    def kernel(xq_ref, xkv_ref, wq_ref, wk_ref, wv_ref, wo_ref,
               w1_ref, b1_ref, w2_ref, vecs_ref, o_ref, k_scr, v_scr):
        qi = pl.program_id(1)

        vecs = vecs_ref[...]                               # (9, E) f32, tiny
        bq, bk, bv = vecs[0:1], vecs[1:2], vecs[2:3]
        bo, g1, be1 = vecs[3:4], vecs[4:5], vecs[5:6]
        b2, g2, be2 = vecs[6:7], vecs[7:8], vecs[8:9]

        # ---- K/V projection: once per batch element, into head-major bf16
        #      scratch. Chunked over S so the transient f32 block is bounded.
        @pl.when(qi == 0)
        def _():
            for c in range(S // kv_rows):
                r0 = c * kv_rows
                xs = xkv_ref[r0:r0 + kv_rows, :]            # (kv_rows, E) bf16
                kc = (jnp.dot(xs, wk_ref[...],
                              preferred_element_type=jnp.float32) + bk
                      ).astype(jnp.bfloat16)
                vc = (jnp.dot(xs, wv_ref[...],
                              preferred_element_type=jnp.float32) + bv
                      ).astype(jnp.bfloat16)
                for h in range(H):
                    sl = slice(h * Dh, (h + 1) * Dh)
                    k_scr[h, r0:r0 + kv_rows, :] = kc[:, sl]
                    v_scr[h, r0:r0 + kv_rows, :] = vc[:, sl]

        # ---- Q projection for this query tile (1/sqrt(Dh) folded into wq/bq).
        xq_f32 = xq_ref[...].astype(jnp.float32)            # (TQ, E) f32 input
        xq_bf = xq_f32.astype(jnp.bfloat16)
        q_bf = (jnp.dot(xq_bf, wq_ref[...],
                        preferred_element_type=jnp.float32) + bq
                ).astype(jnp.bfloat16)                      # cast once, pre-loop

        # ---- Per-head attention; heads are folded directly into the Wo
        #      projection by accumulation (no concat scratch / lane stores).
        attn = None
        for h in range(H):
            sl = slice(h * Dh, (h + 1) * Dh)
            qh = q_bf[:, sl]                                 # (TQ, Dh) bf16
            kh = k_scr[h]                                    # (S, Dh) bf16
            vh = v_scr[h]                                    # (S, Dh) bf16
            s = jax.lax.dot_general(qh, kh, NT,
                                    preferred_element_type=jnp.float32)  # (TQ,S)
            s = s - jnp.max(s, axis=-1, keepdims=True)
            p = jnp.exp(s)                                   # unnormalized, f32
            inv = pl.reciprocal(jnp.sum(p, axis=-1, keepdims=True), approx=True)
            oh = jnp.dot(p.astype(jnp.bfloat16), vh,
                         preferred_element_type=jnp.float32)  # (TQ, Dh)
            oh = (oh * inv).astype(jnp.bfloat16)             # deferred softmax norm
            proj = jnp.dot(oh, wo_ref[sl, :],
                           preferred_element_type=jnp.float32)  # (TQ, E)
            attn = proj if attn is None else attn + proj
        attn = attn + bo

        # ---- residual (f32 input) + LayerNorm 1 (f32) ----
        x1 = _layernorm(xq_f32 + attn, g1, be1)

        # ---- FFN: Linear -> GELU -> (Dropout=identity) -> Linear,
        #      hidden dimension chunked to bound the f32 GELU intermediate ----
        x1_bf = x1.astype(jnp.bfloat16)
        ff = None
        for c0 in range(0, H4, ffn_chunk):
            hmid = (jnp.dot(x1_bf, w1_ref[:, c0:c0 + ffn_chunk],
                            preferred_element_type=jnp.float32)
                    + b1_ref[:, c0:c0 + ffn_chunk])
            hmid = _gelu_exact(hmid).astype(jnp.bfloat16)    # GELU in f32
            fc = jnp.dot(hmid, w2_ref[c0:c0 + ffn_chunk, :],
                         preferred_element_type=jnp.float32)
            ff = fc if ff is None else ff + fc
        ff = ff + b2

        # ---- residual + LayerNorm 2 ----
        x2 = _layernorm(x1 + ff, g2, be2)
        o_ref[...] = x2.astype(o_ref.dtype)

    return kernel


def _largest_divisor_tile(n, cap):
    """Largest divisor of n that is <= cap and a multiple of 8 (else n)."""
    if n <= cap:
        return n
    for t in range(cap - cap % 8, 7, -8):
        if n % t == 0:
            return t
    return n  # pathological n: fall back to one full-size tile


def _default_q_tile_cap():
    # v6e/v7x MXUs are 2x256^2 -> M=256 fills them; older chips keep 128.
    try:
        kind = jax.devices()[0].device_kind.lower()
    except Exception:
        return 128
    for old in ("v2", "v3", "v4", "v5"):
        if old in kind:
            return 128
    return 256


def _pick_vmem_limit_bytes():
    # Re-derive VMEM budget from the actual chip (v7x: 64 MiB/TC, v5e/v6e:
    # 128 MiB); leave headroom for Mosaic's internal scratch.
    try:
        cap = int(pltpu.get_tpu_info().vmem_capacity_bytes)
        return int(min(96 * 1024 * 1024, (3 * cap) // 4))
    except Exception:
        return 64 * 1024 * 1024


def transformer_encoder_block(x, params, num_heads, *, q_tile=None):
    """x: (B, S, E) float32. params: dict of (in, out)-layout f32 weights."""
    B, S, E = x.shape
    assert E % num_heads == 0
    H4 = 4 * E
    Dh = E // num_heads
    out_dtype = x.dtype
    cdt = jnp.bfloat16                     # MXU input dtype; accumulation is f32
    scale = 1.0 / math.sqrt(Dh)

    # Host-side weight prep: fold 1/sqrt(Dh) into Wq/bq, cast MXU weights to
    # bf16, pack the nine (1, E) bias/affine vectors into a single input.
    wq = (params["wq"] * scale).astype(cdt)
    wk = params["wk"].astype(cdt)
    wv = params["wv"].astype(cdt)
    wo = params["wo"].astype(cdt)
    w1 = params["w1"].astype(cdt)
    w2 = params["w2"].astype(cdt)
    b1 = params["b1"].astype(jnp.float32)
    vecs = jnp.concatenate(
        [params["bq"] * scale, params["bk"], params["bv"], params["bo"],
         params["g1"], params["be1"], params["b2"], params["g2"], params["be2"]],
        axis=0).astype(jnp.float32)                                     # (9, E)

    cap = q_tile if q_tile is not None else _default_q_tile_cap()
    TQ = _largest_divisor_tile(S, cap)          # largest divisor of S <= cap
    nq = S // TQ
    kv_rows = _largest_divisor_tile(S, 1024)    # bounds the f32 K/V transient
    ffn_chunk = _largest_divisor_tile(H4, 2048)  # bounds the f32 GELU block
    # TODO(synk): for very large E on v7x, additionally stream W1/W2 tiles from
    # HBM (pltpu.emit_pipeline) instead of keeping them fully VMEM-resident.

    x_kv = x.astype(cdt)   # bf16 full-sequence view, used only for K/V matmuls
    kernel = make_encoder_block_kernel(num_heads, E, S, kv_rows, ffn_chunk)

    def build_and_run(single_buffer_weights):
        if single_buffer_weights:
            # Constant-index weight blocks are never re-DMA'd -> one buffer.
            def const_spec(shape):
                return pl.BlockSpec(shape, lambda b, qi: (0, 0),
                                    pipeline_mode=pl.Buffered(1))
        else:
            def const_spec(shape):
                return pl.BlockSpec(shape, lambda b, qi: (0, 0))

        in_specs = [
            # f32 query tile (Q projection + both residual adds stay f32).
            pl.BlockSpec((None, TQ, E), lambda b, qi: (b, qi, 0)),
            # bf16 full-sequence block, consumed only at qi == 0 for K/V.
            pl.BlockSpec((None, S, E), lambda b, qi: (b, 0, 0)),
            const_spec((E, E)),      # Wq (scale folded)
            const_spec((E, E)),      # Wk
            const_spec((E, E)),      # Wv
            const_spec((E, E)),      # Wo
            const_spec((E, H4)),     # W1
            const_spec((1, H4)),     # b1
            const_spec((H4, E)),     # W2
            const_spec((9, E)),      # packed [bq, bk, bv, bo, g1, be1, b2, g2, be2]
        ]
        return pl.pallas_call(
            kernel,
            out_shape=jax.ShapeDtypeStruct((B, S, E), out_dtype),
            grid_spec=pltpu.PrefetchScalarGridSpec(
                num_scalar_prefetch=0,
                grid=(B, nq),
                in_specs=in_specs,
                out_specs=pl.BlockSpec((None, TQ, E), lambda b, qi: (b, qi, 0)),
                scratch_shapes=[
                    pltpu.VMEM((num_heads, S, Dh), cdt),   # K, head-major bf16
                    pltpu.VMEM((num_heads, S, Dh), cdt),   # V, head-major bf16
                ],
            ),
            compiler_params=pltpu.CompilerParams(
                # Query-tile axis carries the per-batch K/V scratch -> arbitrary.
                dimension_semantics=("parallel", "arbitrary"),
                vmem_limit_bytes=_pick_vmem_limit_bytes(),
            ),
        )(x, x_kv, wq, wk, wv, wo, w1, b1, w2, vecs)

    try:
        return build_and_run(True)
    except Exception:
        # Fallback for jax versions without BlockSpec(pipeline_mode=Buffered(1)).
        return build_and_run(False)


def reference_block(x, p, num_heads):
    """Pure-JAX f32 reference (mirrors PyTorch eval-mode forward)."""
    B, S, E = x.shape
    Dh = E // num_heads
    scale = 1.0 / math.sqrt(Dh)

    q = x @ p["wq"] + p["bq"]
    k = x @ p["wk"] + p["bk"]
    v = x @ p["wv"] + p["bv"]

    def heads(t):
        return t.reshape(B, S, num_heads, Dh).transpose(0, 2, 1, 3)

    qh, kh, vh = heads(q), heads(k), heads(v)
    s = jnp.einsum("bhqd,bhkd->bhqk", qh, kh) * scale
    pgt = jax.nn.softmax(s, axis=-1)
    o = jnp.einsum("bhqk,bhkd->bhqd", pgt, vh)
    o = o.transpose(0, 2, 1, 3).reshape(B, S, E)
    attn = o @ p["wo"] + p["bo"]

    def ln(t, g, b):
        mu = jnp.mean(t, axis=-1, keepdims=True)
        var = jnp.mean((t - mu) ** 2, axis=-1, keepdims=True)
        return (t - mu) / jnp.sqrt(var + LN_EPS) * g + b

    x1 = ln(x + attn, p["g1"], p["be1"])
    h = x1 @ p["w1"] + p["b1"]
    h = 0.5 * h * (1.0 + jax.lax.erf(h / math.sqrt(2.0)))
    ff = h @ p["w2"] + p["b2"]
    return ln(x1 + ff, p["g2"], p["be2"])


def make_params(key, E):
    H4 = 4 * E
    ks = jax.random.split(key, 12)
    return {
        "wq": 0.1 * jax.random.normal(ks[0], (E, E), jnp.float32),
        "wk": 0.1 * jax.random.normal(ks[1], (E, E), jnp.float32),
        "wv": 0.1 * jax.random.normal(ks[2], (E, E), jnp.float32),
        "bq": 0.01 * jax.random.normal(ks[3], (1, E), jnp.float32),
        "bk": 0.01 * jax.random.normal(ks[4], (1, E), jnp.float32),
        "bv": 0.01 * jax.random.normal(ks[5], (1, E), jnp.float32),
        "wo": 0.1 * jax.random.normal(ks[6], (E, E), jnp.float32),
        "bo": 0.01 * jax.random.normal(ks[7], (1, E), jnp.float32),
        "g1": jnp.ones((1, E), jnp.float32),
        "be1": jnp.zeros((1, E), jnp.float32),
        "w1": 0.1 * jax.random.normal(ks[8], (E, H4), jnp.float32),
        "b1": 0.01 * jax.random.normal(ks[9], (1, H4), jnp.float32),
        "w2": 0.1 * jax.random.normal(ks[10], (H4, E), jnp.float32),
        "b2": 0.01 * jax.random.normal(ks[11], (1, E), jnp.float32),
        "g2": jnp.ones((1, E), jnp.float32),
        "be2": jnp.zeros((1, E), jnp.float32),
    }


if __name__ == "__main__":
    key = jax.random.PRNGKey(0)
    kp1, kx1, kp2, kx2 = jax.random.split(key, 4)

    # Test 1: small shapes (single query tile).
    B, S, E, NH = 2, 8, 32, 4
    params = make_params(kp1, E)
    x = jax.random.normal(kx1, (B, S, E), jnp.float32)
    out = jax.block_until_ready(transformer_encoder_block(x, params, NH))
    ref = reference_block(x, params, NH)
    # bf16 MXU inputs (f32 accumulation) vs. pure-f32 reference -> loosened tol.
    np.testing.assert_allclose(np.asarray(out, dtype=np.float32),
                               np.asarray(ref, dtype=np.float32),
                               rtol=3e-2, atol=3e-2)

    # Test 2: multiple query tiles — exercises the per-batch K/V scratch reuse
    # across the "arbitrary" query-tile axis.
    B2, S2, E2, NH2 = 2, 256, 64, 4
    params2 = make_params(kp2, E2)
    x2 = jax.random.normal(kx2, (B2, S2, E2), jnp.float32)
    out2 = jax.block_until_ready(
        transformer_encoder_block(x2, params2, NH2, q_tile=128))
    ref2 = reference_block(x2, params2, NH2)
    np.testing.assert_allclose(np.asarray(out2, dtype=np.float32),
                               np.asarray(ref2, dtype=np.float32),
                               rtol=3e-2, atol=3e-2)

    print("KERNEL_OK")
</pallas_src>

<mosaic_0001>
module attributes {stable_mosaic.version = 11 : i64} {
  func.func @kernel(%arg0: i32, %arg1: i32, %arg2: memref<1x8x32xf32, #tpu.memory_space<vmem>>, %arg3: memref<1x8x32xbf16, #tpu.memory_space<vmem>>, %arg4: memref<32x32xbf16, #tpu.memory_space<vmem>>, %arg5: memref<32x32xbf16, #tpu.memory_space<vmem>>, %arg6: memref<32x32xbf16, #tpu.memory_space<vmem>>, %arg7: memref<32x32xbf16, #tpu.memory_space<vmem>>, %arg8: memref<32x128xbf16, #tpu.memory_space<vmem>>, %arg9: memref<1x128xf32, #tpu.memory_space<vmem>>, %arg10: memref<128x32xbf16, #tpu.memory_space<vmem>>, %arg11: memref<9x32xf32, #tpu.memory_space<vmem>>, %arg12: memref<1x8x32xf32, #tpu.memory_space<vmem>>, %arg13: memref<4x8x8xbf16, #tpu.memory_space<vmem>>, %arg14: memref<4x8x8xbf16, #tpu.memory_space<vmem>>) attributes {dimension_semantics = [#tpu.dimension_semantics<parallel>, #tpu.dimension_semantics<arbitrary>], iteration_bounds = array<i64: 2, 1>, scalar_prefetch = 0 : i64, scratch_operands = 2 : i64, tpu.core_type = #tpu.core_type<tc>, window_params = [{transform_indices = @transform_0, window_bounds = array<i64: 1, 8, 32>}, {transform_indices = @transform_1, window_bounds = array<i64: 1, 8, 32>}, {pipeline_mode = #tpu.pipeline_mode<synchronous>, transform_indices = @transform_2, window_bounds = array<i64: 32, 32>}, {pipeline_mode = #tpu.pipeline_mode<synchronous>, transform_indices = @transform_3, window_bounds = array<i64: 32, 32>}, {pipeline_mode = #tpu.pipeline_mode<synchronous>, transform_indices = @transform_4, window_bounds = array<i64: 32, 32>}, {pipeline_mode = #tpu.pipeline_mode<synchronous>, transform_indices = @transform_5, window_bounds = array<i64: 32, 32>}, {pipeline_mode = #tpu.pipeline_mode<synchronous>, transform_indices = @transform_6, window_bounds = array<i64: 32, 128>}, {pipeline_mode = #tpu.pipeline_mode<synchronous>, transform_indices = @transform_7, window_bounds = array<i64: 1, 128>}, {pipeline_mode = #tpu.pipeline_mode<synchronous>, transform_indices = @transform_8, window_bounds = array<i64: 128, 32>}, {pipeline_mode = #tpu.pipeline_mode<synchronous>, transform_indices = @transform_9, window_bounds = array<i64: 9, 32>}, {transform_indices = @transform_10, window_bounds = array<i64: 1, 8, 32>}]} {
    %c0 = arith.constant 0 : index
    %c0_0 = arith.constant 0 : index
    %0 = vector.load %arg11[%c0, %c0_0] : memref<9x32xf32, #tpu.memory_space<vmem>>, vector<9x32xf32>
    %1 = vector.extract_strided_slice %0 {offsets = [0, 0], sizes = [1, 32], strides = [1, 1]} : vector<9x32xf32> to vector<1x32xf32>
    %2 = vector.extract_strided_slice %0 {offsets = [1, 0], sizes = [1, 32], strides = [1, 1]} : vector<9x32xf32> to vector<1x32xf32>
    %3 = vector.extract_strided_slice %0 {offsets = [2, 0], sizes = [1, 32], strides = [1, 1]} : vector<9x32xf32> to vector<1x32xf32>
    %4 = vector.extract_strided_slice %0 {offsets = [3, 0], sizes = [1, 32], strides = [1, 1]} : vector<9x32xf32> to vector<1x32xf32>
    %5 = vector.extract_strided_slice %0 {offsets = [4, 0], sizes = [1, 32], strides = [1, 1]} : vector<9x32xf32> to vector<1x32xf32>
    %6 = vector.extract_strided_slice %0 {offsets = [5, 0], sizes = [1, 32], strides = [1, 1]} : vector<9x32xf32> to vector<1x32xf32>
    %7 = vector.extract_strided_slice %0 {offsets = [6, 0], sizes = [1, 32], strides = [1, 1]} : vector<9x32xf32> to vector<1x32xf32>
    %8 = vector.extract_strided_slice %0 {offsets = [7, 0], sizes = [1, 32], strides = [1, 1]} : vector<9x32xf32> to vector<1x32xf32>
    %9 = vector.extract_strided_slice %0 {offsets = [8, 0], sizes = [1, 32], strides = [1, 1]} : vector<9x32xf32> to vector<1x32xf32>
    %c0_i32 = arith.constant 0 : i32
    %10 = arith.cmpi eq, %arg1, %c0_i32 : i32
    %11 = arith.extui %10 : i1 to i32
    %c0_i32_1 = arith.constant 0 : i32
    %12 = arith.cmpi ne, %11, %c0_i32_1 : i32
    scf.if %12 {
      %c0_77 = arith.constant 0 : index
      %c0_78 = arith.constant 0 : index
      %c0_79 = arith.constant 0 : index
      %174 = vector.load %arg3[%c0_77, %c0_78, %c0_79] : memref<1x8x32xbf16, #tpu.memory_space<vmem>>, vector<1x8x32xbf16>
      %175 = vector.shape_cast %174 : vector<1x8x32xbf16> to vector<8x32xbf16>
      %c0_80 = arith.constant 0 : index
      %c0_81 = arith.constant 0 : index
      %176 = vector.load %arg5[%c0_80, %c0_81] : memref<32x32xbf16, #tpu.memory_space<vmem>>, vector<32x32xbf16>
      %cst_82 = arith.constant dense<0.000000e+00> : vector<8x32xf32>
      %177 = tpu.matmul %175, %176, %cst_82 {dimension_numbers = #tpu.dot_dimension_numbers<[1], [0], [0], [1], [0, 0, 1, 1], [], []>} : vector<8x32xbf16>, vector<32x32xbf16>, vector<8x32xf32> -> vector<8x32xf32>
      %178 = vector.broadcast %2 : vector<1x32xf32> to vector<8x32xf32>
      %179 = arith.addf %177, %178 : vector<8x32xf32>
      %180 = arith.truncf %179 : vector<8x32xf32> to vector<8x32xbf16>
      %c0_83 = arith.constant 0 : index
      %c0_84 = arith.constant 0 : index
      %181 = vector.load %arg6[%c0_83, %c0_84] : memref<32x32xbf16, #tpu.memory_space<vmem>>, vector<32x32xbf16>
      %cst_85 = arith.constant dense<0.000000e+00> : vector<8x32xf32>
      %182 = tpu.matmul %175, %181, %cst_85 {dimension_numbers = #tpu.dot_dimension_numbers<[1], [0], [0], [1], [0, 0, 1, 1], [], []>} : vector<8x32xbf16>, vector<32x32xbf16>, vector<8x32xf32> -> vector<8x32xf32>
      %183 = vector.broadcast %3 : vector<1x32xf32> to vector<8x32xf32>
      %184 = arith.addf %182, %183 : vector<8x32xf32>
      %185 = arith.truncf %184 : vector<8x32xf32> to vector<8x32xbf16>
      %186 = vector.extract_strided_slice %180 {offsets = [0, 0], sizes = [8, 8], strides = [1, 1]} : vector<8x32xbf16> to vector<8x8xbf16>
      %c0_86 = arith.constant 0 : index
      %c0_87 = arith.constant 0 : index
      %c0_88 = arith.constant 0 : index
      %187 = vector.load %arg13[%c0_86, %c0_87, %c0_88] : memref<4x8x8xbf16, #tpu.memory_space<vmem>>, vector<1x8x8xbf16>
      %188 = vector.shape_cast %187 : vector<1x8x8xbf16> to vector<8x8xbf16>
      %189 = vector.shape_cast %186 : vector<8x8xbf16> to vector<1x8x8xbf16>
      tpu.vector_store %arg13[%c0_86, %c0_87, %c0_88], %189 {strides = array<i32>} : memref<4x8x8xbf16, #tpu.memory_space<vmem>>, vector<1x8x8xbf16>,
      %190 = vector.extract_strided_slice %185 {offsets = [0, 0], sizes = [8, 8], strides = [1, 1]} : vector<8x32xbf16> to vector<8x8xbf16>
      %c0_89 = arith.constant 0 : index
      %c0_90 = arith.constant 0 : index
      %c0_91 = arith.constant 0 : index
      %191 = vector.load %arg14[%c0_89, %c0_90, %c0_91] : memref<4x8x8xbf16, #tpu.memory_space<vmem>>, vector<1x8x8xbf16>
      %192 = vector.shape_cast %191 : vector<1x8x8xbf16> to vector<8x8xbf16>
      %193 = vector.shape_cast %190 : vector<8x8xbf16> to vector<1x8x8xbf16>
      tpu.vector_store %arg14[%c0_89, %c0_90, %c0_91], %193 {strides = array<i32>} : memref<4x8x8xbf16, #tpu.memory_space<vmem>>, vector<1x8x8xbf16>,
      %194 = vector.extract_strided_slice %180 {offsets = [0, 8], sizes = [8, 8], strides = [1, 1]} : vector<8x32xbf16> to vector<8x8xbf16>
      %c1_92 = arith.constant 1 : index
      %c0_93 = arith.constant 0 : index
      %c0_94 = arith.constant 0 : index
      %195 = vector.load %arg13[%c1_92, %c0_93, %c0_94] : memref<4x8x8xbf16, #tpu.memory_space<vmem>>, vector<1x8x8xbf16>
      %196 = vector.shape_cast %195 : vector<1x8x8xbf16> to vector<8x8xbf16>
      %197 = vector.shape_cast %194 : vector<8x8xbf16> to vector<1x8x8xbf16>
      tpu.vector_store %arg13[%c1_92, %c0_93, %c0_94], %197 {strides = array<i32>} : memref<4x8x8xbf16, #tpu.memory_space<vmem>>, vector<1x8x8xbf16>,
      %198 = vector.extract_strided_slice %185 {offsets = [0, 8], sizes = [8, 8], strides = [1, 1]} : vector<8x32xbf16> to vector<8x8xbf16>
      %c1_95 = arith.constant 1 : index
      %c0_96 = arith.constant 0 : index
      %c0_97 = arith.constant 0 : index
      %199 = vector.load %arg14[%c1_95, %c0_96, %c0_97] : memref<4x8x8xbf16, #tpu.memory_space<vmem>>, vector<1x8x8xbf16>
      %200 = vector.shape_cast %199 : vector<1x8x8xbf16> to vector<8x8xbf16>
      %201 = vector.shape_cast %198 : vector<8x8xbf16> to vector<1x8x8xbf16>
      tpu.vector_store %arg14[%c1_95, %c0_96, %c0_97], %201 {strides = array<i32>} : memref<4x8x8xbf16, #tpu.memory_space<vmem>>, vector<1x8x8xbf16>,
      %202 = vector.extract_strided_slice %180 {offsets = [0, 16], sizes = [8, 8], strides = [1, 1]} : vector<8x32xbf16> to vector<8x8xbf16>
      %c2_98 = arith.constant 2 : index
      %c0_99 = arith.constant 0 : index
      %c0_100 = arith.constant 0 : index
      %203 = vector.load %arg13[%c2_98, %c0_99, %c0_100] : memref<4x8x8xbf16, #tpu.memory_space<vmem>>, vector<1x8x8xbf16>
      %204 = vector.shape_cast %203 : vector<1x8x8xbf16> to vector<8x8xbf16>
      %205 = vector.shape_cast %202 : vector<8x8xbf16> to vector<1x8x8xbf16>
      tpu.vector_store %arg13[%c2_98, %c0_99, %c0_100], %205 {strides = array<i32>} : memref<4x8x8xbf16, #tpu.memory_space<vmem>>, vector<1x8x8xbf16>,
      %206 = vector.extract_strided_slice %185 {offsets = [0, 16], sizes = [8, 8], strides = [1, 1]} : vector<8x32xbf16> to vector<8x8xbf16>
      %c2_101 = arith.constant 2 : index
      %c0_102 = arith.constant 0 : index
      %c0_103 = arith.constant 0 : index
      %207 = vector.load %arg14[%c2_101, %c0_102, %c0_103] : memref<4x8x8xbf16, #tpu.memory_space<vmem>>, vector<1x8x8xbf16>
      %208 = vector.shape_cast %207 : vector<1x8x8xbf16> to vector<8x8xbf16>
      %209 = vector.shape_cast %206 : vector<8x8xbf16> to vector<1x8x8xbf16>
      tpu.vector_store %arg14[%c2_101, %c0_102, %c0_103], %209 {strides = array<i32>} : memref<4x8x8xbf16, #tpu.memory_space<vmem>>, vector<1x8x8xbf16>,
      %210 = vector.extract_strided_slice %180 {offsets = [0, 24], sizes = [8, 8], strides = [1, 1]} : vector<8x32xbf16> to vector<8x8xbf16>
      %c3_104 = arith.constant 3 : index
      %c0_105 = arith.constant 0 : index
      %c0_106 = arith.constant 0 : index
      %211 = vector.load %arg13[%c3_104, %c0_105, %c0_106] : memref<4x8x8xbf16, #tpu.memory_space<vmem>>, vector<1x8x8xbf16>
      %212 = vector.shape_cast %211 : vector<1x8x8xbf16> to vector<8x8xbf16>
      %213 = vector.shape_cast %210 : vector<8x8xbf16> to vector<1x8x8xbf16>
      tpu.vector_store %arg13[%c3_104, %c0_105, %c0_106], %213 {strides = array<i32>} : memref<4x8x8xbf16, #tpu.memory_space<vmem>>, vector<1x8x8xbf16>,
      %214 = vector.extract_strided_slice %185 {offsets = [0, 24], sizes = [8, 8], strides = [1, 1]} : vector<8x32xbf16> to vector<8x8xbf16>
      %c3_107 = arith.constant 3 : index
      %c0_108 = arith.constant 0 : index
      %c0_109 = arith.constant 0 : index
      %215 = vector.load %arg14[%c3_107, %c0_108, %c0_109] : memref<4x8x8xbf16, #tpu.memory_space<vmem>>, vector<1x8x8xbf16>
      %216 = vector.shape_cast %215 : vector<1x8x8xbf16> to vector<8x8xbf16>
      %217 = vector.shape_cast %214 : vector<8x8xbf16> to vector<1x8x8xbf16>
      tpu.vector_store %arg14[%c3_107, %c0_108, %c0_109], %217 {strides = array<i32>} : memref<4x8x8xbf16, #tpu.memory_space<vmem>>, vector<1x8x8xbf16>,
    } else {
    }
    %c0_2 = arith.constant 0 : index
    %c0_3 = arith.constant 0 : index
    %c0_4 = arith.constant 0 : index
    %13 = vector.load %arg2[%c0_2, %c0_3, %c0_4] : memref<1x8x32xf32, #tpu.memory_space<vmem>>, vector<1x8x32xf32>
    %14 = vector.shape_cast %13 : vector<1x8x32xf32> to vector<8x32xf32>
    %15 = arith.truncf %14 : vector<8x32xf32> to vector<8x32xbf16>
    %c0_5 = arith.constant 0 : index
    %c0_6 = arith.constant 0 : index
    %16 = vector.load %arg4[%c0_5, %c0_6] : memref<32x32xbf16, #tpu.memory_space<vmem>>, vector<32x32xbf16>
    %cst = arith.constant dense<0.000000e+00> : vector<8x32xf32>
    %17 = tpu.matmul %15, %16, %cst {dimension_numbers = #tpu.dot_dimension_numbers<[1], [0], [0], [1], [0, 0, 1, 1], [], []>} : vector<8x32xbf16>, vector<32x32xbf16>, vector<8x32xf32> -> vector<8x32xf32>
    %18 = vector.broadcast %1 : vector<1x32xf32> to vector<8x32xf32>
    %19 = arith.addf %17, %18 : vector<8x32xf32>
    %20 = arith.truncf %19 : vector<8x32xf32> to vector<8x32xbf16>
    %21 = vector.extract_strided_slice %20 {offsets = [0, 0], sizes = [8, 8], strides = [1, 1]} : vector<8x32xbf16> to vector<8x8xbf16>
    %c0_7 = arith.constant 0 : index
    %c0_8 = arith.constant 0 : index
    %c0_9 = arith.constant 0 : index
    %22 = vector.load %arg13[%c0_7, %c0_8, %c0_9] : memref<4x8x8xbf16, #tpu.memory_space<vmem>>, vector<1x8x8xbf16>
    %23 = vector.shape_cast %22 : vector<1x8x8xbf16> to vector<8x8xbf16>
    %c0_10 = arith.constant 0 : index
    %c0_11 = arith.constant 0 : index
    %c0_12 = arith.constant 0 : index
    %24 = vector.load %arg14[%c0_10, %c0_11, %c0_12] : memref<4x8x8xbf16, #tpu.memory_space<vmem>>, vector<1x8x8xbf16>
    %25 = vector.shape_cast %24 : vector<1x8x8xbf16> to vector<8x8xbf16>
    %cst_13 = arith.constant dense<0.000000e+00> : vector<8x8xf32>
    %26 = tpu.matmul %21, %23, %cst_13 {dimension_numbers = #tpu.dot_dimension_numbers<[1], [1], [0], [0], [0, 0, 1, 0], [], []>} : vector<8x8xbf16>, vector<8x8xbf16>, vector<8x8xf32> -> vector<8x8xf32>
    %cst_14 = arith.constant dense<0xFF800000> : vector<8xf32>
    %27 = vector.multi_reduction <maximumf>, %26, %cst_14 [1] : vector<8x8xf32> to vector<8xf32>
    %28 = vector.shape_cast %27 : vector<8xf32> to vector<8x1xf32>
    %29 = vector.broadcast %28 : vector<8x1xf32> to vector<8x8xf32>
    %30 = arith.subf %26, %29 : vector<8x8xf32>
    %31 = math.exp %30 : vector<8x8xf32>
    %cst_15 = arith.constant dense<0.000000e+00> : vector<8xf32>
    %32 = vector.multi_reduction <add>, %31, %cst_15 [1] : vector<8x8xf32> to vector<8xf32>
    %33 = vector.shape_cast %32 : vector<8xf32> to vector<8x1xf32>
    %34 = tpu.reciprocal %33 {approx = true} : vector<8x1xf32> -> vector<8x1xf32>
    %35 = arith.truncf %31 : vector<8x8xf32> to vector<8x8xbf16>
    %cst_16 = arith.constant dense<0.000000e+00> : vector<8x8xf32>
    %36 = tpu.matmul %35, %25, %cst_16 {dimension_numbers = #tpu.dot_dimension_numbers<[1], [0], [0], [1], [0, 0, 1, 1], [], []>} : vector<8x8xbf16>, vector<8x8xbf16>, vector<8x8xf32> -> vector<8x8xf32>
    %37 = vector.broadcast %34 : vector<8x1xf32> to vector<8x8xf32>
    %38 = arith.mulf %36, %37 : vector<8x8xf32>
    %39 = arith.truncf %38 : vector<8x8xf32> to vector<8x8xbf16>
    %c0_17 = arith.constant 0 : index
    %c0_18 = arith.constant 0 : index
    %40 = vector.load %arg7[%c0_17, %c0_18] : memref<32x32xbf16, #tpu.memory_space<vmem>>, vector<8x32xbf16>
    %cst_19 = arith.constant dense<0.000000e+00> : vector<8x32xf32>
    %41 = tpu.matmul %39, %40, %cst_19 {dimension_numbers = #tpu.dot_dimension_numbers<[1], [0], [0], [1], [0, 0, 1, 1], [], []>} : vector<8x8xbf16>, vector<8x32xbf16>, vector<8x32xf32> -> vector<8x32xf32>
    %42 = vector.extract_strided_slice %20 {offsets = [0, 8], sizes = [8, 8], strides = [1, 1]} : vector<8x32xbf16> to vector<8x8xbf16>
    %c1 = arith.constant 1 : index
    %c0_20 = arith.constant 0 : index
    %c0_21 = arith.constant 0 : index
    %43 = vector.load %arg13[%c1, %c0_20, %c0_21] : memref<4x8x8xbf16, #tpu.memory_space<vmem>>, vector<1x8x8xbf16>
    %44 = vector.shape_cast %43 : vector<1x8x8xbf16> to vector<8x8xbf16>
    %c1_22 = arith.constant 1 : index
    %c0_23 = arith.constant 0 : index
    %c0_24 = arith.constant 0 : index
    %45 = vector.load %arg14[%c1_22, %c0_23, %c0_24] : memref<4x8x8xbf16, #tpu.memory_space<vmem>>, vector<1x8x8xbf16>
    %46 = vector.shape_cast %45 : vector<1x8x8xbf16> to vector<8x8xbf16>
    %cst_25 = arith.constant dense<0.000000e+00> : vector<8x8xf32>
    %47 = tpu.matmul %42, %44, %cst_25 {dimension_numbers = #tpu.dot_dimension_numbers<[1], [1], [0], [0], [0, 0, 1, 0], [], []>} : vector<8x8xbf16>, vector<8x8xbf16>, vector<8x8xf32> -> vector<8x8xf32>
    %cst_26 = arith.constant dense<0xFF800000> : vector<8xf32>
    %48 = vector.multi_reduction <maximumf>, %47, %cst_26 [1] : vector<8x8xf32> to vector<8xf32>
    %49 = vector.shape_cast %48 : vector<8xf32> to vector<8x1xf32>
    %50 = vector.broadcast %49 : vector<8x1xf32> to vector<8x8xf32>
    %51 = arith.subf %47, %50 : vector<8x8xf32>
    %52 = math.exp %51 : vector<8x8xf32>
    %cst_27 = arith.constant dense<0.000000e+00> : vector<8xf32>
    %53 = vector.multi_reduction <add>, %52, %cst_27 [1] : vector<8x8xf32> to vector<8xf32>
    %54 = vector.shape_cast %53 : vector<8xf32> to vector<8x1xf32>
    %55 = tpu.reciprocal %54 {approx = true} : vector<8x1xf32> -> vector<8x1xf32>
    %56 = arith.truncf %52 : vector<8x8xf32> to vector<8x8xbf16>
    %cst_28 = arith.constant dense<0.000000e+00> : vector<8x8xf32>
    %57 = tpu.matmul %56, %46, %cst_28 {dimension_numbers = #tpu.dot_dimension_numbers<[1], [0], [0], [1], [0, 0, 1, 1], [], []>} : vector<8x8xbf16>, vector<8x8xbf16>, vector<8x8xf32> -> vector<8x8xf32>
    %58 = vector.broadcast %55 : vector<8x1xf32> to vector<8x8xf32>
    %59 = arith.mulf %57, %58 : vector<8x8xf32>
    %60 = arith.truncf %59 : vector<8x8xf32> to vector<8x8xbf16>
    %c8 = arith.constant 8 : index
    %c0_29 = arith.constant 0 : index
    %61 = vector.load %arg7[%c8, %c0_29] : memref<32x32xbf16, #tpu.memory_space<vmem>>, vector<8x32xbf16>
    %cst_30 = arith.constant dense<0.000000e+00> : vector<8x32xf32>
    %62 = tpu.matmul %60, %61, %cst_30 {dimension_numbers = #tpu.dot_dimension_numbers<[1], [0], [0], [1], [0, 0, 1, 1], [], []>} : vector<8x8xbf16>, vector<8x32xbf16>, vector<8x32xf32> -> vector<8x32xf32>
    %63 = arith.addf %41, %62 : vector<8x32xf32>
    %64 = vector.extract_strided_slice %20 {offsets = [0, 16], sizes = [8, 8], strides = [1, 1]} : vector<8x32xbf16> to vector<8x8xbf16>
    %c2 = arith.constant 2 : index
    %c0_31 = arith.constant 0 : index
    %c0_32 = arith.constant 0 : index
    %65 = vector.load %arg13[%c2, %c0_31, %c0_32] : memref<4x8x8xbf16, #tpu.memory_space<vmem>>, vector<1x8x8xbf16>
    %66 = vector.shape_cast %65 : vector<1x8x8xbf16> to vector<8x8xbf16>
    %c2_33 = arith.constant 2 : index
    %c0_34 = arith.constant 0 : index
    %c0_35 = arith.constant 0 : index
    %67 = vector.load %arg14[%c2_33, %c0_34, %c0_35] : memref<4x8x8xbf16, #tpu.memory_space<vmem>>, vector<1x8x8xbf16>
    %68 = vector.shape_cast %67 : vector<1x8x8xbf16> to vector<8x8xbf16>
    %cst_36 = arith.constant dense<0.000000e+00> : vector<8x8xf32>
    %69 = tpu.matmul %64, %66, %cst_36 {dimension_numbers = #tpu.dot_dimension_numbers<[1], [1], [0], [0], [0, 0, 1, 0], [], []>} : vector<8x8xbf16>, vector<8x8xbf16>, vector<8x8xf32> -> vector<8x8xf32>
    %cst_37 = arith.constant dense<0xFF800000> : vector<8xf32>
    %70 = vector.multi_reduction <maximumf>, %69, %cst_37 [1] : vector<8x8xf32> to vector<8xf32>
    %71 = vector.shape_cast %70 : vector<8xf32> to vector<8x1xf32>
    %72 = vector.broadcast %71 : vector<8x1xf32> to vector<8x8xf32>
    %73 = arith.subf %69, %72 : vector<8x8xf32>
    %74 = math.exp %73 : vector<8x8xf32>
    %cst_38 = arith.constant dense<0.000000e+00> : vector<8xf32>
    %75 = vector.multi_reduction <add>, %74, %cst_38 [1] : vector<8x8xf32> to vector<8xf32>
    %76 = vector.shape_cast %75 : vector<8xf32> to vector<8x1xf32>
    %77 = tpu.reciprocal %76 {approx = true} : vector<8x1xf32> -> vector<8x1xf32>
    %78 = arith.truncf %74 : vector<8x8xf32> to vector<8x8xbf16>
    %cst_39 = arith.constant dense<0.000000e+00> : vector<8x8xf32>
    %79 = tpu.matmul %78, %68, %cst_39 {dimension_numbers = #tpu.dot_dimension_numbers<[1], [0], [0], [1], [0, 0, 1, 1], [], []>} : vector<8x8xbf16>, vector<8x8xbf16>, vector<8x8xf32> -> vector<8x8xf32>
    %80 = vector.broadcast %77 : vector<8x1xf32> to vector<8x8xf32>
    %81 = arith.mulf %79, %80 : vector<8x8xf32>
    %82 = arith.truncf %81 : vector<8x8xf32> to vector<8x8xbf16>
    %c16 = arith.constant 16 : index
    %c0_40 = arith.constant 0 : index
    %83 = vector.load %arg7[%c16, %c0_40] : memref<32x32xbf16, #tpu.memory_space<vmem>>, vector<8x32xbf16>
    %cst_41 = arith.constant dense<0.000000e+00> : vector<8x32xf32>
    %84 = tpu.matmul %82, %83, %cst_41 {dimension_numbers = #tpu.dot_dimension_numbers<[1], [0], [0], [1], [0, 0, 1, 1], [], []>} : vector<8x8xbf16>, vector<8x32xbf16>, vector<8x32xf32> -> vector<8x32xf32>
    %85 = arith.addf %63, %84 : vector<8x32xf32>
    %86 = vector.extract_strided_slice %20 {offsets = [0, 24], sizes = [8, 8], strides = [1, 1]} : vector<8x32xbf16> to vector<8x8xbf16>
    %c3 = arith.constant 3 : index
    %c0_42 = arith.constant 0 : index
    %c0_43 = arith.constant 0 : index
    %87 = vector.load %arg13[%c3, %c0_42, %c0_43] : memref<4x8x8xbf16, #tpu.memory_space<vmem>>, vector<1x8x8xbf16>
    %88 = vector.shape_cast %87 : vector<1x8x8xbf16> to vector<8x8xbf16>
    %c3_44 = arith.constant 3 : index
    %c0_45 = arith.constant 0 : index
    %c0_46 = arith.constant 0 : index
    %89 = vector.load %arg14[%c3_44, %c0_45, %c0_46] : memref<4x8x8xbf16, #tpu.memory_space<vmem>>, vector<1x8x8xbf16>
    %90 = vector.shape_cast %89 : vector<1x8x8xbf16> to vector<8x8xbf16>
    %cst_47 = arith.constant dense<0.000000e+00> : vector<8x8xf32>
    %91 = tpu.matmul %86, %88, %cst_47 {dimension_numbers = #tpu.dot_dimension_numbers<[1], [1], [0], [0], [0, 0, 1, 0], [], []>} : vector<8x8xbf16>, vector<8x8xbf16>, vector<8x8xf32> -> vector<8x8xf32>
    %cst_48 = arith.constant dense<0xFF800000> : vector<8xf32>
    %92 = vector.multi_reduction <maximumf>, %91, %cst_48 [1] : vector<8x8xf32> to vector<8xf32>
    %93 = vector.shape_cast %92 : vector<8xf32> to vector<8x1xf32>
    %94 = vector.broadcast %93 : vector<8x1xf32> to vector<8x8xf32>
    %95 = arith.subf %91, %94 : vector<8x8xf32>
    %96 = math.exp %95 : vector<8x8xf32>
    %cst_49 = arith.constant dense<0.000000e+00> : vector<8xf32>
    %97 = vector.multi_reduction <add>, %96, %cst_49 [1] : vector<8x8xf32> to vector<8xf32>
    %98 = vector.shape_cast %97 : vector<8xf32> to vector<8x1xf32>
    %99 = tpu.reciprocal %98 {approx = true} : vector<8x1xf32> -> vector<8x1xf32>
    %100 = arith.truncf %96 : vector<8x8xf32> to vector<8x8xbf16>
    %cst_50 = arith.constant dense<0.000000e+00> : vector<8x8xf32>
    %101 = tpu.matmul %100, %90, %cst_50 {dimension_numbers = #tpu.dot_dimension_numbers<[1], [0], [0], [1], [0, 0, 1, 1], [], []>} : vector<8x8xbf16>, vector<8x8xbf16>, vector<8x8xf32> -> vector<8x8xf32>
    %102 = vector.broadcast %99 : vector<8x1xf32> to vector<8x8xf32>
    %103 = arith.mulf %101, %102 : vector<8x8xf32>
    %104 = arith.truncf %103 : vector<8x8xf32> to vector<8x8xbf16>
    %c24 = arith.constant 24 : index
    %c0_51 = arith.constant 0 : index
    %105 = vector.load %arg7[%c24, %c0_51] : memref<32x32xbf16, #tpu.memory_space<vmem>>, vector<8x32xbf16>
    %cst_52 = arith.constant dense<0.000000e+00> : vector<8x32xf32>
    %106 = tpu.matmul %104, %105, %cst_52 {dimension_numbers = #tpu.dot_dimension_numbers<[1], [0], [0], [1], [0, 0, 1, 1], [], []>} : vector<8x8xbf16>, vector<8x32xbf16>, vector<8x32xf32> -> vector<8x32xf32>
    %107 = arith.addf %85, %106 : vector<8x32xf32>
    %108 = vector.broadcast %4 : vector<1x32xf32> to vector<8x32xf32>
    %109 = arith.addf %107, %108 : vector<8x32xf32>
    %110 = arith.addf %14, %109 : vector<8x32xf32>
    %cst_53 = arith.constant dense<0.000000e+00> : vector<8xf32>
    %111 = vector.multi_reduction <add>, %110, %cst_53 [1] : vector<8x32xf32> to vector<8xf32>
    %112 = vector.shape_cast %111 : vector<8xf32> to vector<8x1xf32>
    %cst_54 = arith.constant 3.200000e+01 : f32
    %113 = vector.broadcast %cst_54 : f32 to vector<8x1xf32>
    %114 = arith.divf %112, %113 : vector<8x1xf32>
    %115 = vector.broadcast %114 : vector<8x1xf32> to vector<8x32xf32>
    %116 = arith.subf %110, %115 : vector<8x32xf32>
    %117 = arith.mulf %116, %116 : vector<8x32xf32>
    %cst_55 = arith.constant dense<0.000000e+00> : vector<8xf32>
    %118 = vector.multi_reduction <add>, %117, %cst_55 [1] : vector<8x32xf32> to vector<8xf32>
    %119 = vector.shape_cast %118 : vector<8xf32> to vector<8x1xf32>
    %cst_56 = arith.constant 3.200000e+01 : f32
    %120 = vector.broadcast %cst_56 : f32 to vector<8x1xf32>
    %121 = arith.divf %119, %120 : vector<8x1xf32>
    %cst_57 = arith.constant 9.99999974E-6 : f32
    %122 = vector.broadcast %cst_57 : f32 to vector<8x1xf32>
    %123 = arith.addf %121, %122 : vector<8x1xf32>
    %124 = math.rsqrt %123 : vector<8x1xf32>
    %125 = vector.broadcast %124 : vector<8x1xf32> to vector<8x32xf32>
    %126 = arith.mulf %116, %125 : vector<8x32xf32>
    %127 = vector.broadcast %5 : vector<1x32xf32> to vector<8x32xf32>
    %128 = arith.mulf %126, %127 : vector<8x32xf32>
    %129 = vector.broadcast %6 : vector<1x32xf32> to vector<8x32xf32>
    %130 = arith.addf %128, %129 : vector<8x32xf32>
    %131 = arith.truncf %130 : vector<8x32xf32> to vector<8x32xbf16>
    %c0_58 = arith.constant 0 : index
    %c0_59 = arith.constant 0 : index
    %132 = vector.load %arg8[%c0_58, %c0_59] : memref<32x128xbf16, #tpu.memory_space<vmem>>, vector<32x128xbf16>
    %cst_60 = arith.constant dense<0.000000e+00> : vector<8x128xf32>
    %133 = tpu.matmul %131, %132, %cst_60 {dimension_numbers = #tpu.dot_dimension_numbers<[1], [0], [0], [1], [0, 0, 1, 1], [], []>} : vector<8x32xbf16>, vector<32x128xbf16>, vector<8x128xf32> -> vector<8x128xf32>
    %c0_61 = arith.constant 0 : index
    %c0_62 = arith.constant 0 : index
    %134 = vector.load %arg9[%c0_61, %c0_62] : memref<1x128xf32, #tpu.memory_space<vmem>>, vector<1x128xf32>
    %135 = vector.broadcast %134 : vector<1x128xf32> to vector<8x128xf32>
    %136 = arith.addf %133, %135 : vector<8x128xf32>
    %cst_63 = arith.constant 5.000000e-01 : f32
    %137 = vector.broadcast %cst_63 : f32 to vector<8x128xf32>
    %138 = arith.mulf %137, %136 : vector<8x128xf32>
    %cst_64 = arith.constant 0.707106769 : f32
    %139 = vector.broadcast %cst_64 : f32 to vector<8x128xf32>
    %140 = arith.mulf %136, %139 : vector<8x128xf32>
    %141 = math.erf %140 : vector<8x128xf32>
    %cst_65 = arith.constant 1.000000e+00 : f32
    %142 = vector.broadcast %cst_65 : f32 to vector<8x128xf32>
    %143 = arith.addf %142, %141 : vector<8x128xf32>
    %144 = arith.mulf %138, %143 : vector<8x128xf32>
    %145 = arith.truncf %144 : vector<8x128xf32> to vector<8x128xbf16>
    %c0_66 = arith.constant 0 : index
    %c0_67 = arith.constant 0 : index
    %146 = vector.load %arg10[%c0_66, %c0_67] : memref<128x32xbf16, #tpu.memory_space<vmem>>, vector<128x32xbf16>
    %cst_68 = arith.constant dense<0.000000e+00> : vector<8x32xf32>
    %147 = tpu.matmul %145, %146, %cst_68 {dimension_numbers = #tpu.dot_dimension_numbers<[1], [0], [0], [1], [0, 0, 1, 1], [], []>} : vector<8x128xbf16>, vector<128x32xbf16>, vector<8x32xf32> -> vector<8x32xf32>
    %148 = vector.broadcast %7 : vector<1x32xf32> to vector<8x32xf32>
    %149 = arith.addf %147, %148 : vector<8x32xf32>
    %150 = arith.addf %130, %149 : vector<8x32xf32>
    %cst_69 = arith.constant dense<0.000000e+00> : vector<8xf32>
    %151 = vector.multi_reduction <add>, %150, %cst_69 [1] : vector<8x32xf32> to vector<8xf32>
    %152 = vector.shape_cast %151 : vector<8xf32> to vector<8x1xf32>
    %cst_70 = arith.constant 3.200000e+01 : f32
    %153 = vector.broadcast %cst_70 : f32 to vector<8x1xf32>
    %154 = arith.divf %152, %153 : vector<8x1xf32>
    %155 = vector.broadcast %154 : vector<8x1xf32> to vector<8x32xf32>
    %156 = arith.subf %150, %155 : vector<8x32xf32>
    %157 = arith.mulf %156, %156 : vector<8x32xf32>
    %cst_71 = arith.constant dense<0.000000e+00> : vector<8xf32>
    %158 = vector.multi_reduction <add>, %157, %cst_71 [1] : vector<8x32xf32> to vector<8xf32>
    %159 = vector.shape_cast %158 : vector<8xf32> to vector<8x1xf32>
    %cst_72 = arith.constant 3.200000e+01 : f32
    %160 = vector.broadcast %cst_72 : f32 to vector<8x1xf32>
    %161 = arith.divf %159, %160 : vector<8x1xf32>
    %cst_73 = arith.constant 9.99999974E-6 : f32
    %162 = vector.broadcast %cst_73 : f32 to vector<8x1xf32>
    %163 = arith.addf %161, %162 : vector<8x1xf32>
    %164 = math.rsqrt %163 : vector<8x1xf32>
    %165 = vector.broadcast %164 : vector<8x1xf32> to vector<8x32xf32>
    %166 = arith.mulf %156, %165 : vector<8x32xf32>
    %167 = vector.broadcast %8 : vector<1x32xf32> to vector<8x32xf32>
    %168 = arith.mulf %166, %167 : vector<8x32xf32>
    %169 = vector.broadcast %9 : vector<1x32xf32> to vector<8x32xf32>
    %170 = arith.addf %168, %169 : vector<8x32xf32>
    %c0_74 = arith.constant 0 : index
    %c0_75 = arith.constant 0 : index
    %c0_76 = arith.constant 0 : index
    %171 = vector.load %arg12[%c0_74, %c0_75, %c0_76] : memref<1x8x32xf32, #tpu.memory_space<vmem>>, vector<1x8x32xf32>
    %172 = vector.shape_cast %171 : vector<1x8x32xf32> to vector<8x32xf32>
    %173 = vector.shape_cast %170 : vector<8x32xf32> to vector<1x8x32xf32>
    tpu.vector_store %arg12[%c0_74, %c0_75, %c0_76], %173 {strides = array<i32>} : memref<1x8x32xf32, #tpu.memory_space<vmem>>, vector<1x8x32xf32>,
    return
  }
  func.func @transform_0(%arg0: i32, %arg1: i32) -> (i32, i32, i32) {
    %c0_i32 = arith.constant 0 : i32
    %c0_i32_0 = arith.constant 0 : i32
    return %arg0, %arg1, %c0_i32 : i32, i32, i32
  }
  func.func @transform_1(%arg0: i32, %arg1: i32) -> (i32, i32, i32) {
    %c0_i32 = arith.constant 0 : i32
    %c0_i32_0 = arith.constant 0 : i32
    %c0_i32_1 = arith.constant 0 : i32
    return %arg0, %c0_i32, %c0_i32_0 : i32, i32, i32
  }
  func.func @transform_2(%arg0: i32, %arg1: i32) -> (i32, i32) {
    %c0_i32 = arith.constant 0 : i32
    %c0_i32_0 = arith.constant 0 : i32
    %c0_i32_1 = arith.constant 0 : i32
    return %c0_i32, %c0_i32_0 : i32, i32
  }
  func.func @transform_3(%arg0: i32, %arg1: i32) -> (i32, i32) {
    %c0_i32 = arith.constant 0 : i32
    %c0_i32_0 = arith.constant 0 : i32
    %c0_i32_1 = arith.constant 0 : i32
    return %c0_i32, %c0_i32_0 : i32, i32
  }
  func.func @transform_4(%arg0: i32, %arg1: i32) -> (i32, i32) {
    %c0_i32 = arith.constant 0 : i32
    %c0_i32_0 = arith.constant 0 : i32
    %c0_i32_1 = arith.constant 0 : i32
    return %c0_i32, %c0_i32_0 : i32, i32
  }
  func.func @transform_5(%arg0: i32, %arg1: i32) -> (i32, i32) {
    %c0_i32 = arith.constant 0 : i32
    %c0_i32_0 = arith.constant 0 : i32
    %c0_i32_1 = arith.constant 0 : i32
    return %c0_i32, %c0_i32_0 : i32, i32
  }
  func.func @transform_6(%arg0: i32, %arg1: i32) -> (i32, i32) {
    %c0_i32 = arith.constant 0 : i32
    %c0_i32_0 = arith.constant 0 : i32
    %c0_i32_1 = arith.constant 0 : i32
    return %c0_i32, %c0_i32_0 : i32, i32
  }
  func.func @transform_7(%arg0: i32, %arg1: i32) -> (i32, i32) {
    %c0_i32 = arith.constant 0 : i32
    %c0_i32_0 = arith.constant 0 : i32
    %c0_i32_1 = arith.constant 0 : i32
    return %c0_i32, %c0_i32_0 : i32, i32
  }
  func.func @transform_8(%arg0: i32, %arg1: i32) -> (i32, i32) {
    %c0_i32 = arith.constant 0 : i32
    %c0_i32_0 = arith.constant 0 : i32
    %c0_i32_1 = arith.constant 0 : i32
    return %c0_i32, %c0_i32_0 : i32, i32
  }
  func.func @transform_9(%arg0: i32, %arg1: i32) -> (i32, i32) {
    %c0_i32 = arith.constant 0 : i32
    %c0_i32_0 = arith.constant 0 : i32
    %c0_i32_1 = arith.constant 0 : i32
    return %c0_i32, %c0_i32_0 : i32, i32
  }
  func.func @transform_10(%arg0: i32, %arg1: i32) -> (i32, i32, i32) {
    %c0_i32 = arith.constant 0 : i32
    %c0_i32_0 = arith.constant 0 : i32
    return %arg0, %arg1, %c0_i32 : i32, i32, i32
  }
}

module attributes {stable_mosaic.version = 11 : i64} {
  func.func @kernel(%arg0: i32, %arg1: i32, %arg2: memref<1x8x32xf32, #tpu.memory_space<vmem>>, %arg3: memref<1x8x32xbf16, #tpu.memory_space<vmem>>, %arg4: memref<32x32xbf16, #tpu.memory_space<vmem>>, %arg5: memref<32x32xbf16, #tpu.memory_space<vmem>>, %arg6: memref<32x32xbf16, #tpu.memory_space<vmem>>, %arg7: memref<32x32xbf16, #tpu.memory_space<vmem>>, %arg8: memref<32x128xbf16, #tpu.memory_space<vmem>>, %arg9: memref<1x128xf32, #tpu.memory_space<vmem>>, %arg10: memref<128x32xbf16, #tpu.memory_space<vmem>>, %arg11: memref<9x32xf32, #tpu.memory_space<vmem>>, %arg12: memref<1x8x32xf32, #tpu.memory_space<vmem>>, %arg13: memref<4x8x8xbf16, #tpu.memory_space<vmem>>, %arg14: memref<4x8x8xbf16, #tpu.memory_space<vmem>>) attributes {dimension_semantics = [#tpu.dimension_semantics<parallel>, #tpu.dimension_semantics<arbitrary>], iteration_bounds = array<i64: 2, 1>, scalar_prefetch = 0 : i64, scratch_operands = 2 : i64, tpu.core_type = #tpu.core_type<tc>, window_params = [{transform_indices = @transform_0, window_bounds = array<i64: 1, 8, 32>}, {transform_indices = @transform_1, window_bounds = array<i64: 1, 8, 32>}, {pipeline_mode = #tpu.pipeline_mode<synchronous>, transform_indices = @transform_2, window_bounds = array<i64: 32, 32>}, {pipeline_mode = #tpu.pipeline_mode<synchronous>, transform_indices = @transform_3, window_bounds = array<i64: 32, 32>}, {pipeline_mode = #tpu.pipeline_mode<synchronous>, transform_indices = @transform_4, window_bounds = array<i64: 32, 32>}, {pipeline_mode = #tpu.pipeline_mode<synchronous>, transform_indices = @transform_5, window_bounds = array<i64: 32, 32>}, {pipeline_mode = #tpu.pipeline_mode<synchronous>, transform_indices = @transform_6, window_bounds = array<i64: 32, 128>}, {pipeline_mode = #tpu.pipeline_mode<synchronous>, transform_indices = @transform_7, window_bounds = array<i64: 1, 128>}, {pipeline_mode = #tpu.pipeline_mode<synchronous>, transform_indices = @transform_8, window_bounds = array<i64: 128, 32>}, {pipeline_mode = #tpu.pipeline_mode<synchronous>, transform_indices = @transform_9, window_bounds = array<i64: 9, 32>}, {transform_indices = @transform_10, window_bounds = array<i64: 1, 8, 32>}]} {
    %c0 = arith.constant 0 : index
    %c0_0 = arith.constant 0 : index
    %0 = vector.load %arg11[%c0, %c0_0] : memref<9x32xf32, #tpu.memory_space<vmem>>, vector<9x32xf32>
    %1 = vector.extract_strided_slice %0 {offsets = [0, 0], sizes = [1, 32], strides = [1, 1]} : vector<9x32xf32> to vector<1x32xf32>
    %2 = vector.extract_strided_slice %0 {offsets = [1, 0], sizes = [1, 32], strides = [1, 1]} : vector<9x32xf32> to vector<1x32xf32>
    %3 = vector.extract_strided_slice %0 {offsets = [2, 0], sizes = [1, 32], strides = [1, 1]} : vector<9x32xf32> to vector<1x32xf32>
    %4 = vector.extract_strided_slice %0 {offsets = [3, 0], sizes = [1, 32], strides = [1, 1]} : vector<9x32xf32> to vector<1x32xf32>
    %5 = vector.extract_strided_slice %0 {offsets = [4, 0], sizes = [1, 32], strides = [1, 1]} : vector<9x32xf32> to vector<1x32xf32>
    %6 = vector.extract_strided_slice %0 {offsets = [5, 0], sizes = [1, 32], strides = [1, 1]} : vector<9x32xf32> to vector<1x32xf32>
    %7 = vector.extract_strided_slice %0 {offsets = [6, 0], sizes = [1, 32], strides = [1, 1]} : vector<9x32xf32> to vector<1x32xf32>
    %8 = vector.extract_strided_slice %0 {offsets = [7, 0], sizes = [1, 32], strides = [1, 1]} : vector<9x32xf32> to vector<1x32xf32>
    %9 = vector.extract_strided_slice %0 {offsets = [8, 0], sizes = [1, 32], strides = [1, 1]} : vector<9x32xf32> to vector<1x32xf32>
    %c0_i32 = arith.constant 0 : i32
    %10 = arith.cmpi eq, %arg1, %c0_i32 : i32
    %11 = arith.extui %10 : i1 to i32
    %c0_i32_1 = arith.constant 0 : i32
    %12 = arith.cmpi ne, %11, %c0_i32_1 : i32
    scf.if %12 {
      %c0_77 = arith.constant 0 : index
      %c0_78 = arith.constant 0 : index
      %c0_79 = arith.constant 0 : index
      %174 = vector.load %arg3[%c0_77, %c0_78, %c0_79] : memref<1x8x32xbf16, #tpu.memory_space<vmem>>, vector<1x8x32xbf16>
      %175 = vector.shape_cast %174 : vector<1x8x32xbf16> to vector<8x32xbf16>
      %c0_80 = arith.constant 0 : index
      %c0_81 = arith.constant 0 : index
      %176 = vector.load %arg5[%c0_80, %c0_81] : memref<32x32xbf16, #tpu.memory_space<vmem>>, vector<32x32xbf16>
      %cst_82 = arith.constant dense<0.000000e+00> : vector<8x32xf32>
      %177 = tpu.matmul %175, %176, %cst_82 {dimension_numbers = #tpu.dot_dimension_numbers<[1], [0], [0], [1], [0, 0, 1, 1], [], []>} : vector<8x32xbf16>, vector<32x32xbf16>, vector<8x32xf32> -> vector<8x32xf32>
      %178 = vector.broadcast %2 : vector<1x32xf32> to vector<8x32xf32>
      %179 = arith.addf %177, %178 : vector<8x32xf32>
      %180 = arith.truncf %179 : vector<8x32xf32> to vector<8x32xbf16>
      %c0_83 = arith.constant 0 : index
      %c0_84 = arith.constant 0 : index
      %181 = vector.load %arg6[%c0_83, %c0_84] : memref<32x32xbf16, #tpu.memory_space<vmem>>, vector<32x32xbf16>
      %cst_85 = arith.constant dense<0.000000e+00> : vector<8x32xf32>
      %182 = tpu.matmul %175, %181, %cst_85 {dimension_numbers = #tpu.dot_dimension_numbers<[1], [0], [0], [1], [0, 0, 1, 1], [], []>} : vector<8x32xbf16>, vector<32x32xbf16>, vector<8x32xf32> -> vector<8x32xf32>
      %183 = vector.broadcast %3 : vector<1x32xf32> to vector<8x32xf32>
      %184 = arith.addf %182, %183 : vector<8x32xf32>
      %185 = arith.truncf %184 : vector<8x32xf32> to vector<8x32xbf16>
      %186 = vector.extract_strided_slice %180 {offsets = [0, 0], sizes = [8, 8], strides = [1, 1]} : vector<8x32xbf16> to vector<8x8xbf16>
      %c0_86 = arith.constant 0 : index
      %c0_87 = arith.constant 0 : index
      %c0_88 = arith.constant 0 : index
      %187 = vector.load %arg13[%c0_86, %c0_87, %c0_88] : memref<4x8x8xbf16, #tpu.memory_space<vmem>>, vector<1x8x8xbf16>
      %188 = vector.shape_cast %187 : vector<1x8x8xbf16> to vector<8x8xbf16>
      %189 = vector.shape_cast %186 : vector<8x8xbf16> to vector<1x8x8xbf16>
      tpu.vector_store %arg13[%c0_86, %c0_87, %c0_88], %189 {strides = array<i32>} : memref<4x8x8xbf16, #tpu.memory_space<vmem>>, vector<1x8x8xbf16>,
      %190 = vector.extract_strided_slice %185 {offsets = [0, 0], sizes = [8, 8], strides = [1, 1]} : vector<8x32xbf16> to vector<8x8xbf16>
      %c0_89 = arith.constant 0 : index
      %c0_90 = arith.constant 0 : index
      %c0_91 = arith.constant 0 : index
      %191 = vector.load %arg14[%c0_89, %c0_90, %c0_91] : memref<4x8x8xbf16, #tpu.memory_space<vmem>>, vector<1x8x8xbf16>
      %192 = vector.shape_cast %191 : vector<1x8x8xbf16> to vector<8x8xbf16>
      %193 = vector.shape_cast %190 : vector<8x8xbf16> to vector<1x8x8xbf16>
      tpu.vector_store %arg14[%c0_89, %c0_90, %c0_91], %193 {strides = array<i32>} : memref<4x8x8xbf16, #tpu.memory_space<vmem>>, vector<1x8x8xbf16>,
      %194 = vector.extract_strided_slice %180 {offsets = [0, 8], sizes = [8, 8], strides = [1, 1]} : vector<8x32xbf16> to vector<8x8xbf16>
      %c1_92 = arith.constant 1 : index
      %c0_93 = arith.constant 0 : index
      %c0_94 = arith.constant 0 : index
      %195 = vector.load %arg13[%c1_92, %c0_93, %c0_94] : memref<4x8x8xbf16, #tpu.memory_space<vmem>>, vector<1x8x8xbf16>
      %196 = vector.shape_cast %195 : vector<1x8x8xbf16> to vector<8x8xbf16>
      %197 = vector.shape_cast %194 : vector<8x8xbf16> to vector<1x8x8xbf16>
      tpu.vector_store %arg13[%c1_92, %c0_93, %c0_94], %197 {strides = array<i32>} : memref<4x8x8xbf16, #tpu.memory_space<vmem>>, vector<1x8x8xbf16>,
      %198 = vector.extract_strided_slice %185 {offsets = [0, 8], sizes = [8, 8], strides = [1, 1]} : vector<8x32xbf16> to vector<8x8xbf16>
      %c1_95 = arith.constant 1 : index
      %c0_96 = arith.constant 0 : index
      %c0_97 = arith.constant 0 : index
      %199 = vector.load %arg14[%c1_95, %c0_96, %c0_97] : memref<4x8x8xbf16, #tpu.memory_space<vmem>>, vector<1x8x8xbf16>
      %200 = vector.shape_cast %199 : vector<1x8x8xbf16> to vector<8x8xbf16>
      %201 = vector.shape_cast %198 : vector<8x8xbf16> to vector<1x8x8xbf16>
      tpu.vector_store %arg14[%c1_95, %c0_96, %c0_97], %201 {strides = array<i32>} : memref<4x8x8xbf16, #tpu.memory_space<vmem>>, vector<1x8x8xbf16>,
      %202 = vector.extract_strided_slice %180 {offsets = [0, 16], sizes = [8, 8], strides = [1, 1]} : vector<8x32xbf16> to vector<8x8xbf16>
      %c2_98 = arith.constant 2 : index
      %c0_99 = arith.constant 0 : index
      %c0_100 = arith.constant 0 : index
      %203 = vector.load %arg13[%c2_98, %c0_99, %c0_100] : memref<4x8x8xbf16, #tpu.memory_space<vmem>>, vector<1x8x8xbf16>
      %204 = vector.shape_cast %203 : vector<1x8x8xbf16> to vector<8x8xbf16>
      %205 = vector.shape_cast %202 : vector<8x8xbf16> to vector<1x8x8xbf16>
      tpu.vector_store %arg13[%c2_98, %c0_99, %c0_100], %205 {strides = array<i32>} : memref<4x8x8xbf16, #tpu.memory_space<vmem>>, vector<1x8x8xbf16>,
      %206 = vector.extract_strided_slice %185 {offsets = [0, 16], sizes = [8, 8], strides = [1, 1]} : vector<8x32xbf16> to vector<8x8xbf16>
      %c2_101 = arith.constant 2 : index
      %c0_102 = arith.constant 0 : index
      %c0_103 = arith.constant 0 : index
      %207 = vector.load %arg14[%c2_101, %c0_102, %c0_103] : memref<4x8x8xbf16, #tpu.memory_space<vmem>>, vector<1x8x8xbf16>
      %208 = vector.shape_cast %207 : vector<1x8x8xbf16> to vector<8x8xbf16>
      %209 = vector.shape_cast %206 : vector<8x8xbf16> to vector<1x8x8xbf16>
      tpu.vector_store %arg14[%c2_101, %c0_102, %c0_103], %209 {strides = array<i32>} : memref<4x8x8xbf16, #tpu.memory_space<vmem>>, vector<1x8x8xbf16>,
      %210 = vector.extract_strided_slice %180 {offsets = [0, 24], sizes = [8, 8], strides = [1, 1]} : vector<8x32xbf16> to vector<8x8xbf16>
      %c3_104 = arith.constant 3 : index
      %c0_105 = arith.constant 0 : index
      %c0_106 = arith.constant 0 : index
      %211 = vector.load %arg13[%c3_104, %c0_105, %c0_106] : memref<4x8x8xbf16, #tpu.memory_space<vmem>>, vector<1x8x8xbf16>
      %212 = vector.shape_cast %211 : vector<1x8x8xbf16> to vector<8x8xbf16>
      %213 = vector.shape_cast %210 : vector<8x8xbf16> to vector<1x8x8xbf16>
      tpu.vector_store %arg13[%c3_104, %c0_105, %c0_106], %213 {strides = array<i32>} : memref<4x8x8xbf16, #tpu.memory_space<vmem>>, vector<1x8x8xbf16>,
      %214 = vector.extract_strided_slice %185 {offsets = [0, 24], sizes = [8, 8], strides = [1, 1]} : vector<8x32xbf16> to vector<8x8xbf16>
      %c3_107 = arith.constant 3 : index
      %c0_108 = arith.constant 0 : index
      %c0_109 = arith.constant 0 : index
      %215 = vector.load %arg14[%c3_107, %c0_108, %c0_109] : memref<4x8x8xbf16, #tpu.memory_space<vmem>>, vector<1x8x8xbf16>
      %216 = vector.shape_cast %215 : vector<1x8x8xbf16> to vector<8x8xbf16>
      %217 = vector.shape_cast %214 : vector<8x8xbf16> to vector<1x8x8xbf16>
      tpu.vector_store %arg14[%c3_107, %c0_108, %c0_109], %217 {strides = array<i32>} : memref<4x8x8xbf16, #tpu.memory_space<vmem>>, vector<1x8x8xbf16>,
    } else {
    }
    %c0_2 = arith.constant 0 : index
    %c0_3 = arith.constant 0 : index
    %c0_4 = arith.constant 0 : index
    %13 = vector.load %arg2[%c0_2, %c0_3, %c0_4] : memref<1x8x32xf32, #tpu.memory_space<vmem>>, vector<1x8x32xf32>
    %14 = vector.shape_cast %13 : vector<1x8x32xf32> to vector<8x32xf32>
    %15 = arith.truncf %14 : vector<8x32xf32> to vector<8x32xbf16>
    %c0_5 = arith.constant 0 : index
    %c0_6 = arith.constant 0 : index
    %16 = vector.load %arg4[%c0_5, %c0_6] : memref<32x32xbf16, #tpu.memory_space<vmem>>, vector<32x32xbf16>
    %cst = arith.constant dense<0.000000e+00> : vector<8x32xf32>
    %17 = tpu.matmul %15, %16, %cst {dimension_numbers = #tpu.dot_dimension_numbers<[1], [0], [0], [1], [0, 0, 1, 1], [], []>} : vector<8x32xbf16>, vector<32x32xbf16>, vector<8x32xf32> -> vector<8x32xf32>
    %18 = vector.broadcast %1 : vector<1x32xf32> to vector<8x32xf32>
    %19 = arith.addf %17, %18 : vector<8x32xf32>
    %20 = arith.truncf %19 : vector<8x32xf32> to vector<8x32xbf16>
    %21 = vector.extract_strided_slice %20 {offsets = [0, 0], sizes = [8, 8], strides = [1, 1]} : vector<8x32xbf16> to vector<8x8xbf16>
    %c0_7 = arith.constant 0 : index
    %c0_8 = arith.constant 0 : index
    %c0_9 = arith.constant 0 : index
    %22 = vector.load %arg13[%c0_7, %c0_8, %c0_9] : memref<4x8x8xbf16, #tpu.memory_space<vmem>>, vector<1x8x8xbf16>
    %23 = vector.shape_cast %22 : vector<1x8x8xbf16> to vector<8x8xbf16>
    %c0_10 = arith.constant 0 : index
    %c0_11 = arith.constant 0 : index
    %c0_12 = arith.constant 0 : index
    %24 = vector.load %arg14[%c0_10, %c0_11, %c0_12] : memref<4x8x8xbf16, #tpu.memory_space<vmem>>, vector<1x8x8xbf16>
    %25 = vector.shape_cast %24 : vector<1x8x8xbf16> to vector<8x8xbf16>
    %cst_13 = arith.constant dense<0.000000e+00> : vector<8x8xf32>
    %26 = tpu.matmul %21, %23, %cst_13 {dimension_numbers = #tpu.dot_dimension_numbers<[1], [1], [0], [0], [0, 0, 1, 0], [], []>} : vector<8x8xbf16>, vector<8x8xbf16>, vector<8x8xf32> -> vector<8x8xf32>
    %cst_14 = arith.constant dense<0xFF800000> : vector<8xf32>
    %27 = vector.multi_reduction <maximumf>, %26, %cst_14 [1] : vector<8x8xf32> to vector<8xf32>
    %28 = vector.shape_cast %27 : vector<8xf32> to vector<8x1xf32>
    %29 = vector.broadcast %28 : vector<8x1xf32> to vector<8x8xf32>
    %30 = arith.subf %26, %29 : vector<8x8xf32>
    %31 = math.exp %30 : vector<8x8xf32>
    %cst_15 = arith.constant dense<0.000000e+00> : vector<8xf32>
    %32 = vector.multi_reduction <add>, %31, %cst_15 [1] : vector<8x8xf32> to vector<8xf32>
    %33 = vector.shape_cast %32 : vector<8xf32> to vector<8x1xf32>
    %34 = tpu.reciprocal %33 {approx = true} : vector<8x1xf32> -> vector<8x1xf32>
    %35 = arith.truncf %31 : vector<8x8xf32> to vector<8x8xbf16>
    %cst_16 = arith.constant dense<0.000000e+00> : vector<8x8xf32>
    %36 = tpu.matmul %35, %25, %cst_16 {dimension_numbers = #tpu.dot_dimension_numbers<[1], [0], [0], [1], [0, 0, 1, 1], [], []>} : vector<8x8xbf16>, vector<8x8xbf16>, vector<8x8xf32> -> vector<8x8xf32>
    %37 = vector.broadcast %34 : vector<8x1xf32> to vector<8x8xf32>
    %38 = arith.mulf %36, %37 : vector<8x8xf32>
    %39 = arith.truncf %38 : vector<8x8xf32> to vector<8x8xbf16>
    %c0_17 = arith.constant 0 : index
    %c0_18 = arith.constant 0 : index
    %40 = vector.load %arg7[%c0_17, %c0_18] : memref<32x32xbf16, #tpu.memory_space<vmem>>, vector<8x32xbf16>
    %cst_19 = arith.constant dense<0.000000e+00> : vector<8x32xf32>
    %41 = tpu.matmul %39, %40, %cst_19 {dimension_numbers = #tpu.dot_dimension_numbers<[1], [0], [0], [1], [0, 0, 1, 1], [], []>} : vector<8x8xbf16>, vector<8x32xbf16>, vector<8x32xf32> -> vector<8x32xf32>
    %42 = vector.extract_strided_slice %20 {offsets = [0, 8], sizes = [8, 8], strides = [1, 1]} : vector<8x32xbf16> to vector<8x8xbf16>
    %c1 = arith.constant 1 : index
    %c0_20 = arith.constant 0 : index
    %c0_21 = arith.constant 0 : index
    %43 = vector.load %arg13[%c1, %c0_20, %c0_21] : memref<4x8x8xbf16, #tpu.memory_space<vmem>>, vector<1x8x8xbf16>
    %44 = vector.shape_cast %43 : vector<1x8x8xbf16> to vector<8x8xbf16>
    %c1_22 = arith.constant 1 : index
    %c0_23 = arith.constant 0 : index
    %c0_24 = arith.constant 0 : index
    %45 = vector.load %arg14[%c1_22, %c0_23, %c0_24] : memref<4x8x8xbf16, #tpu.memory_space<vmem>>, vector<1x8x8xbf16>
    %46 = vector.shape_cast %45 : vector<1x8x8xbf16> to vector<8x8xbf16>
    %cst_25 = arith.constant dense<0.000000e+00> : vector<8x8xf32>
    %47 = tpu.matmul %42, %44, %cst_25 {dimension_numbers = #tpu.dot_dimension_numbers<[1], [1], [0], [0], [0, 0, 1, 0], [], []>} : vector<8x8xbf16>, vector<8x8xbf16>, vector<8x8xf32> -> vector<8x8xf32>
    %cst_26 = arith.constant dense<0xFF800000> : vector<8xf32>
    %48 = vector.multi_reduction <maximumf>, %47, %cst_26 [1] : vector<8x8xf32> to vector<8xf32>
    %49 = vector.shape_cast %48 : vector<8xf32> to vector<8x1xf32>
    %50 = vector.broadcast %49 : vector<8x1xf32> to vector<8x8xf32>
    %51 = arith.subf %47, %50 : vector<8x8xf32>
    %52 = math.exp %51 : vector<8x8xf32>
    %cst_27 = arith.constant dense<0.000000e+00> : vector<8xf32>
    %53 = vector.multi_reduction <add>, %52, %cst_27 [1] : vector<8x8xf32> to vector<8xf32>
    %54 = vector.shape_cast %53 : vector<8xf32> to vector<8x1xf32>
    %55 = tpu.reciprocal %54 {approx = true} : vector<8x1xf32> -> vector<8x1xf32>
    %56 = arith.truncf %52 : vector<8x8xf32> to vector<8x8xbf16>
    %cst_28 = arith.constant dense<0.000000e+00> : vector<8x8xf32>
    %57 = tpu.matmul %56, %46, %cst_28 {dimension_numbers = #tpu.dot_dimension_numbers<[1], [0], [0], [1], [0, 0, 1, 1], [], []>} : vector<8x8xbf16>, vector<8x8xbf16>, vector<8x8xf32> -> vector<8x8xf32>
    %58 = vector.broadcast %55 : vector<8x1xf32> to vector<8x8xf32>
    %59 = arith.mulf %57, %58 : vector<8x8xf32>
    %60 = arith.truncf %59 : vector<8x8xf32> to vector<8x8xbf16>
    %c8 = arith.constant 8 : index
    %c0_29 = arith.constant 0 : index
    %61 = vector.load %arg7[%c8, %c0_29] : memref<32x32xbf16, #tpu.memory_space<vmem>>, vector<8x32xbf16>
    %cst_30 = arith.constant dense<0.000000e+00> : vector<8x32xf32>
    %62 = tpu.matmul %60, %61, %cst_30 {dimension_numbers = #tpu.dot_dimension_numbers<[1], [0], [0], [1], [0, 0, 1, 1], [], []>} : vector<8x8xbf16>, vector<8x32xbf16>, vector<8x32xf32> -> vector<8x32xf32>
    %63 = arith.addf %41, %62 : vector<8x32xf32>
    %64 = vector.extract_strided_slice %20 {offsets = [0, 16], sizes = [8, 8], strides = [1, 1]} : vector<8x32xbf16> to vector<8x8xbf16>
    %c2 = arith.constant 2 : index
    %c0_31 = arith.constant 0 : index
    %c0_32 = arith.constant 0 : index
    %65 = vector.load %arg13[%c2, %c0_31, %c0_32] : memref<4x8x8xbf16, #tpu.memory_space<vmem>>, vector<1x8x8xbf16>
    %66 = vector.shape_cast %65 : vector<1x8x8xbf16> to vector<8x8xbf16>
    %c2_33 = arith.constant 2 : index
    %c0_34 = arith.constant 0 : index
    %c0_35 = arith.constant 0 : index
    %67 = vector.load %arg14[%c2_33, %c0_34, %c0_35] : memref<4x8x8xbf16, #tpu.memory_space<vmem>>, vector<1x8x8xbf16>
    %68 = vector.shape_cast %67 : vector<1x8x8xbf16> to vector<8x8xbf16>
    %cst_36 = arith.constant dense<0.000000e+00> : vector<8x8xf32>
    %69 = tpu.matmul %64, %66, %cst_36 {dimension_numbers = #tpu.dot_dimension_numbers<[1], [1], [0], [0], [0, 0, 1, 0], [], []>} : vector<8x8xbf16>, vector<8x8xbf16>, vector<8x8xf32> -> vector<8x8xf32>
    %cst_37 = arith.constant dense<0xFF800000> : vector<8xf32>
    %70 = vector.multi_reduction <maximumf>, %69, %cst_37 [1] : vector<8x8xf32> to vector<8xf32>
    %71 = vector.shape_cast %70 : vector<8xf32> to vector<8x1xf32>
    %72 = vector.broadcast %71 : vector<8x1xf32> to vector<8x8xf32>
    %73 = arith.subf %69, %72 : vector<8x8xf32>
    %74 = math.exp %73 : vector<8x8xf32>
    %cst_38 = arith.constant dense<0.000000e+00> : vector<8xf32>
    %75 = vector.multi_reduction <add>, %74, %cst_38 [1] : vector<8x8xf32> to vector<8xf32>
    %76 = vector.shape_cast %75 : vector<8xf32> to vector<8x1xf32>
    %77 = tpu.reciprocal %76 {approx = true} : vector<8x1xf32> -> vector<8x1xf32>
    %78 = arith.truncf %74 : vector<8x8xf32> to vector<8x8xbf16>
    %cst_39 = arith.constant dense<0.000000e+00> : vector<8x8xf32>
    %79 = tpu.matmul %78, %68, %cst_39 {dimension_numbers = #tpu.dot_dimension_numbers<[1], [0], [0], [1], [0, 0, 1, 1], [], []>} : vector<8x8xbf16>, vector<8x8xbf16>, vector<8x8xf32> -> vector<8x8xf32>
    %80 = vector.broadcast %77 : vector<8x1xf32> to vector<8x8xf32>
    %81 = arith.mulf %79, %80 : vector<8x8xf32>
    %82 = arith.truncf %81 : vector<8x8xf32> to vector<8x8xbf16>
    %c16 = arith.constant 16 : index
    %c0_40 = arith.constant 0 : index
    %83 = vector.load %arg7[%c16, %c0_40] : memref<32x32xbf16, #tpu.memory_space<vmem>>, vector<8x32xbf16>
    %cst_41 = arith.constant dense<0.000000e+00> : vector<8x32xf32>
    %84 = tpu.matmul %82, %83, %cst_41 {dimension_numbers = #tpu.dot_dimension_numbers<[1], [0], [0], [1], [0, 0, 1, 1], [], []>} : vector<8x8xbf16>, vector<8x32xbf16>, vector<8x32xf32> -> vector<8x32xf32>
    %85 = arith.addf %63, %84 : vector<8x32xf32>
    %86 = vector.extract_strided_slice %20 {offsets = [0, 24], sizes = [8, 8], strides = [1, 1]} : vector<8x32xbf16> to vector<8x8xbf16>
    %c3 = arith.constant 3 : index
    %c0_42 = arith.constant 0 : index
    %c0_43 = arith.constant 0 : index
    %87 = vector.load %arg13[%c3, %c0_42, %c0_43] : memref<4x8x8xbf16, #tpu.memory_space<vmem>>, vector<1x8x8xbf16>
    %88 = vector.shape_cast %87 : vector<1x8x8xbf16> to vector<8x8xbf16>
    %c3_44 = arith.constant 3 : index
    %c0_45 = arith.constant 0 : index
    %c0_46 = arith.constant 0 : index
    %89 = vector.load %arg14[%c3_44, %c0_45, %c0_46] : memref<4x8x8xbf16, #tpu.memory_space<vmem>>, vector<1x8x8xbf16>
    %90 = vector.shape_cast %89 : vector<1x8x8xbf16> to vector<8x8xbf16>
    %cst_47 = arith.constant dense<0.000000e+00> : vector<8x8xf32>
    %91 = tpu.matmul %86, %88, %cst_47 {dimension_numbers = #tpu.dot_dimension_numbers<[1], [1], [0], [0], [0, 0, 1, 0], [], []>} : vector<8x8xbf16>, vector<8x8xbf16>, vector<8x8xf32> -> vector<8x8xf32>
    %cst_48 = arith.constant dense<0xFF800000> : vector<8xf32>
    %92 = vector.multi_reduction <maximumf>, %91, %cst_48 [1] : vector<8x8xf32> to vector<8xf32>
    %93 = vector.shape_cast %92 : vector<8xf32> to vector<8x1xf32>
    %94 = vector.broadcast %93 : vector<8x1xf32> to vector<8x8xf32>
    %95 = arith.subf %91, %94 : vector<8x8xf32>
    %96 = math.exp %95 : vector<8x8xf32>
    %cst_49 = arith.constant dense<0.000000e+00> : vector<8xf32>
    %97 = vector.multi_reduction <add>, %96, %cst_49 [1] : vector<8x8xf32> to vector<8xf32>
    %98 = vector.shape_cast %97 : vector<8xf32> to vector<8x1xf32>
    %99 = tpu.reciprocal %98 {approx = true} : vector<8x1xf32> -> vector<8x1xf32>
    %100 = arith.truncf %96 : vector<8x8xf32> to vector<8x8xbf16>
    %cst_50 = arith.constant dense<0.000000e+00> : vector<8x8xf32>
    %101 = tpu.matmul %100, %90, %cst_50 {dimension_numbers = #tpu.dot_dimension_numbers<[1], [0], [0], [1], [0, 0, 1, 1], [], []>} : vector<8x8xbf16>, vector<8x8xbf16>, vector<8x8xf32> -> vector<8x8xf32>
    %102 = vector.broadcast %99 : vector<8x1xf32> to vector<8x8xf32>
    %103 = arith.mulf %101, %102 : vector<8x8xf32>
    %104 = arith.truncf %103 : vector<8x8xf32> to vector<8x8xbf16>
    %c24 = arith.constant 24 : index
    %c0_51 = arith.constant 0 : index
    %105 = vector.load %arg7[%c24, %c0_51] : memref<32x32xbf16, #tpu.memory_space<vmem>>, vector<8x32xbf16>
    %cst_52 = arith.constant dense<0.000000e+00> : vector<8x32xf32>
    %106 = tpu.matmul %104, %105, %cst_52 {dimension_numbers = #tpu.dot_dimension_numbers<[1], [0], [0], [1], [0, 0, 1, 1], [], []>} : vector<8x8xbf16>, vector<8x32xbf16>, vector<8x32xf32> -> vector<8x32xf32>
    %107 = arith.addf %85, %106 : vector<8x32xf32>
    %108 = vector.broadcast %4 : vector<1x32xf32> to vector<8x32xf32>
    %109 = arith.addf %107, %108 : vector<8x32xf32>
    %110 = arith.addf %14, %109 : vector<8x32xf32>
    %cst_53 = arith.constant dense<0.000000e+00> : vector<8xf32>
    %111 = vector.multi_reduction <add>, %110, %cst_53 [1] : vector<8x32xf32> to vector<8xf32>
    %112 = vector.shape_cast %111 : vector<8xf32> to vector<8x1xf32>
    %cst_54 = arith.constant 3.200000e+01 : f32
    %113 = vector.broadcast %cst_54 : f32 to vector<8x1xf32>
    %114 = arith.divf %112, %113 : vector<8x1xf32>
    %115 = vector.broadcast %114 : vector<8x1xf32> to vector<8x32xf32>
    %116 = arith.subf %110, %115 : vector<8x32xf32>
    %117 = arith.mulf %116, %116 : vector<8x32xf32>
    %cst_55 = arith.constant dense<0.000000e+00> : vector<8xf32>
    %118 = vector.multi_reduction <add>, %117, %cst_55 [1] : vector<8x32xf32> to vector<8xf32>
    %119 = vector.shape_cast %118 : vector<8xf32> to vector<8x1xf32>
    %cst_56 = arith.constant 3.200000e+01 : f32
    %120 = vector.broadcast %cst_56 : f32 to vector<8x1xf32>
    %121 = arith.divf %119, %120 : vector<8x1xf32>
    %cst_57 = arith.constant 9.99999974E-6 : f32
    %122 = vector.broadcast %cst_57 : f32 to vector<8x1xf32>
    %123 = arith.addf %121, %122 : vector<8x1xf32>
    %124 = math.rsqrt %123 : vector<8x1xf32>
    %125 = vector.broadcast %124 : vector<8x1xf32> to vector<8x32xf32>
    %126 = arith.mulf %116, %125 : vector<8x32xf32>
    %127 = vector.broadcast %5 : vector<1x32xf32> to vector<8x32xf32>
    %128 = arith.mulf %126, %127 : vector<8x32xf32>
    %129 = vector.broadcast %6 : vector<1x32xf32> to vector<8x32xf32>
    %130 = arith.addf %128, %129 : vector<8x32xf32>
    %131 = arith.truncf %130 : vector<8x32xf32> to vector<8x32xbf16>
    %c0_58 = arith.constant 0 : index
    %c0_59 = arith.constant 0 : index
    %132 = vector.load %arg8[%c0_58, %c0_59] : memref<32x128xbf16, #tpu.memory_space<vmem>>, vector<32x128xbf16>
    %cst_60 = arith.constant dense<0.000000e+00> : vector<8x128xf32>
    %133 = tpu.matmul %131, %132, %cst_60 {dimension_numbers = #tpu.dot_dimension_numbers<[1], [0], [0], [1], [0, 0, 1, 1], [], []>} : vector<8x32xbf16>, vector<32x128xbf16>, vector<8x128xf32> -> vector<8x128xf32>
    %c0_61 = arith.constant 0 : index
    %c0_62 = arith.constant 0 : index
    %134 = vector.load %arg9[%c0_61, %c0_62] : memref<1x128xf32, #tpu.memory_space<vmem>>, vector<1x128xf32>
    %135 = vector.broadcast %134 : vector<1x128xf32> to vector<8x128xf32>
    %136 = arith.addf %133, %135 : vector<8x128xf32>
    %cst_63 = arith.constant 5.000000e-01 : f32
    %137 = vector.broadcast %cst_63 : f32 to vector<8x128xf32>
    %138 = arith.mulf %137, %136 : vector<8x128xf32>
    %cst_64 = arith.constant 0.707106769 : f32
    %139 = vector.broadcast %cst_64 : f32 to vector<8x128xf32>
    %140 = arith.mulf %136, %139 : vector<8x128xf32>
    %141 = math.erf %140 : vector<8x128xf32>
    %cst_65 = arith.constant 1.000000e+00 : f32
    %142 = vector.broadcast %cst_65 : f32 to vector<8x128xf32>
    %143 = arith.addf %142, %141 : vector<8x128xf32>
    %144 = arith.mulf %138, %143 : vector<8x128xf32>
    %145 = arith.truncf %144 : vector<8x128xf32> to vector<8x128xbf16>
    %c0_66 = arith.constant 0 : index
    %c0_67 = arith.constant 0 : index
    %146 = vector.load %arg10[%c0_66, %c0_67] : memref<128x32xbf16, #tpu.memory_space<vmem>>, vector<128x32xbf16>
    %cst_68 = arith.constant dense<0.000000e+00> : vector<8x32xf32>
    %147 = tpu.matmul %145, %146, %cst_68 {dimension_numbers = #tpu.dot_dimension_numbers<[1], [0], [0], [1], [0, 0, 1, 1], [], []>} : vector<8x128xbf16>, vector<128x32xbf16>, vector<8x32xf32> -> vector<8x32xf32>
    %148 = vector.broadcast %7 : vector<1x32xf32> to vector<8x32xf32>
    %149 = arith.addf %147, %148 : vector<8x32xf32>
    %150 = arith.addf %130, %149 : vector<8x32xf32>
    %cst_69 = arith.constant dense<0.000000e+00> : vector<8xf32>
    %151 = vector.multi_reduction <add>, %150, %cst_69 [1] : vector<8x32xf32> to vector<8xf32>
    %152 = vector.shape_cast %151 : vector<8xf32> to vector<8x1xf32>
    %cst_70 = arith.constant 3.200000e+01 : f32
    %153 = vector.broadcast %cst_70 : f32 to vector<8x1xf32>
    %154 = arith.divf %152, %153 : vector<8x1xf32>
    %155 = vector.broadcast %154 : vector<8x1xf32> to vector<8x32xf32>
    %156 = arith.subf %150, %155 : vector<8x32xf32>
    %157 = arith.mulf %156, %156 : vector<8x32xf32>
    %cst_71 = arith.constant dense<0.000000e+00> : vector<8xf32>
    %158 = vector.multi_reduction <add>, %157, %cst_71 [1] : vector<8x32xf32> to vector<8xf32>
    %159 = vector.shape_cast %158 : vector<8xf32> to vector<8x1xf32>
    %cst_72 = arith.constant 3.200000e+01 : f32
    %160 = vector.broadcast %cst_72 : f32 to vector<8x1xf32>
    %161 = arith.divf %159, %160 : vector<8x1xf32>
    %cst_73 = arith.constant 9.99999974E-6 : f32
    %162 = vector.broadcast %cst_73 : f32 to vector<8x1xf32>
    %163 = arith.addf %161, %162 : vector<8x1xf32>
    %164 = math.rsqrt %163 : vector<8x1xf32>
    %165 = vector.broadcast %164 : vector<8x1xf32> to vector<8x32xf32>
    %166 = arith.mulf %156, %165 : vector<8x32xf32>
    %167 = vector.broadcast %8 : vector<1x32xf32> to vector<8x32xf32>
    %168 = arith.mulf %166, %167 : vector<8x32xf32>
    %169 = vector.broadcast %9 : vector<1x32xf32> to vector<8x32xf32>
    %170 = arith.addf %168, %169 : vector<8x32xf32>
    %c0_74 = arith.constant 0 : index
    %c0_75 = arith.constant 0 : index
    %c0_76 = arith.constant 0 : index
    %171 = vector.load %arg12[%c0_74, %c0_75, %c0_76] : memref<1x8x32xf32, #tpu.memory_space<vmem>>, vector<1x8x32xf32>
    %172 = vector.shape_cast %171 : vector<1x8x32xf32> to vector<8x32xf32>
    %173 = vector.shape_cast %170 : vector<8x32xf32> to vector<1x8x32xf32>
    tpu.vector_store %arg12[%c0_74, %c0_75, %c0_76], %173 {strides = array<i32>} : memref<1x8x32xf32, #tpu.memory_space<vmem>>, vector<1x8x32xf32>,
    return
  }
  func.func @transform_0(%arg0: i32, %arg1: i32) -> (i32, i32, i32) {
    %c0_i32 = arith.constant 0 : i32
    %c0_i32_0 = arith.constant 0 : i32
    return %arg0, %arg1, %c0_i32 : i32, i32, i32
  }
  func.func @transform_1(%arg0: i32, %arg1: i32) -> (i32, i32, i32) {
    %c0_i32 = arith.constant 0 : i32
    %c0_i32_0 = arith.constant 0 : i32
    %c0_i32_1 = arith.constant 0 : i32
    return %arg0, %c0_i32, %c0_i32_0 : i32, i32, i32
  }
  func.func @transform_2(%arg0: i32, %arg1: i32) -> (i32, i32) {
    %c0_i32 = arith.constant 0 : i32
    %c0_i32_0 = arith.constant 0 : i32
    %c0_i32_1 = arith.constant 0 : i32
    return %c0_i32, %c0_i32_0 : i32, i32
  }
  func.func @transform_3(%arg0: i32, %arg1: i32) -> (i32, i32) {
    %c0_i32 = arith.constant 0 : i32
    %c0_i32_0 = arith.constant 0 : i32
    %c0_i32_1 = arith.constant 0 : i32
    return %c0_i32, %c0_i32_0 : i32, i32
  }
  func.func @transform_4(%arg0: i32, %arg1: i32) -> (i32, i32) {
    %c0_i32 = arith.constant 0 : i32
    %c0_i32_0 = arith.constant 0 : i32
    %c0_i32_1 = arith.constant 0 : i32
    return %c0_i32, %c0_i32_0 : i32, i32
  }
  func.func @transform_5(%arg0: i32, %arg1: i32) -> (i32, i32) {
    %c0_i32 = arith.constant 0 : i32
    %c0_i32_0 = arith.constant 0 : i32
    %c0_i32_1 = arith.constant 0 : i32
    return %c0_i32, %c0_i32_0 : i32, i32
  }
  func.func @transform_6(%arg0: i32, %arg1: i32) -> (i32, i32) {
    %c0_i32 = arith.constant 0 : i32
    %c0_i32_0 = arith.constant 0 : i32
    %c0_i32_1 = arith.constant 0 : i32
    return %c0_i32, %c0_i32_0 : i32, i32
  }
  func.func @transform_7(%arg0: i32, %arg1: i32) -> (i32, i32) {
    %c0_i32 = arith.constant 0 : i32
    %c0_i32_0 = arith.constant 0 : i32
    %c0_i32_1 = arith.constant 0 : i32
    return %c0_i32, %c0_i32_0 : i32, i32
  }
  func.func @transform_8(%arg0: i32, %arg1: i32) -> (i32, i32) {
    %c0_i32 = arith.constant 0 : i32
    %c0_i32_0 = arith.constant 0 : i32
    %c0_i32_1 = arith.constant 0 : i32
    return %c0_i32, %c0_i32_0 : i32, i32
  }
  func.func @transform_9(%arg0: i32, %arg1: i32) -> (i32, i32) {
    %c0_i32 = arith.constant 0 : i32
    %c0_i32_0 = arith.constant 0 : i32
    %c0_i32_1 = arith.constant 0 : i32
    return %c0_i32, %c0_i32_0 : i32, i32
  }
  func.func @transform_10(%arg0: i32, %arg1: i32) -> (i32, i32, i32) {
    %c0_i32 = arith.constant 0 : i32
    %c0_i32_0 = arith.constant 0 : i32
    return %arg0, %arg1, %c0_i32 : i32, i32, i32
  }
}

</mosaic_0001>

<llo_original>
// kernel: tpu_custom_call.1
$region0: #{tpu_custom_call.1}
  #allocation0 [shape = 'u32[]', space=smem, size = 0x4, offset = 0x4, fixed_abs, tag = 'smem constant byte address 0x4 - core index']
  #allocation1 [shape = 'u32[144,128]{1,0:T(1,128)}', space=vmem, size = 0x12000, scoped, tag = 'internal scratch']
  #allocation2 [shape = 'bf16[4,8,8]{2,1,0:T(8,128)(2,1)}', space=vmem, size = 0x2000, scoped, tag = 'scratch operand']
  #allocation3 [shape = 'bf16[4,8,8]{2,1,0:T(8,128)(2,1)}', space=vmem, size = 0x2000, scoped, tag = 'scratch operand']
  %s0 = inlined_call_operand.hbm [shape: f32[2,8,32], index: 0, kind: input, shape index: {}]
  %s1 = inlined_call_operand.hbm [shape: bf16[2,8,32], index: 1, kind: input, shape index: {}]
  %s2 = inlined_call_operand.hbm [shape: bf16[32,32], index: 2, kind: input, shape index: {}]
  %s3 = inlined_call_operand.hbm [shape: bf16[32,32], index: 3, kind: input, shape index: {}]
  %s4 = inlined_call_operand.hbm [shape: bf16[32,32], index: 4, kind: input, shape index: {}]
  %s5 = inlined_call_operand.hbm [shape: bf16[32,32], index: 5, kind: input, shape index: {}]
  %s6 = inlined_call_operand.hbm [shape: bf16[32,128], index: 6, kind: input, shape index: {}]
  %s7 = inlined_call_operand.hbm [shape: f32[1,128], index: 7, kind: input, shape index: {}]
  %s8 = inlined_call_operand.hbm [shape: bf16[128,32], index: 8, kind: input, shape index: {}]
  %s9 = inlined_call_operand.hbm [shape: f32[9,32], index: 9, kind: input, shape index: {}]
  %s10 = inlined_call_operand.hbm [shape: f32[2,8,32], index: 10, kind: output, shape index: {}]
  %s11 = sld [smem:[#allocation0]]
  $region117: #{tpu_custom_call.1} parent=0
    _
  %s13 = ssub.s32 1, %s11
  %s14 = scalar_select 0, %s13, %s11
  $region1: #{tpu_custom_call.1} parent=0
    #allocation4 [shape = 'u8[8192]{0}', space=vmem, size = 0x2000, scoped, tag = 'input window, operand 0']
    #allocation5 [shape = 's32[2]{0}', space=sflag, size = 0x8, scoped, tag = 'scoped memory for tpu_custom_call.1']
    #allocation6 [shape = 's32[2]{0}', space=sflag, size = 0x8, scoped, tag = 'scoped memory for tpu_custom_call.1']
    #allocation7 [shape = 'u8[4096]{0}', space=vmem, size = 0x1000, scoped, tag = 'input window, operand 1']
    #allocation8 [shape = 's32[2]{0}', space=sflag, size = 0x8, scoped, tag = 'scoped memory for tpu_custom_call.1']
    #allocation9 [shape = 'u8[8192]{0}', space=vmem, size = 0x2000, scoped, tag = 'input window, operand 2, single buffered']
    #allocation10 [shape = 'u8[8192]{0}', space=vmem, size = 0x2000, scoped, tag = 'input window, operand 3, single buffered']
    #allocation11 [shape = 's32[1]{0}', space=sflag, size = 0x4, scoped, tag = 'scoped memory for tpu_custom_call.1']
    #allocation12 [shape = 'u8[8192]{0}', space=vmem, size = 0x2000, scoped, tag = 'input window, operand 4, single buffered']
    #allocation13 [shape = 'u8[8192]{0}', space=vmem, size = 0x2000, scoped, tag = 'input window, operand 5, single buffered']
    #allocation14 [shape = 's32[1]{0}', space=sflag, size = 0x4, scoped, tag = 'scoped memory for tpu_custom_call.1']
    #allocation15 [shape = 'u8[8192]{0}', space=vmem, size = 0x2000, scoped, tag = 'input window, operand 6, single buffered']
    #allocation16 [shape = 'u8[512]{0}', space=vmem, size = 0x400, scoped, tag = 'input window, operand 7, single buffered']
    #allocation17 [shape = 's32[1]{0}', space=sflag, size = 0x4, scoped, tag = 'scoped memory for tpu_custom_call.1']
    #allocation18 [shape = 'u8[32768]{0}', space=vmem, size = 0x8000, scoped, tag = 'input window, operand 8, single buffered']
    #allocation19 [shape = 'u8[8192]{0}', space=vmem, size = 0x2000, scoped, tag = 'input window, operand 9, single buffered']
    #allocation20 [shape = 's32[1]{0}', space=sflag, size = 0x4, scoped, tag = 'scoped memory for tpu_custom_call.1']
    #allocation21 [shape = 'u8[8192]{0}', space=vmem, size = 0x2000, scoped, tag = 'output window, operand 0']
    %15 = vsyncpa [#allocation5], 0
    %s16 = scalar_lea.sflag [#allocation5], 1
    %17 = vsyncpa %s16, 0
    %18 = vsyncpa [#allocation8], 0
    %s19 = scalar_lea.sflag [#allocation8], 1
    %20 = vsyncpa %s19, 0
    %21 = vsyncpa [#allocation11], 0
    %22 = vsyncpa [#allocation14], 0
    %23 = vsyncpa [#allocation17], 0
    %24 = vsyncpa [#allocation20], 0
    %25 = vsyncpa [#allocation6], 0
    %s26 = scalar_lea.sflag [#allocation6], 1
    %27 = vsyncpa %s26, 0
    loop: start=0, step=1, limit=4
    $region2: #{tpu_custom_call.1} parent=1 // loop_pre_header
      _
    $region3: #{tpu_custom_call.1} parent=1 // loop_header
      %s29 = sphi 0, %s33
      %p30 = scmp.ge.s32.totalorder %s29, 4
      %s36 = sphi 0, %s48
      %s37 = sphi 0, %s44
      %s38 = sphi 0, %s36
      %s39 = sphi 0, %s37
      %s40 = sphi 0, %s38
      %s41 = sphi 0, %s39
      %s53 = sphi 0, %s55
      %s56 = sphi 0, %s53
      %s57 = sphi 0, %s56
      %s73 = sphi 0, %s57
      %s79 = sphi 0, %s81
      %s82 = sphi 0, %s79
      %s83 = sphi 0, %s82
      %s99 = sphi 0, %s83
      %s103 = sphi 0, %s103
      %s105 = sphi 0, %s103
      %s106 = sphi 0, %s105
      %s120 = sphi 0, %s106
      %s124 = sphi 0, %s124
      %s126 = sphi 0, %s124
      %s127 = sphi 0, %s126
      %s141 = sphi 0, %s127
      %s145 = sphi 0, %s145
      %s147 = sphi 0, %s145
      %s148 = sphi 0, %s147
      %s162 = sphi 0, %s148
      %s166 = sphi 0, %s166
      %s168 = sphi 0, %s166
      %s169 = sphi 0, %s168
      %s183 = sphi 0, %s169
      %s187 = sphi 0, %s187
      %s189 = sphi 0, %s187
      %s190 = sphi 0, %s189
      %s204 = sphi 0, %s190
      %s208 = sphi 0, %s208
      %s210 = sphi 0, %s208
      %s211 = sphi 0, %s210
      %s225 = sphi 0, %s211
      %s229 = sphi 0, %s229
      %s231 = sphi 0, %s229
      %s232 = sphi 0, %s231
      %s246 = sphi 0, %s232
      %s250 = sphi 0, %s250
      %s252 = sphi 0, %s250
      %s253 = sphi 0, %s252
      %s267 = sphi 0, %s253
      %s275 = sphi 0, %s277
      %s278 = sphi 0, %s275
      %s279 = sphi 0, %s278
      %s295 = sphi 0, %s279
    $region4: #{tpu_custom_call.1} parent=1 // loop_header_branch
      %32 = sbr.rel (%p30) target = $region8
    $region5: #{tpu_custom_call.1} parent=1 // loop_body
      %s34 = ssub.s32 %s29, 1
      %s35 = ssub.s32 %s29, 2
      %s42 = sadd.s32 1, %s37
      %p43 = scmp.ge.s32.totalorder %s42, 1
      %s44 = scalar_select %p43, 0, %s42
      %s45 = sadd.s32 1, %s36
      %s46 = scalar_select %p43, %s45, %s36
      %p47 = scmp.ge.s32.totalorder %s46, 2
      %s48 = scalar_select %p47, 0, %s46
      %s49 = ssub.s32 %s36, %s48
      %s50 = ssub.s32 %s37, %s44
      %s51 = sor.u32 %s49, %s50
      %p52 = scmp.eq.s32.totalorder %s51, 0
      %s54 = sadd.s32 %s53, 1
      %s55 = scalar_select %p52, %s53, %s54
      %p58 = pneg %p52
      %p59 = scmp.eq.s32.totalorder %s29, 1
      %p60 = por %p58, %p59
      %p61 = scmp.ne.s32.totalorder %s53, %s56
      %p62 = scmp.eq.s32.totalorder %s29, 0
      %p63 = por %p61, %p62
      %p64 = scmp.ne.s32.totalorder %s53, %s56
      %p65 = scmp.eq.s32.totalorder %s34, 1
      %p66 = por %p64, %p65
      %p67 = scmp.ne.s32.totalorder %s56, %s57
      %p68 = scmp.eq.s32.totalorder %s34, 0
      %p69 = por %p67, %p68
      %p70 = scmp.ne.s32.totalorder %s56, %s57
      %p71 = scmp.eq.s32.totalorder %s35, 1
      %p72 = por %p70, %p71
      %p74 = scmp.ne.s32.totalorder %s57, %s73
      %p75 = scmp.eq.s32.totalorder %s35, 0
      %p76 = por %p74, %p75
      %s77 = ssub.s32 %s36, %s48
      %p78 = scmp.eq.s32.totalorder %s77, 0
      %s80 = sadd.s32 %s79, 1
      %s81 = scalar_select %p78, %s79, %s80
      %p84 = pneg %p78
      %p85 = scmp.eq.s32.totalorder %s29, 1
      %p86 = por %p84, %p85
      %p87 = scmp.ne.s32.totalorder %s79, %s82
      %p88 = scmp.eq.s32.totalorder %s29, 0
      %p89 = por %p87, %p88
      %p90 = scmp.ne.s32.totalorder %s79, %s82
      %p91 = scmp.eq.s32.totalorder %s34, 1
      %p92 = por %p90, %p91
      %p93 = scmp.ne.s32.totalorder %s82, %s83
      %p94 = scmp.eq.s32.totalorder %s34, 0
      %p95 = por %p93, %p94
      %p96 = scmp.ne.s32.totalorder %s82, %s83
      %p97 = scmp.eq.s32.totalorder %s35, 1
      %p98 = por %p96, %p97
      %p100 = scmp.ne.s32.totalorder %s83, %s99
      %p101 = scmp.eq.s32.totalorder %s35, 0
      %p102 = por %p100, %p101
      %s104 = sadd.s32 %s103, 1
      %p107 = scmp.eq.s32.totalorder %s29, 1
      %p108 = scmp.ne.s32.totalorder %s103, %s105
      %p109 = scmp.eq.s32.totalorder %s29, 0
      %p110 = por %p108, %p109
      %p111 = scmp.ne.s32.totalorder %s103, %s105
      %p112 = scmp.eq.s32.totalorder %s34, 1
      %p113 = por %p111, %p112
      %p114 = scmp.ne.s32.totalorder %s105, %s106
      %p115 = scmp.eq.s32.totalorder %s34, 0
      %p116 = por %p114, %p115
      %p117 = scmp.ne.s32.totalorder %s105, %s106
      %p118 = scmp.eq.s32.totalorder %s35, 1
      %p119 = por %p117, %p118
      %p121 = scmp.ne.s32.totalorder %s106, %s120
      %p122 = scmp.eq.s32.totalorder %s35, 0
      %p123 = por %p121, %p122
      %s125 = sadd.s32 %s124, 1
      %p128 = scmp.eq.s32.totalorder %s29, 1
      %p129 = scmp.ne.s32.totalorder %s124, %s126
      %p130 = scmp.eq.s32.totalorder %s29, 0
      %p131 = por %p129, %p130
      %p132 = scmp.ne.s32.totalorder %s124, %s126
      %p133 = scmp.eq.s32.totalorder %s34, 1
      %p134 = por %p132, %p133
      %p135 = scmp.ne.s32.totalorder %s126, %s127
      %p136 = scmp.eq.s32.totalorder %s34, 0
      %p137 = por %p135, %p136
      %p138 = scmp.ne.s32.totalorder %s126, %s127
      %p139 = scmp.eq.s32.totalorder %s35, 1
      %p140 = por %p138, %p139
      %p142 = scmp.ne.s32.totalorder %s127, %s141
      %p143 = scmp.eq.s32.totalorder %s35, 0
      %p144 = por %p142, %p143
      %s146 = sadd.s32 %s145, 1
      %p149 = scmp.eq.s32.totalorder %s29, 1
      %p150 = scmp.ne.s32.totalorder %s145, %s147
      %p151 = scmp.eq.s32.totalorder %s29, 0
      %p152 = por %p150, %p151
      %p153 = scmp.ne.s32.totalorder %s145, %s147
      %p154 = scmp.eq.s32.totalorder %s34, 1
      %p155 = por %p153, %p154
      %p156 = scmp.ne.s32.totalorder %s147, %s148
      %p157 = scmp.eq.s32.totalorder %s34, 0
      %p158 = por %p156, %p157
      %p159 = scmp.ne.s32.totalorder %s147, %s148
      %p160 = scmp.eq.s32.totalorder %s35, 1
      %p161 = por %p159, %p160
      %p163 = scmp.ne.s32.totalorder %s148, %s162
      %p164 = scmp.eq.s32.totalorder %s35, 0
      %p165 = por %p163, %p164
      %s167 = sadd.s32 %s166, 1
      %p170 = scmp.eq.s32.totalorder %s29, 1
      %p171 = scmp.ne.s32.totalorder %s166, %s168
      %p172 = scmp.eq.s32.totalorder %s29, 0
      %p173 = por %p171, %p172
      %p174 = scmp.ne.s32.totalorder %s166, %s168
      %p175 = scmp.eq.s32.totalorder %s34, 1
      %p176 = por %p174, %p175
      %p177 = scmp.ne.s32.totalorder %s168, %s169
      %p178 = scmp.eq.s32.totalorder %s34, 0
      %p179 = por %p177, %p178
      %p180 = scmp.ne.s32.totalorder %s168, %s169
      %p181 = scmp.eq.s32.totalorder %s35, 1
      %p182 = por %p180, %p181
      %p184 = scmp.ne.s32.totalorder %s169, %s183
      %p185 = scmp.eq.s32.totalorder %s35, 0
      %p186 = por %p184, %p185
      %s188 = sadd.s32 %s187, 1
      %p191 = scmp.eq.s32.totalorder %s29, 1
      %p192 = scmp.ne.s32.totalorder %s187, %s189
      %p193 = scmp.eq.s32.totalorder %s29, 0
      %p194 = por %p192, %p193
      %p195 = scmp.ne.s32.totalorder %s187, %s189
      %p196 = scmp.eq.s32.totalorder %s34, 1
      %p197 = por %p195, %p196
      %p198 = scmp.ne.s32.totalorder %s189, %s190
      %p199 = scmp.eq.s32.totalorder %s34, 0
      %p200 = por %p198, %p199
      %p201 = scmp.ne.s32.totalorder %s189, %s190
      %p202 = scmp.eq.s32.totalorder %s35, 1
      %p203 = por %p201, %p202
      %p205 = scmp.ne.s32.totalorder %s190, %s204
      %p206 = scmp.eq.s32.totalorder %s35, 0
      %p207 = por %p205, %p206
      %s209 = sadd.s32 %s208, 1
      %p212 = scmp.eq.s32.totalorder %s29, 1
      %p213 = scmp.ne.s32.totalorder %s208, %s210
      %p214 = scmp.eq.s32.totalorder %s29, 0
      %p215 = por %p213, %p214
      %p216 = scmp.ne.s32.totalorder %s208, %s210
      %p217 = scmp.eq.s32.totalorder %s34, 1
      %p218 = por %p216, %p217
      %p219 = scmp.ne.s32.totalorder %s210, %s211
      %p220 = scmp.eq.s32.totalorder %s34, 0
      %p221 = por %p219, %p220
      %p222 = scmp.ne.s32.totalorder %s210, %s211
      %p223 = scmp.eq.s32.totalorder %s35, 1
      %p224 = por %p222, %p223
      %p226 = scmp.ne.s32.totalorder %s211, %s225
      %p227 = scmp.eq.s32.totalorder %s35, 0
      %p228 = por %p226, %p227
      %s230 = sadd.s32 %s229, 1
      %p233 = scmp.eq.s32.totalorder %s29, 1
      %p234 = scmp.ne.s32.totalorder %s229, %s231
      %p235 = scmp.eq.s32.totalorder %s29, 0
      %p236 = por %p234, %p235
      %p237 = scmp.ne.s32.totalorder %s229, %s231
      %p238 = scmp.eq.s32.totalorder %s34, 1
      %p239 = por %p237, %p238
      %p240 = scmp.ne.s32.totalorder %s231, %s232
      %p241 = scmp.eq.s32.totalorder %s34, 0
      %p242 = por %p240, %p241
      %p243 = scmp.ne.s32.totalorder %s231, %s232
      %p244 = scmp.eq.s32.totalorder %s35, 1
      %p245 = por %p243, %p244
      %p247 = scmp.ne.s32.totalorder %s232, %s246
      %p248 = scmp.eq.s32.totalorder %s35, 0
      %p249 = por %p247, %p248
      %s251 = sadd.s32 %s250, 1
      %p254 = scmp.eq.s32.totalorder %s29, 1
      %p255 = scmp.ne.s32.totalorder %s250, %s252
      %p256 = scmp.eq.s32.totalorder %s29, 0
      %p257 = por %p255, %p256
      %p258 = scmp.ne.s32.totalorder %s250, %s252
      %p259 = scmp.eq.s32.totalorder %s34, 1
      %p260 = por %p258, %p259
      %p261 = scmp.ne.s32.totalorder %s252, %s253
      %p262 = scmp.eq.s32.totalorder %s34, 0
      %p263 = por %p261, %p262
      %p264 = scmp.ne.s32.totalorder %s252, %s253
      %p265 = scmp.eq.s32.totalorder %s35, 1
      %p266 = por %p264, %p265
      %p268 = scmp.ne.s32.totalorder %s253, %s267
      %p269 = scmp.eq.s32.totalorder %s35, 0
      %p270 = por %p268, %p269
      %s271 = ssub.s32 %s36, %s48
      %s272 = ssub.s32 %s37, %s44
      %s273 = sor.u32 %s271, %s272
      %p274 = scmp.eq.s32.totalorder %s273, 0
      %s276 = sadd.s32 %s275, 1
      %s277 = scalar_select %p274, %s275, %s276
      %p280 = pneg %p274
      %p281 = scmp.eq.s32.totalorder %s29, 1
      %p282 = por %p280, %p281
      %p283 = scmp.ne.s32.totalorder %s275, %s278
      %p284 = scmp.eq.s32.totalorder %s29, 0
      %p285 = por %p283, %p284
      %p286 = scmp.ne.s32.totalorder %s275, %s278
      %p287 = scmp.eq.s32.totalorder %s34, 1
      %p288 = por %p286, %p287
      %p289 = scmp.ne.s32.totalorder %s278, %s279
      %p290 = scmp.eq.s32.totalorder %s34, 0
      %p291 = por %p289, %p290
      %p292 = scmp.ne.s32.totalorder %s278, %s279
      %p293 = scmp.eq.s32.totalorder %s35, 1
      %p294 = por %p292, %p293
      %p296 = scmp.ne.s32.totalorder %s279, %s295
      %p297 = scmp.eq.s32.totalorder %s35, 0
      %p298 = por %p296, %p297
      %p299 = scmp.le.s32.totalorder 1, %s29
      %p300 = scmp.lt.s32.totalorder %s29, 3
      %p301 = pnand %p299, %p300
      %p302 = pneg %p301
      // Predicated region
      $region9: #{tpu_custom_call.1} parent=5 // pred_check
        _
      $region10: #{tpu_custom_call.1} parent=5 // pred_check_branch
        %304 = sbr.rel (%p301) target = $region12
      $region11: #{tpu_custom_call.1} parent=5 // pred_region
        %s305 = ssub.s32 %s29, 1
        // Predicated region
        $region13: #{tpu_custom_call.1} parent=11 // pred_check
          %p306 = pneg %p116
        $region14: #{tpu_custom_call.1} parent=11 // pred_check_branch
          %308 = sbr.rel (%p306) target = $region16
        $region15: #{tpu_custom_call.1} parent=11 // pred_region
          %s310 = ssub.s32 256, 256
          %311 = vsyncadd [#allocation8], %s310
          %s312 = sshll.u32 [#allocation9], 4
          %s313 = int_to_ptr.vmem [resolvable:$true] %s312
          %318 = dma.hbm_to_vmem [thread:$0]  %s2, 256, %s313, [#allocation8], 64, 64, 4
        $region16: #{tpu_custom_call.1} parent=11 // pred_fallthru
          _
        // Predicated region
        $region17: #{tpu_custom_call.1} parent=11 // pred_check
          %p319 = pneg %p137
        $region18: #{tpu_custom_call.1} parent=11 // pred_check_branch
          %321 = sbr.rel (%p319) target = $region20
        $region19: #{tpu_custom_call.1} parent=11 // pred_region
          %s323 = ssub.s32 256, 256
          %324 = vsyncadd [#allocation11], %s323
          %s325 = sshll.u32 [#allocation10], 4
          %s326 = int_to_ptr.vmem [resolvable:$true] %s325
          %331 = dma.hbm_to_vmem [thread:$0]  %s3, 256, %s326, [#allocation11], 64, 64, 4
        $region20: #{tpu_custom_call.1} parent=11 // pred_fallthru
          _
        // Predicated region
        $region21: #{tpu_custom_call.1} parent=11 // pred_check
          %p332 = pneg %p158
        $region22: #{tpu_custom_call.1} parent=11 // pred_check_branch
          %334 = sbr.rel (%p332) target = $region24
        $region23: #{tpu_custom_call.1} parent=11 // pred_region
          %s336 = ssub.s32 256, 256
          %337 = vsyncadd [#allocation11], %s336
          %s338 = sshll.u32 [#allocation12], 4
          %s339 = int_to_ptr.vmem [resolvable:$true] %s338
          %344 = dma.hbm_to_vmem [thread:$0]  %s4, 256, %s339, [#allocation11], 64, 64, 4
        $region24: #{tpu_custom_call.1} parent=11 // pred_fallthru
          _
        // Predicated region
        $region25: #{tpu_custom_call.1} parent=11 // pred_check
          %p345 = pneg %p179
        $region26: #{tpu_custom_call.1} parent=11 // pred_check_branch
          %347 = sbr.rel (%p345) target = $region28
        $region27: #{tpu_custom_call.1} parent=11 // pred_region
          %s349 = ssub.s32 256, 256
          %350 = vsyncadd [#allocation14], %s349
          %s351 = sshll.u32 [#allocation13], 4
          %s352 = int_to_ptr.vmem [resolvable:$true] %s351
          %357 = dma.hbm_to_vmem [thread:$0]  %s5, 256, %s352, [#allocation14], 64, 64, 4
        $region28: #{tpu_custom_call.1} parent=11 // pred_fallthru
          _
        // Predicated region
        $region29: #{tpu_custom_call.1} parent=11 // pred_check
          %p358 = pneg %p200
        $region30: #{tpu_custom_call.1} parent=11 // pred_check_branch
          %360 = sbr.rel (%p358) target = $region32
        $region31: #{tpu_custom_call.1} parent=11 // pred_region
          %s362 = ssub.s32 256, 256
          %363 = vsyncadd [#allocation14], %s362
          %s364 = sshll.u32 [#allocation15], 4
          %s365 = int_to_ptr.vmem [resolvable:$true] %s364
          %370 = dma.hbm_to_vmem [thread:$0]  %s6, 256, %s365, [#allocation14], 64, 64, 4
        $region32: #{tpu_custom_call.1} parent=11 // pred_fallthru
          _
        // Predicated region
        $region33: #{tpu_custom_call.1} parent=11 // pred_check
          %p371 = pneg %p221
        $region34: #{tpu_custom_call.1} parent=11 // pred_check_branch
          %373 = sbr.rel (%p371) target = $region36
        $region35: #{tpu_custom_call.1} parent=11 // pred_region
          %s375 = ssub.s32 16, 16
          %376 = vsyncadd [#allocation17], %s375
          %s378 = sshll.u32 [#allocation16], 4
          %s379 = int_to_ptr.vmem [resolvable:$true] %s378
          %381 = dma.hbm_to_vmem [thread:$0]  %s7, 16, %s379, [#allocation17]
        $region36: #{tpu_custom_call.1} parent=11 // pred_fallthru
          _
        // Predicated region
        $region37: #{tpu_custom_call.1} parent=11 // pred_check
          %p382 = pneg %p242
        $region38: #{tpu_custom_call.1} parent=11 // pred_check_branch
          %384 = sbr.rel (%p382) target = $region40
        $region39: #{tpu_custom_call.1} parent=11 // pred_region
          %s386 = ssub.s32 1024, 1024
          %387 = vsyncadd [#allocation17], %s386
          %s388 = sshll.u32 [#allocation18], 4
          %s389 = int_to_ptr.vmem [resolvable:$true] %s388
          %394 = dma.hbm_to_vmem [thread:$0]  %s8, 1024, %s389, [#allocation17], 64, 64, 4
        $region40: #{tpu_custom_call.1} parent=11 // pred_fallthru
          _
        // Predicated region
        $region41: #{tpu_custom_call.1} parent=11 // pred_check
          %p395 = pneg %p263
        $region42: #{tpu_custom_call.1} parent=11 // pred_check_branch
          %397 = sbr.rel (%p395) target = $region44
        $region43: #{tpu_custom_call.1} parent=11 // pred_region
          %s399 = ssub.s32 256, 256
          %400 = vsyncadd [#allocation20], %s399
          %s401 = sshll.u32 [#allocation19], 4
          %s402 = int_to_ptr.vmem [resolvable:$true] %s401
          %407 = dma.hbm_to_vmem [thread:$0]  %s9, 256, %s402, [#allocation20], 128, 128, 8
        $region44: #{tpu_custom_call.1} parent=11 // pred_fallthru
          _
      $region12: #{tpu_custom_call.1} parent=5 // pred_fallthru
        _
      %p408 = scmp.lt.s32.totalorder %s29, 2
      // Predicated region
      $region45: #{tpu_custom_call.1} parent=5 // pred_check
        %p409 = pneg %p408
      $region46: #{tpu_custom_call.1} parent=5 // pred_check_branch
        %411 = sbr.rel (%p409) target = $region48
      $region47: #{tpu_custom_call.1} parent=5 // pred_region
        // Predicated region
        $region49: #{tpu_custom_call.1} parent=47 // pred_check
          %p412 = pneg %p63
        $region50: #{tpu_custom_call.1} parent=47 // pred_check_branch
          %414 = sbr.rel (%p412) target = $region52
        $region51: #{tpu_custom_call.1} parent=47 // pred_region
          %s415 = sand.u32 %s53, 1
          %s416 = scalar_lea.sflag [#allocation5], %s415
          %s417 = sand.u32 %s53, 1
          %s418 = smul.addr %s417, 8
          %s419 = scalar_lea.vmem [#allocation4], %s418
          %s421 = ssub.s32 128, 128
          %422 = vsyncadd %s416, %s421
          %s423 = sadd.s32 %s37, %s36
          %s424 = smul.addr %s423, 128
          %s425 = scalar_lea.hbm %s0, %s424
          %s427 = sshll.u32 %s419, 4
          %s428 = int_to_ptr.vmem [resolvable:$true] %s427
          %430 = dma.hbm_to_vmem [thread:$0]  %s425, 128, %s428, %s416
        $region52: #{tpu_custom_call.1} parent=47 // pred_fallthru
          _
        // Predicated region
        $region53: #{tpu_custom_call.1} parent=47 // pred_check
          %p431 = pneg %p89
        $region54: #{tpu_custom_call.1} parent=47 // pred_check_branch
          %433 = sbr.rel (%p431) target = $region56
        $region55: #{tpu_custom_call.1} parent=47 // pred_region
          %s434 = sand.u32 %s29, 1
          %s435 = scalar_lea.sflag [#allocation8], %s434
          %s436 = sand.u32 %s79, 1
          %s437 = smul.addr %s436, 4
          %s438 = scalar_lea.vmem [#allocation7], %s437
          %s440 = ssub.s32 64, 64
          %441 = vsyncadd %s435, %s440
          %s442 = smul.addr %s36, 64
          %s443 = scalar_lea.hbm %s1, %s442
          %s445 = sshll.u32 %s438, 4
          %s446 = int_to_ptr.vmem [resolvable:$true] %s445
          %448 = dma.hbm_to_vmem [thread:$0]  %s443, 64, %s446, %s435
        $region56: #{tpu_custom_call.1} parent=47 // pred_fallthru
          _
      $region48: #{tpu_custom_call.1} parent=5 // pred_fallthru
        _
      %p449 = scmp.le.s32.totalorder 1, %s29
      %p450 = scmp.lt.s32.totalorder %s29, 3
      %p451 = pnand %p449, %p450
      %p452 = pneg %p451
      // Predicated region
      $region57: #{tpu_custom_call.1} parent=5 // pred_check
        _
      $region58: #{tpu_custom_call.1} parent=5 // pred_check_branch
        %454 = sbr.rel (%p451) target = $region60
      $region59: #{tpu_custom_call.1} parent=5 // pred_region
        %s455 = ssub.s32 %s29, 1
        %s456 = sand.u32 %s56, 1
        %s457 = scalar_lea.sflag [#allocation5], %s456
        %s458 = sand.u32 %s56, 1
        %s459 = smul.addr %s458, 8
        %s460 = scalar_lea.vmem [#allocation4], %s459
        // Predicated region
        $region61: #{tpu_custom_call.1} parent=59 // pred_check
          %p461 = pneg %p69
        $region62: #{tpu_custom_call.1} parent=59 // pred_check_branch
          %463 = sbr.rel (%p461) target = $region64
        $region63: #{tpu_custom_call.1} parent=59 // pred_region
          %464 = dma.done %s457, 128
        $region64: #{tpu_custom_call.1} parent=59 // pred_fallthru
          _
        %s465 = sand.u32 %s34, 1
        %s466 = scalar_lea.sflag [#allocation8], %s465
        %s467 = sand.u32 %s82, 1
        %s468 = smul.addr %s467, 4
        %s469 = scalar_lea.vmem [#allocation7], %s468
        // Predicated region
        $region65: #{tpu_custom_call.1} parent=59 // pred_check
          %p470 = pneg %p95
        $region66: #{tpu_custom_call.1} parent=59 // pred_check_branch
          %472 = sbr.rel (%p470) target = $region68
        $region67: #{tpu_custom_call.1} parent=59 // pred_region
          %473 = dma.done %s466, 64
        $region68: #{tpu_custom_call.1} parent=59 // pred_fallthru
          _
        // Predicated region
        $region69: #{tpu_custom_call.1} parent=59 // pred_check
          %p474 = pneg %p116
        $region70: #{tpu_custom_call.1} parent=59 // pred_check_branch
          %476 = sbr.rel (%p474) target = $region72
        $region71: #{tpu_custom_call.1} parent=59 // pred_region
          %477 = dma.done [#allocation8], 256
        $region72: #{tpu_custom_call.1} parent=59 // pred_fallthru
          _
        // Predicated region
        $region73: #{tpu_custom_call.1} parent=59 // pred_check
          %p478 = pneg %p137
        $region74: #{tpu_custom_call.1} parent=59 // pred_check_branch
          %480 = sbr.rel (%p478) target = $region76
        $region75: #{tpu_custom_call.1} parent=59 // pred_region
          %481 = dma.done [#allocation11], 256
        $region76: #{tpu_custom_call.1} parent=59 // pred_fallthru
          _
        // Predicated region
        $region77: #{tpu_custom_call.1} parent=59 // pred_check
          %p482 = pneg %p158
        $region78: #{tpu_custom_call.1} parent=59 // pred_check_branch
          %484 = sbr.rel (%p482) target = $region80
        $region79: #{tpu_custom_call.1} parent=59 // pred_region
          %485 = dma.done [#allocation11], 256
        $region80: #{tpu_custom_call.1} parent=59 // pred_fallthru
          _
        // Predicated region
        $region81: #{tpu_custom_call.1} parent=59 // pred_check
          %p486 = pneg %p179
        $region82: #{tpu_custom_call.1} parent=59 // pred_check_branch
          %488 = sbr.rel (%p486) target = $region84
        $region83: #{tpu_custom_call.1} parent=59 // pred_region
          %489 = dma.done [#allocation14], 256
        $region84: #{tpu_custom_call.1} parent=59 // pred_fallthru
          _
        // Predicated region
        $region85: #{tpu_custom_call.1} parent=59 // pred_check
          %p490 = pneg %p200
        $region86: #{tpu_custom_call.1} parent=59 // pred_check_branch
          %492 = sbr.rel (%p490) target = $region88
        $region87: #{tpu_custom_call.1} parent=59 // pred_region
          %493 = dma.done [#allocation14], 256
        $region88: #{tpu_custom_call.1} parent=59 // pred_fallthru
          _
        // Predicated region
        $region89: #{tpu_custom_call.1} parent=59 // pred_check
          %p494 = pneg %p221
        $region90: #{tpu_custom_call.1} parent=59 // pred_check_branch
          %496 = sbr.rel (%p494) target = $region92
        $region91: #{tpu_custom_call.1} parent=59 // pred_region
          %497 = dma.done [#allocation17], 16
        $region92: #{tpu_custom_call.1} parent=59 // pred_fallthru
          _
        // Predicated region
        $region93: #{tpu_custom_call.1} parent=59 // pred_check
          %p498 = pneg %p242
        $region94: #{tpu_custom_call.1} parent=59 // pred_check_branch
          %500 = sbr.rel (%p498) target = $region96
        $region95: #{tpu_custom_call.1} parent=59 // pred_region
          %501 = dma.done [#allocation17], 1024
        $region96: #{tpu_custom_call.1} parent=59 // pred_fallthru
          _
        // Predicated region
        $region97: #{tpu_custom_call.1} parent=59 // pred_check
          %p502 = pneg %p263
        $region98: #{tpu_custom_call.1} parent=59 // pred_check_branch
          %504 = sbr.rel (%p502) target = $region100
        $region99: #{tpu_custom_call.1} parent=59 // pred_region
          %505 = dma.done [#allocation20], 256
        $region100: #{tpu_custom_call.1} parent=59 // pred_fallthru
          _
        %s506 = sand.u32 %s56, 1
        %s507 = scalar_lea.sflag [#allocation5], %s506
        %s508 = sand.u32 %s56, 1
        %s509 = smul.addr %s508, 8
        %s510 = scalar_lea.vmem [#allocation4], %s509
        %p511 = pneg %p69
        %p512 = pneg %p66
        %s513 = sand.u32 %s34, 1
        %s514 = scalar_lea.sflag [#allocation8], %s513
        %s515 = sand.u32 %s82, 1
        %s516 = smul.addr %s515, 4
        %s517 = scalar_lea.vmem [#allocation7], %s516
        %p518 = pneg %p95
        %p519 = pneg %p92
        %p520 = pneg %p116
        %p521 = pneg %p113
        %p522 = pneg %p137
        %p523 = pneg %p134
        %p524 = pneg %p158
        %p525 = pneg %p155
        %p526 = pneg %p179
        %p527 = pneg %p176
        %p528 = pneg %p200
        %p529 = pneg %p197
        %p530 = pneg %p221
        %p531 = pneg %p218
        %p532 = pneg %p242
        %p533 = pneg %p239
        %p534 = pneg %p263
        %p535 = pneg %p260
        %p536 = pneg %p291
        %p537 = pneg %p288
        %s538 = sand.u32 %s278, 1
        %s539 = scalar_lea.sflag [#allocation6], %s538
        %s540 = sand.u32 %s278, 1
        %s541 = smul.addr %s540, 8
        %s542 = scalar_lea.vmem [#allocation21], %s541
        %v544 = vld [vmem:[#allocation19] sm:$0xff]
        %v545 = vld [vmem:[#allocation19 + $0x8] sm:$0x1]
        %p546 = scmp.eq.s32.totalorder %s39, 0
        // Predicated region
        $region101: #{tpu_custom_call.1} parent=59 // pred_check
          %p547 = pneg %p546
        $region102: #{tpu_custom_call.1} parent=59 // pred_check_branch
          %549 = sbr.rel (%p547) target = $region104
        $region103: #{tpu_custom_call.1} parent=59 // pred_region
          %v550 = vld [vmem:[%s469] sm:$0xf]
          %v551 = vld [vmem:[#allocation10] sm:$0xf]
          %v552 = vld [vmem:[#allocation10 + $0x4] sm:$0xf]
          %v553 = vld [vmem:[#allocation10 + $0x8] sm:$0xf]
          %v554 = vld [vmem:[#allocation10 + $0xc] sm:$0xf]
          %v555 = vlaneseq
          %v556 = vshrl.u32 %v555, 7
          %v557 = vsub.s32 1, %v556
          %v558 = vrot.slane %v544, %v557
          %v563 = vunpack.c.l.b16 %v551
          %v564 = vunpack.c.l.b16 %v552
          %v565 = vunpack.c.l.b16 %v553
          %v566 = vunpack.c.l.b16 %v554
          %v567 = vpack.c.b16 %v564, %v563
          %v568 = vpack.c.b16 %v566, %v565
          %vm571 = vcmask 261120
          %v573 = vsel %vm571, %v550, 0
          %575 = vmatprep.subr.bf16.mxu0 0
          %576 = vmatpush1.bf16.msra.mxu0 %v567
          %577 = vmatprep.subr.bf16.mxu0 0
          %578 = vmatpush1.bf16.msra.mxu0 %v568
          %579 = vmatprep.subr.bf16.mxu0 0
          %580 = vmatpush1.bf16.msra.mxu0 0
          %581 = vmatprep.subr.bf16.mxu0 0
          %582 = vmatpush1.bf16.msra.mxu0 0
          %583 = vmatprep.subr.bf16.mxu0 0
          %584 = vmatpush1.bf16.msra.mxu0 0
          %585 = vmatprep.subr.bf16.mxu0 0
          %586 = vmatpush1.bf16.msra.mxu0 0
          %587 = vmatprep.subr.bf16.mxu0 0
          %588 = vmatpush1.bf16.msra.mxu0 0
          %589 = vmatprep.subr.bf16.mxu0 0
          %590 = vmatpush1.bf16.msra.mxu0 0
          %591 = vmatprep.subr.bf16.mxu0 0
          %592 = vmatpush1.bf16.msra.mxu0 0
          %593 = vmatprep.subr.bf16.mxu0 0
          %594 = vmatpush1.bf16.msra.mxu0 0
          %595 = vmatprep.subr.bf16.mxu0 0
          %596 = vmatpush1.bf16.msra.mxu0 0
          %597 = vmatprep.subr.bf16.mxu0 0
          %598 = vmatpush1.bf16.msra.mxu0 0
          %599 = vmatprep.subr.bf16.mxu0 0
          %600 = vmatpush1.bf16.msra.mxu0 0
          %601 = vmatprep.subr.bf16.mxu0 0
          %602 = vmatpush1.bf16.msra.mxu0 0
          %603 = vmatprep.subr.bf16.mxu0 0
          %604 = vmatpush1.bf16.msra.mxu0 0
          %605 = vmatprep.subr.bf16.mxu0 0
          %606 = vmatpush1.bf16.msra.mxu0 0
          %607 = vmatprep.mubr.bf16.mxu0 0
          %608 = vmatmul.mubr.bf16.gmra.mrb[0].mxu0 %v573
          %v609 = vpop.f32.mrb[0].mxu0
          %v610 = vadd.f32 %v558, %v609
          %v611 = vpop.f32.mrb[0].mxu0
          %v612 = vpop.f32.mrb[0].mxu0
          %v613 = vpop.f32.mrb[0].mxu0
          %614 = vdwg.mxu0
          %v615 = vpack.c.bf16 %v610, %v610
          %v616 = vld [vmem:[#allocation12] sm:$0xf]
          %v617 = vld [vmem:[#allocation12 + $0x4] sm:$0xf]
          %v618 = vld [vmem:[#allocation12 + $0x8] sm:$0xf]
          %v619 = vld [vmem:[#allocation12 + $0xc] sm:$0xf]
          %v620 = vlaneseq
          %v621 = vshrl.u32 %v620, 7
          %v622 = vsub.s32 2, %v621
          %v623 = vrot.slane %v544, %v622
          %v628 = vunpack.c.l.b16 %v616
          %v629 = vunpack.c.l.b16 %v617
          %v630 = vunpack.c.l.b16 %v618
          %v631 = vunpack.c.l.b16 %v619
          %v632 = vpack.c.b16 %v629, %v628
          %v633 = vpack.c.b16 %v631, %v630
          %636 = vmatprep.subr.bf16.mxu0 0
          %637 = vmatpush1.bf16.msra.mxu0 %v632
          %638 = vmatprep.subr.bf16.mxu0 0
          %639 = vmatpush1.bf16.msra.mxu0 %v633
          %640 = vmatprep.subr.bf16.mxu0 0
          %641 = vmatpush1.bf16.msra.mxu0 0
          %642 = vmatprep.subr.bf16.mxu0 0
          %643 = vmatpush1.bf16.msra.mxu0 0
          %644 = vmatprep.subr.bf16.mxu0 0
          %645 = vmatpush1.bf16.msra.mxu0 0
          %646 = vmatprep.subr.bf16.mxu0 0
          %647 = vmatpush1.bf16.msra.mxu0 0
          %648 = vmatprep.subr.bf16.mxu0 0
          %649 = vmatpush1.bf16.msra.mxu0 0
          %650 = vmatprep.subr.bf16.mxu0 0
          %651 = vmatpush1.bf16.msra.mxu0 0
          %652 = vmatprep.subr.bf16.mxu0 0
          %653 = vmatpush1.bf16.msra.mxu0 0
          %654 = vmatprep.subr.bf16.mxu0 0
          %655 = vmatpush1.bf16.msra.mxu0 0
          %656 = vmatprep.subr.bf16.mxu0 0
          %657 = vmatpush1.bf16.msra.mxu0 0
          %658 = vmatprep.subr.bf16.mxu0 0
          %659 = vmatpush1.bf16.msra.mxu0 0
          %660 = vmatprep.subr.bf16.mxu0 0
          %661 = vmatpush1.bf16.msra.mxu0 0
          %662 = vmatprep.subr.bf16.mxu0 0
          %663 = vmatpush1.bf16.msra.mxu0 0
          %664 = vmatprep.subr.bf16.mxu0 0
          %665 = vmatpush1.bf16.msra.mxu0 0
          %666 = vmatprep.subr.bf16.mxu0 0
          %667 = vmatpush1.bf16.msra.mxu0 0
          %668 = vmatprep.mubr.bf16.mxu0 0
          %669 = vmatmul.mubr.bf16.gmra.mrb[0].mxu0 %v573
          %v670 = vpop.f32.mrb[0].mxu0
          %v671 = vadd.f32 %v623, %v670
          %v672 = vpop.f32.mrb[0].mxu0
          %v673 = vpop.f32.mrb[0].mxu0
          %v674 = vpop.f32.mrb[0].mxu0
          %675 = vdwg.mxu0
          %v676 = vpack.c.bf16 %v671, %v671
          %vm677 = vcmask 60416
          %678 = vst.msk [vmem:[#allocation2] sm:$0xf] %vm677, %v615
          %679 = vst.msk [vmem:[#allocation3] sm:$0xf] %vm677, %v676
          %v681 = vunpack.c.l.b16 %v615
          %v682 = vpack.c.b16 %v681, %v681
          %683 = vrot.lane.b32.xlu0 %v682, 120
          %v684 = vpop.permute.xlu0 %683
          %s686 = scalar_lea.vmem [#allocation2], 4
          %687 = vst.msk [vmem:[%s686] sm:$0xf] %vm677, %v684
          %v689 = vunpack.c.l.b16 %v676
          %v690 = vpack.c.b16 %v689, %v689
          %691 = vrot.lane.b32.xlu0 %v690, 120
          %v692 = vpop.permute.xlu0 %691
          %s694 = scalar_lea.vmem [#allocation3], 4
          %695 = vst.msk [vmem:[%s694] sm:$0xf] %vm677, %v692
          %696 = vrot.lane.b32.xlu0 %v682, 112
          %v697 = vpop.permute.xlu0 %696
          %s699 = scalar_lea.vmem [#allocation2], 8
          %700 = vst.msk [vmem:[%s699] sm:$0xf] %vm677, %v697
          %701 = vrot.lane.b32.xlu0 %v690, 112
          %v702 = vpop.permute.xlu0 %701
          %s704 = scalar_lea.vmem [#allocation3], 8
          %705 = vst.msk [vmem:[%s704] sm:$0xf] %vm677, %v702
          %706 = vrot.lane.b32.xlu0 %v682, 104
          %v707 = vpop.permute.xlu0 %706
          %s709 = scalar_lea.vmem [#allocation2], 12
          %710 = vst.msk [vmem:[%s709] sm:$0xf] %vm677, %v707
          %711 = vrot.lane.b32.xlu0 %v690, 104
          %v712 = vpop.permute.xlu0 %711
          %s714 = scalar_lea.vmem [#allocation3], 12
          %715 = vst.msk [vmem:[%s714] sm:$0xf] %vm677, %v712
        $region104: #{tpu_custom_call.1} parent=59 // pred_fallthru
          _
        %v716 = vld [vmem:[%s460] sm:$0xff]
        %v717 = vpack.c.bf16 %v716, %v716
        %v718 = vld [vmem:[#allocation9] sm:$0xf]
        %v719 = vld [vmem:[#allocation9 + $0x4] sm:$0xf]
        %v720 = vld [vmem:[#allocation9 + $0x8] sm:$0xf]
        %v721 = vld [vmem:[#allocation9 + $0xc] sm:$0xf]
        %v722 = vlaneseq
        %v723 = vshrl.u32 %v722, 7
        %v724 = vsub.s32 0, %v723
        %v725 = vrot.slane %v544, %v724
        %v730 = vunpack.c.l.b16 %v718
        %v731 = vunpack.c.l.b16 %v719
        %v732 = vunpack.c.l.b16 %v720
        %v733 = vunpack.c.l.b16 %v721
        %v734 = vpack.c.b16 %v731, %v730
        %v735 = vpack.c.b16 %v733, %v732
        %vm738 = vcmask 261120
        %v740 = vsel %vm738, %v717, 0
        %742 = vmatprep.subr.bf16.mxu0 0
        %743 = vmatpush1.bf16.msra.mxu0 %v734
        %744 = vmatprep.subr.bf16.mxu0 0
        %745 = vmatpush1.bf16.msra.mxu0 %v735
        %746 = vmatprep.subr.bf16.mxu0 0
        %747 = vmatpush1.bf16.msra.mxu0 0
        %748 = vmatprep.subr.bf16.mxu0 0
        %749 = vmatpush1.bf16.msra.mxu0 0
        %750 = vmatprep.subr.bf16.mxu0 0
        %751 = vmatpush1.bf16.msra.mxu0 0
        %752 = vmatprep.subr.bf16.mxu0 0
        %753 = vmatpush1.bf16.msra.mxu0 0
        %754 = vmatprep.subr.bf16.mxu0 0
        %755 = vmatpush1.bf16.msra.mxu0 0
        %756 = vmatprep.subr.bf16.mxu0 0
        %757 = vmatpush1.bf16.msra.mxu0 0
        %758 = vmatprep.subr.bf16.mxu0 0
        %759 = vmatpush1.bf16.msra.mxu0 0
        %760 = vmatprep.subr.bf16.mxu0 0
        %761 = vmatpush1.bf16.msra.mxu0 0
        %762 = vmatprep.subr.bf16.mxu0 0
        %763 = vmatpush1.bf16.msra.mxu0 0
        %764 = vmatprep.subr.bf16.mxu0 0
        %765 = vmatpush1.bf16.msra.mxu0 0
        %766 = vmatprep.subr.bf16.mxu0 0
        %767 = vmatpush1.bf16.msra.mxu0 0
        %768 = vmatprep.subr.bf16.mxu0 0
        %769 = vmatpush1.bf16.msra.mxu0 0
        %770 = vmatprep.subr.bf16.mxu0 0
        %771 = vmatpush1.bf16.msra.mxu0 0
        %772 = vmatprep.subr.bf16.mxu0 0
        %773 = vmatpush1.bf16.msra.mxu0 0
        %774 = vmatprep.mubr.bf16.mxu0 0
        %775 = vmatmul.mubr.bf16.gmra.mrb[0].mxu0 %v740
        %v776 = vpop.f32.mrb[0].mxu0
        %v777 = vadd.f32 %v725, %v776
        %v778 = vpop.f32.mrb[0].mxu0
        %v779 = vpop.f32.mrb[0].mxu0
        %v780 = vpop.f32.mrb[0].mxu0
        %781 = vdwg.mxu0
        %v782 = vpack.c.bf16 %v777, %v777
        %v783 = vld [vmem:[#allocation2] sm:$0xf]
        %v784 = vld [vmem:[#allocation3] sm:$0xf]
        %vm785 = vcmask 64512
        %v787 = vsel %vm785, %v782, 0
        %v790 = vsel %vm785, %v783, 0
        %792 = vmatprep.subr.bf16.mxu0 0
        %793 = vmatpush1.bf16.xpose.msra.mxu0 %v790
        %794 = vmatprep.subr.bf16.mxu0 0
        %795 = vmatpush1.bf16.xpose.msra.mxu0 0
        %796 = vmatprep.subr.bf16.mxu0 0
        %797 = vmatpush1.bf16.xpose.msra.mxu0 0
        %798 = vmatprep.subr.bf16.mxu0 0
        %799 = vmatpush1.bf16.xpose.msra.mxu0 0
        %800 = vmatprep.subr.bf16.mxu0 0
        %801 = vmatpush1.bf16.xpose.msra.mxu0 0
        %802 = vmatprep.subr.bf16.mxu0 0
        %803 = vmatpush1.bf16.xpose.msra.mxu0 0
        %804 = vmatprep.subr.bf16.mxu0 0
        %805 = vmatpush1.bf16.xpose.msra.mxu0 0
        %806 = vmatprep.subr.bf16.mxu0 0
        %807 = vmatpush1.bf16.xpose.msra.mxu0 0
        %808 = vmatprep.subr.bf16.mxu0 0
        %809 = vmatpush1.bf16.xpose.msra.mxu0 0
        %810 = vmatprep.subr.bf16.mxu0 0
        %811 = vmatpush1.bf16.xpose.msra.mxu0 0
        %812 = vmatprep.subr.bf16.mxu0 0
        %813 = vmatpush1.bf16.xpose.msra.mxu0 0
        %814 = vmatprep.subr.bf16.mxu0 0
        %815 = vmatpush1.bf16.xpose.msra.mxu0 0
        %816 = vmatprep.subr.bf16.mxu0 0
        %817 = vmatpush1.bf16.xpose.msra.mxu0 0
        %818 = vmatprep.subr.bf16.mxu0 0
        %819 = vmatpush1.bf16.xpose.msra.mxu0 0
        %820 = vmatprep.subr.bf16.mxu0 0
        %821 = vmatpush1.bf16.xpose.msra.mxu0 0
        %822 = vmatprep.subr.bf16.mxu0 0
        %823 = vmatpush1.bf16.xpose.msra.mxu0 0
        %824 = vmatprep.mubr.bf16.mxu0 0
        %825 = vmatmul.mubr.bf16.gmra.mrb[0].mxu0 %v787
        %v826 = vpop.f32.mrb[0].mxu0
        %v827 = vadd.f32 0.0, %v826
        %v828 = vpop.f32.mrb[0].mxu0
        %v829 = vpop.f32.mrb[0].mxu0
        %v830 = vpop.f32.mrb[0].mxu0
        %831 = vdwg.mxu0
        %v832 = vsel %vm785, %v827, -inf
        %833 = vmax.xlane.f32.xlu0 %v832
        %v834 = vpop.xlane.xlu0 %833
        %v835 = vsub.f32 %v827, %v834
        %v836 = vmul.f32 %v835, 1.442695
        %v837 = vpow.pop %v836
        %v838 = vsel %vm785, %v837, 0.0
        %839 = vadd.xlane.f32.xlu0 %v838
        %v840 = vpop.xlane.xlu0 %839
        %v841 = vrcp.pop %v840
        %v842 = vpack.c.bf16 %v837, %v837
        %v844 = vsel %vm785, %v842, 0
        %vm846 = vcmask 1043456
        %v848 = vsel %vm846, %v784, 0
        %850 = vmatprep.subr.bf16.mxu0 0
        %851 = vmatpush1.bf16.msra.mxu0 %v848
        %852 = vmatprep.subr.bf16.mxu0 0
        %853 = vmatpush1.bf16.msra.mxu0 0
        %854 = vmatprep.subr.bf16.mxu0 0
        %855 = vmatpush1.bf16.msra.mxu0 0
        %856 = vmatprep.subr.bf16.mxu0 0
        %857 = vmatpush1.bf16.msra.mxu0 0
        %858 = vmatprep.subr.bf16.mxu0 0
        %859 = vmatpush1.bf16.msra.mxu0 0
        %860 = vmatprep.subr.bf16.mxu0 0
        %861 = vmatpush1.bf16.msra.mxu0 0
        %862 = vmatprep.subr.bf16.mxu0 0
        %863 = vmatpush1.bf16.msra.mxu0 0
        %864 = vmatprep.subr.bf16.mxu0 0
        %865 = vmatpush1.bf16.msra.mxu0 0
        %866 = vmatprep.subr.bf16.mxu0 0
        %867 = vmatpush1.bf16.msra.mxu0 0
        %868 = vmatprep.subr.bf16.mxu0 0
        %869 = vmatpush1.bf16.msra.mxu0 0
        %870 = vmatprep.subr.bf16.mxu0 0
        %871 = vmatpush1.bf16.msra.mxu0 0
        %872 = vmatprep.subr.bf16.mxu0 0
        %873 = vmatpush1.bf16.msra.mxu0 0
        %874 = vmatprep.subr.bf16.mxu0 0
        %875 = vmatpush1.bf16.msra.mxu0 0
        %876 = vmatprep.subr.bf16.mxu0 0
        %877 = vmatpush1.bf16.msra.mxu0 0
        %878 = vmatprep.subr.bf16.mxu0 0
        %879 = vmatpush1.bf16.msra.mxu0 0
        %880 = vmatprep.subr.bf16.mxu0 0
        %881 = vmatpush1.bf16.msra.mxu0 0
        %882 = vmatprep.mubr.bf16.mxu0 0
        %883 = vmatmul.mubr.bf16.gmra.mrb[0].mxu0 %v844
        %v884 = vpop.f32.mrb[0].mxu0
        %v885 = vadd.f32 0.0, %v884
        %v886 = vpop.f32.mrb[0].mxu0
        %v887 = vpop.f32.mrb[0].mxu0
        %v888 = vpop.f32.mrb[0].mxu0
        %889 = vdwg.mxu0
        %v890 = vmul.f32 %v885, %v841
        %v891 = vpack.c.bf16 %v890, %v890
        %v892 = vld [vmem:[#allocation13] sm:$0xf]
        %s893 = scalar_lea.vmem [#allocation2], 4
        %v894 = vld [vmem:[%s893] sm:$0xf]
        %s895 = scalar_lea.vmem [#allocation3], 4
        %v896 = vld [vmem:[%s895] sm:$0xf]
        %898 = vrot.lane.b32.xlu0 %v782, 120
        %v899 = vpop.permute.xlu0 %898
        %v901 = vsel %vm785, %v899, 0
        %v904 = vsel %vm785, %v894, 0
        %906 = vmatprep.subr.bf16.mxu0 0
        %907 = vmatpush1.bf16.xpose.msra.mxu0 %v904
        %908 = vmatprep.subr.bf16.mxu0 0
        %909 = vmatpush1.bf16.xpose.msra.mxu0 0
        %910 = vmatprep.subr.bf16.mxu0 0
        %911 = vmatpush1.bf16.xpose.msra.mxu0 0
        %912 = vmatprep.subr.bf16.mxu0 0
        %913 = vmatpush1.bf16.xpose.msra.mxu0 0
        %914 = vmatprep.subr.bf16.mxu0 0
        %915 = vmatpush1.bf16.xpose.msra.mxu0 0
        %916 = vmatprep.subr.bf16.mxu0 0
        %917 = vmatpush1.bf16.xpose.msra.mxu0 0
        %918 = vmatprep.subr.bf16.mxu0 0
        %919 = vmatpush1.bf16.xpose.msra.mxu0 0
        %920 = vmatprep.subr.bf16.mxu0 0
        %921 = vmatpush1.bf16.xpose.msra.mxu0 0
        %922 = vmatprep.subr.bf16.mxu0 0
        %923 = vmatpush1.bf16.xpose.msra.mxu0 0
        %924 = vmatprep.subr.bf16.mxu0 0
        %925 = vmatpush1.bf16.xpose.msra.mxu0 0
        %926 = vmatprep.subr.bf16.mxu0 0
        %927 = vmatpush1.bf16.xpose.msra.mxu0 0
        %928 = vmatprep.subr.bf16.mxu0 0
        %929 = vmatpush1.bf16.xpose.msra.mxu0 0
        %930 = vmatprep.subr.bf16.mxu0 0
        %931 = vmatpush1.bf16.xpose.msra.mxu0 0
        %932 = vmatprep.subr.bf16.mxu0 0
        %933 = vmatpush1.bf16.xpose.msra.mxu0 0
        %934 = vmatprep.subr.bf16.mxu0 0
        %935 = vmatpush1.bf16.xpose.msra.mxu0 0
        %936 = vmatprep.subr.bf16.mxu0 0
        %937 = vmatpush1.bf16.xpose.msra.mxu0 0
        %938 = vmatprep.mubr.bf16.mxu0 0
        %939 = vmatmul.mubr.bf16.gmra.mrb[0].mxu0 %v901
        %v940 = vpop.f32.mrb[0].mxu0
        %v941 = vadd.f32 0.0, %v940
        %v942 = vpop.f32.mrb[0].mxu0
        %v943 = vpop.f32.mrb[0].mxu0
        %v944 = vpop.f32.mrb[0].mxu0
        %945 = vdwg.mxu0
        %v946 = vsel %vm785, %v941, -inf
        %947 = vmax.xlane.f32.xlu0 %v946
        %v948 = vpop.xlane.xlu0 %947
        %v949 = vsub.f32 %v941, %v948
        %v950 = vmul.f32 %v949, 1.442695
        %v951 = vpow.pop %v950
        %v952 = vsel %vm785, %v951, 0.0
        %953 = vadd.xlane.f32.xlu0 %v952
        %v954 = vpop.xlane.xlu0 %953
        %v955 = vrcp.pop %v954
        %v956 = vpack.c.bf16 %v951, %v951
        %v958 = vsel %vm785, %v956, 0
        %v961 = vsel %vm846, %v896, 0
        %963 = vmatprep.subr.bf16.mxu0 0
        %964 = vmatpush1.bf16.msra.mxu0 %v961
        %965 = vmatprep.subr.bf16.mxu0 0
        %966 = vmatpush1.bf16.msra.mxu0 0
        %967 = vmatprep.subr.bf16.mxu0 0
        %968 = vmatpush1.bf16.msra.mxu0 0
        %969 = vmatprep.subr.bf16.mxu0 0
        %970 = vmatpush1.bf16.msra.mxu0 0
        %971 = vmatprep.subr.bf16.mxu0 0
        %972 = vmatpush1.bf16.msra.mxu0 0
        %973 = vmatprep.subr.bf16.mxu0 0
        %974 = vmatpush1.bf16.msra.mxu0 0
        %975 = vmatprep.subr.bf16.mxu0 0
        %976 = vmatpush1.bf16.msra.mxu0 0
        %977 = vmatprep.subr.bf16.mxu0 0
        %978 = vmatpush1.bf16.msra.mxu0 0
        %979 = vmatprep.subr.bf16.mxu0 0
        %980 = vmatpush1.bf16.msra.mxu0 0
        %981 = vmatprep.subr.bf16.mxu0 0
        %982 = vmatpush1.bf16.msra.mxu0 0
        %983 = vmatprep.subr.bf16.mxu0 0
        %984 = vmatpush1.bf16.msra.mxu0 0
        %985 = vmatprep.subr.bf16.mxu0 0
        %986 = vmatpush1.bf16.msra.mxu0 0
        %987 = vmatprep.subr.bf16.mxu0 0
        %988 = vmatpush1.bf16.msra.mxu0 0
        %989 = vmatprep.subr.bf16.mxu0 0
        %990 = vmatpush1.bf16.msra.mxu0 0
        %991 = vmatprep.subr.bf16.mxu0 0
        %992 = vmatpush1.bf16.msra.mxu0 0
        %993 = vmatprep.subr.bf16.mxu0 0
        %994 = vmatpush1.bf16.msra.mxu0 0
        %995 = vmatprep.mubr.bf16.mxu0 0
        %996 = vmatmul.mubr.bf16.gmra.mrb[0].mxu0 %v958
        %v997 = vpop.f32.mrb[0].mxu0
        %v998 = vadd.f32 0.0, %v997
        %v999 = vpop.f32.mrb[0].mxu0
        %v1000 = vpop.f32.mrb[0].mxu0
        %v1001 = vpop.f32.mrb[0].mxu0
        %1002 = vdwg.mxu0
        %v1003 = vmul.f32 %v998, %v955
        %v1004 = vpack.c.bf16 %v1003, %v1003
        %v1005 = vld [vmem:[#allocation13 + $0x4] sm:$0xf]
        %v1007 = vsel %vm785, %v1004, 0
        %v1010 = vsel %vm846, %v1005, 0
        %1012 = vmatprep.subr.bf16.mxu0 0
        %1013 = vmatpush1.bf16.msra.mxu0 %v1010
        %1014 = vmatprep.subr.bf16.mxu0 0
        %1015 = vmatpush1.bf16.msra.mxu0 0
        %1016 = vmatprep.subr.bf16.mxu0 0
        %1017 = vmatpush1.bf16.msra.mxu0 0
        %1018 = vmatprep.subr.bf16.mxu0 0
        %1019 = vmatpush1.bf16.msra.mxu0 0
        %1020 = vmatprep.subr.bf16.mxu0 0
        %1021 = vmatpush1.bf16.msra.mxu0 0
        %1022 = vmatprep.subr.bf16.mxu0 0
        %1023 = vmatpush1.bf16.msra.mxu0 0
        %1024 = vmatprep.subr.bf16.mxu0 0
        %1025 = vmatpush1.bf16.msra.mxu0 0
        %1026 = vmatprep.subr.bf16.mxu0 0
        %1027 = vmatpush1.bf16.msra.mxu0 0
        %1028 = vmatprep.subr.bf16.mxu0 0
        %1029 = vmatpush1.bf16.msra.mxu0 0
        %1030 = vmatprep.subr.bf16.mxu0 0
        %1031 = vmatpush1.bf16.msra.mxu0 0
        %1032 = vmatprep.subr.bf16.mxu0 0
        %1033 = vmatpush1.bf16.msra.mxu0 0
        %1034 = vmatprep.subr.bf16.mxu0 0
        %1035 = vmatpush1.bf16.msra.mxu0 0
        %1036 = vmatprep.subr.bf16.mxu0 0
        %1037 = vmatpush1.bf16.msra.mxu0 0
        %1038 = vmatprep.subr.bf16.mxu0 0
        %1039 = vmatpush1.bf16.msra.mxu0 0
        %1040 = vmatprep.subr.bf16.mxu0 0
        %1041 = vmatpush1.bf16.msra.mxu0 0
        %1042 = vmatprep.subr.bf16.mxu0 0
        %1043 = vmatpush1.bf16.msra.mxu0 0
        %1044 = vmatprep.mubr.bf16.mxu0 0
        %1045 = vmatmul.mubr.bf16.gmra.mrb[0].mxu0 %v1007
        %v1046 = vpop.f32.mrb[0].mxu0
        %v1047 = vadd.f32 0.0, %v1046
        %v1048 = vpop.f32.mrb[0].mxu0
        %v1049 = vpop.f32.mrb[0].mxu0
        %v1050 = vpop.f32.mrb[0].mxu0
        %1051 = vdwg.mxu0
        %v1053 = vsel %vm785, %v891, 0
        %v1056 = vsel %vm846, %v892, 0
        %1058 = vmatprep.subr.bf16.mxu0 0
        %1059 = vmatpush1.bf16.msra.mxu0 %v1056
        %1060 = vmatprep.subr.bf16.mxu0 0
        %1061 = vmatpush1.bf16.msra.mxu0 0
        %1062 = vmatprep.subr.bf16.mxu0 0
        %1063 = vmatpush1.bf16.msra.mxu0 0
        %1064 = vmatprep.subr.bf16.mxu0 0
        %1065 = vmatpush1.bf16.msra.mxu0 0
        %1066 = vmatprep.subr.bf16.mxu0 0
        %1067 = vmatpush1.bf16.msra.mxu0 0
        %1068 = vmatprep.subr.bf16.mxu0 0
        %1069 = vmatpush1.bf16.msra.mxu0 0
        %1070 = vmatprep.subr.bf16.mxu0 0
        %1071 = vmatpush1.bf16.msra.mxu0 0
        %1072 = vmatprep.subr.bf16.mxu0 0
        %1073 = vmatpush1.bf16.msra.mxu0 0
        %1074 = vmatprep.subr.bf16.mxu0 0
        %1075 = vmatpush1.bf16.msra.mxu0 0
        %1076 = vmatprep.subr.bf16.mxu0 0
        %1077 = vmatpush1.bf16.msra.mxu0 0
        %1078 = vmatprep.subr.bf16.mxu0 0
        %1079 = vmatpush1.bf16.msra.mxu0 0
        %1080 = vmatprep.subr.bf16.mxu0 0
        %1081 = vmatpush1.bf16.msra.mxu0 0
        %1082 = vmatprep.subr.bf16.mxu0 0
        %1083 = vmatpush1.bf16.msra.mxu0 0
        %1084 = vmatprep.subr.bf16.mxu0 0
        %1085 = vmatpush1.bf16.msra.mxu0 0
        %1086 = vmatprep.subr.bf16.mxu0 0
        %1087 = vmatpush1.bf16.msra.mxu0 0
        %1088 = vmatprep.subr.bf16.mxu0 0
        %1089 = vmatpush1.bf16.msra.mxu0 0
        %1090 = vmatprep.mubr.bf16.mxu0 0
        %1091 = vmatmul.mubr.bf16.gmra.mrb[0].mxu0 %v1053
        %v1092 = vpop.f32.mrb[0].mxu0
        %v1093 = vadd.f32 %v1047, %v1092
        %v1094 = vpop.f32.mrb[0].mxu0
        %v1095 = vpop.f32.mrb[0].mxu0
        %v1096 = vpop.f32.mrb[0].mxu0
        %1097 = vdwg.mxu0
        %s1098 = scalar_lea.vmem [#allocation2], 8
        %v1099 = vld [vmem:[%s1098] sm:$0xf]
        %s1100 = scalar_lea.vmem [#allocation3], 8
        %v1101 = vld [vmem:[%s1100] sm:$0xf]
        %1102 = vrot.lane.b32.xlu0 %v782, 112
        %v1103 = vpop.permute.xlu0 %1102
        %v1105 = vsel %vm785, %v1103, 0
        %v1108 = vsel %vm785, %v1099, 0
        %1110 = vmatprep.subr.bf16.mxu0 0
        %1111 = vmatpush1.bf16.xpose.msra.mxu0 %v1108
        %1112 = vmatprep.subr.bf16.mxu0 0
        %1113 = vmatpush1.bf16.xpose.msra.mxu0 0
        %1114 = vmatprep.subr.bf16.mxu0 0
        %1115 = vmatpush1.bf16.xpose.msra.mxu0 0
        %1116 = vmatprep.subr.bf16.mxu0 0
        %1117 = vmatpush1.bf16.xpose.msra.mxu0 0
        %1118 = vmatprep.subr.bf16.mxu0 0
        %1119 = vmatpush1.bf16.xpose.msra.mxu0 0
        %1120 = vmatprep.subr.bf16.mxu0 0
        %1121 = vmatpush1.bf16.xpose.msra.mxu0 0
        %1122 = vmatprep.subr.bf16.mxu0 0
        %1123 = vmatpush1.bf16.xpose.msra.mxu0 0
        %1124 = vmatprep.subr.bf16.mxu0 0
        %1125 = vmatpush1.bf16.xpose.msra.mxu0 0
        %1126 = vmatprep.subr.bf16.mxu0 0
        %1127 = vmatpush1.bf16.xpose.msra.mxu0 0
        %1128 = vmatprep.subr.bf16.mxu0 0
        %1129 = vmatpush1.bf16.xpose.msra.mxu0 0
        %1130 = vmatprep.subr.bf16.mxu0 0
        %1131 = vmatpush1.bf16.xpose.msra.mxu0 0
        %1132 = vmatprep.subr.bf16.mxu0 0
        %1133 = vmatpush1.bf16.xpose.msra.mxu0 0
        %1134 = vmatprep.subr.bf16.mxu0 0
        %1135 = vmatpush1.bf16.xpose.msra.mxu0 0
        %1136 = vmatprep.subr.bf16.mxu0 0
        %1137 = vmatpush1.bf16.xpose.msra.mxu0 0
        %1138 = vmatprep.subr.bf16.mxu0 0
        %1139 = vmatpush1.bf16.xpose.msra.mxu0 0
        %1140 = vmatprep.subr.bf16.mxu0 0
        %1141 = vmatpush1.bf16.xpose.msra.mxu0 0
        %1142 = vmatprep.mubr.bf16.mxu0 0
        %1143 = vmatmul.mubr.bf16.gmra.mrb[0].mxu0 %v1105
        %v1144 = vpop.f32.mrb[0].mxu0
        %v1145 = vadd.f32 0.0, %v1144
        %v1146 = vpop.f32.mrb[0].mxu0
        %v1147 = vpop.f32.mrb[0].mxu0
        %v1148 = vpop.f32.mrb[0].mxu0
        %1149 = vdwg.mxu0
        %v1150 = vsel %vm785, %v1145, -inf
        %1151 = vmax.xlane.f32.xlu0 %v1150
        %v1152 = vpop.xlane.xlu0 %1151
        %v1153 = vsub.f32 %v1145, %v1152
        %v1154 = vmul.f32 %v1153, 1.442695
        %v1155 = vpow.pop %v1154
        %v1156 = vsel %vm785, %v1155, 0.0
        %1157 = vadd.xlane.f32.xlu0 %v1156
        %v1158 = vpop.xlane.xlu0 %1157
        %v1159 = vrcp.pop %v1158
        %v1160 = vpack.c.bf16 %v1155, %v1155
        %v1162 = vsel %vm785, %v1160, 0
        %v1165 = vsel %vm846, %v1101, 0
        %1167 = vmatprep.subr.bf16.mxu0 0
        %1168 = vmatpush1.bf16.msra.mxu0 %v1165
        %1169 = vmatprep.subr.bf16.mxu0 0
        %1170 = vmatpush1.bf16.msra.mxu0 0
        %1171 = vmatprep.subr.bf16.mxu0 0
        %1172 = vmatpush1.bf16.msra.mxu0 0
        %1173 = vmatprep.subr.bf16.mxu0 0
        %1174 = vmatpush1.bf16.msra.mxu0 0
        %1175 = vmatprep.subr.bf16.mxu0 0
        %1176 = vmatpush1.bf16.msra.mxu0 0
        %1177 = vmatprep.subr.bf16.mxu0 0
        %1178 = vmatpush1.bf16.msra.mxu0 0
        %1179 = vmatprep.subr.bf16.mxu0 0
        %1180 = vmatpush1.bf16.msra.mxu0 0
        %1181 = vmatprep.subr.bf16.mxu0 0
        %1182 = vmatpush1.bf16.msra.mxu0 0
        %1183 = vmatprep.subr.bf16.mxu0 0
        %1184 = vmatpush1.bf16.msra.mxu0 0
        %1185 = vmatprep.subr.bf16.mxu0 0
        %1186 = vmatpush1.bf16.msra.mxu0 0
        %1187 = vmatprep.subr.bf16.mxu0 0
        %1188 = vmatpush1.bf16.msra.mxu0 0
        %1189 = vmatprep.subr.bf16.mxu0 0
        %1190 = vmatpush1.bf16.msra.mxu0 0
        %1191 = vmatprep.subr.bf16.mxu0 0
        %1192 = vmatpush1.bf16.msra.mxu0 0
        %1193 = vmatprep.subr.bf16.mxu0 0
        %1194 = vmatpush1.bf16.msra.mxu0 0
        %1195 = vmatprep.subr.bf16.mxu0 0
        %1196 = vmatpush1.bf16.msra.mxu0 0
        %1197 = vmatprep.subr.bf16.mxu0 0
        %1198 = vmatpush1.bf16.msra.mxu0 0
        %1199 = vmatprep.mubr.bf16.mxu0 0
        %1200 = vmatmul.mubr.bf16.gmra.mrb[0].mxu0 %v1162
        %v1201 = vpop.f32.mrb[0].mxu0
        %v1202 = vadd.f32 0.0, %v1201
        %v1203 = vpop.f32.mrb[0].mxu0
        %v1204 = vpop.f32.mrb[0].mxu0
        %v1205 = vpop.f32.mrb[0].mxu0
        %1206 = vdwg.mxu0
        %v1207 = vmul.f32 %v1202, %v1159
        %v1208 = vpack.c.bf16 %v1207, %v1207
        %v1209 = vld [vmem:[#allocation13 + $0x8] sm:$0xf]
        %v1211 = vsel %vm785, %v1208, 0
        %v1214 = vsel %vm846, %v1209, 0
        %1216 = vmatprep.subr.bf16.mxu0 0
        %1217 = vmatpush1.bf16.msra.mxu0 %v1214
        %1218 = vmatprep.subr.bf16.mxu0 0
        %1219 = vmatpush1.bf16.msra.mxu0 0
        %1220 = vmatprep.subr.bf16.mxu0 0
        %1221 = vmatpush1.bf16.msra.mxu0 0
        %1222 = vmatprep.subr.bf16.mxu0 0
        %1223 = vmatpush1.bf16.msra.mxu0 0
        %1224 = vmatprep.subr.bf16.mxu0 0
        %1225 = vmatpush1.bf16.msra.mxu0 0
        %1226 = vmatprep.subr.bf16.mxu0 0
        %1227 = vmatpush1.bf16.msra.mxu0 0
        %1228 = vmatprep.subr.bf16.mxu0 0
        %1229 = vmatpush1.bf16.msra.mxu0 0
        %1230 = vmatprep.subr.bf16.mxu0 0
        %1231 = vmatpush1.bf16.msra.mxu0 0
        %1232 = vmatprep.subr.bf16.mxu0 0
        %1233 = vmatpush1.bf16.msra.mxu0 0
        %1234 = vmatprep.subr.bf16.mxu0 0
        %1235 = vmatpush1.bf16.msra.mxu0 0
        %1236 = vmatprep.subr.bf16.mxu0 0
        %1237 = vmatpush1.bf16.msra.mxu0 0
        %1238 = vmatprep.subr.bf16.mxu0 0
        %1239 = vmatpush1.bf16.msra.mxu0 0
        %1240 = vmatprep.subr.bf16.mxu0 0
        %1241 = vmatpush1.bf16.msra.mxu0 0
        %1242 = vmatprep.subr.bf16.mxu0 0
        %1243 = vmatpush1.bf16.msra.mxu0 0
        %1244 = vmatprep.subr.bf16.mxu0 0
        %1245 = vmatpush1.bf16.msra.mxu0 0
        %1246 = vmatprep.subr.bf16.mxu0 0
        %1247 = vmatpush1.bf16.msra.mxu0 0
        %1248 = vmatprep.mubr.bf16.mxu0 0
        %1249 = vmatmul.mubr.bf16.gmra.mrb[0].mxu0 %v1211
        %v1250 = vpop.f32.mrb[0].mxu0
        %v1251 = vadd.f32 0.0, %v1250
        %v1252 = vpop.f32.mrb[0].mxu0
        %v1253 = vpop.f32.mrb[0].mxu0
        %v1254 = vpop.f32.mrb[0].mxu0
        %1255 = vdwg.mxu0
        %v1256 = vadd.f32 %v1093, %v1251
        %s1257 = scalar_lea.vmem [#allocation2], 12
        %v1258 = vld [vmem:[%s1257] sm:$0xf]
        %s1259 = scalar_lea.vmem [#allocation3], 12
        %v1260 = vld [vmem:[%s1259] sm:$0xf]
        %1261 = vrot.lane.b32.xlu0 %v782, 104
        %v1262 = vpop.permute.xlu0 %1261
        %v1264 = vsel %vm785, %v1262, 0
        %v1267 = vsel %vm785, %v1258, 0
        %1269 = vmatprep.subr.bf16.mxu0 0
        %1270 = vmatpush1.bf16.xpose.msra.mxu0 %v1267
        %1271 = vmatprep.subr.bf16.mxu0 0
        %1272 = vmatpush1.bf16.xpose.msra.mxu0 0
        %1273 = vmatprep.subr.bf16.mxu0 0
        %1274 = vmatpush1.bf16.xpose.msra.mxu0 0
        %1275 = vmatprep.subr.bf16.mxu0 0
        %1276 = vmatpush1.bf16.xpose.msra.mxu0 0
        %1277 = vmatprep.subr.bf16.mxu0 0
        %1278 = vmatpush1.bf16.xpose.msra.mxu0 0
        %1279 = vmatprep.subr.bf16.mxu0 0
        %1280 = vmatpush1.bf16.xpose.msra.mxu0 0
        %1281 = vmatprep.subr.bf16.mxu0 0
        %1282 = vmatpush1.bf16.xpose.msra.mxu0 0
        %1283 = vmatprep.subr.bf16.mxu0 0
        %1284 = vmatpush1.bf16.xpose.msra.mxu0 0
        %1285 = vmatprep.subr.bf16.mxu0 0
        %1286 = vmatpush1.bf16.xpose.msra.mxu0 0
        %1287 = vmatprep.subr.bf16.mxu0 0
        %1288 = vmatpush1.bf16.xpose.msra.mxu0 0
        %1289 = vmatprep.subr.bf16.mxu0 0
        %1290 = vmatpush1.bf16.xpose.msra.mxu0 0
        %1291 = vmatprep.subr.bf16.mxu0 0
        %1292 = vmatpush1.bf16.xpose.msra.mxu0 0
        %1293 = vmatprep.subr.bf16.mxu0 0
        %1294 = vmatpush1.bf16.xpose.msra.mxu0 0
        %1295 = vmatprep.subr.bf16.mxu0 0
        %1296 = vmatpush1.bf16.xpose.msra.mxu0 0
        %1297 = vmatprep.subr.bf16.mxu0 0
        %1298 = vmatpush1.bf16.xpose.msra.mxu0 0
        %1299 = vmatprep.subr.bf16.mxu0 0
        %1300 = vmatpush1.bf16.xpose.msra.mxu0 0
        %1301 = vmatprep.mubr.bf16.mxu0 0
        %1302 = vmatmul.mubr.bf16.gmra.mrb[0].mxu0 %v1264
        %v1303 = vpop.f32.mrb[0].mxu0
        %v1304 = vadd.f32 0.0, %v1303
        %v1305 = vpop.f32.mrb[0].mxu0
        %v1306 = vpop.f32.mrb[0].mxu0
        %v1307 = vpop.f32.mrb[0].mxu0
        %1308 = vdwg.mxu0
        %v1309 = vsel %vm785, %v1304, -inf
        %1310 = vmax.xlane.f32.xlu0 %v1309
        %v1311 = vpop.xlane.xlu0 %1310
        %v1312 = vsub.f32 %v1304, %v1311
        %v1313 = vmul.f32 %v1312, 1.442695
        %v1314 = vpow.pop %v1313
        %v1315 = vsel %vm785, %v1314, 0.0
        %1316 = vadd.xlane.f32.xlu0 %v1315
        %v1317 = vpop.xlane.xlu0 %1316
        %v1318 = vrcp.pop %v1317
        %v1319 = vpack.c.bf16 %v1314, %v1314
        %v1321 = vsel %vm785, %v1319, 0
        %v1324 = vsel %vm846, %v1260, 0
        %1326 = vmatprep.subr.bf16.mxu0 0
        %1327 = vmatpush1.bf16.msra.mxu0 %v1324
        %1328 = vmatprep.subr.bf16.mxu0 0
        %1329 = vmatpush1.bf16.msra.mxu0 0
        %1330 = vmatprep.subr.bf16.mxu0 0
        %1331 = vmatpush1.bf16.msra.mxu0 0
        %1332 = vmatprep.subr.bf16.mxu0 0
        %1333 = vmatpush1.bf16.msra.mxu0 0
        %1334 = vmatprep.subr.bf16.mxu0 0
        %1335 = vmatpush1.bf16.msra.mxu0 0
        %1336 = vmatprep.subr.bf16.mxu0 0
        %1337 = vmatpush1.bf16.msra.mxu0 0
        %1338 = vmatprep.subr.bf16.mxu0 0
        %1339 = vmatpush1.bf16.msra.mxu0 0
        %1340 = vmatprep.subr.bf16.mxu0 0
        %1341 = vmatpush1.bf16.msra.mxu0 0
        %1342 = vmatprep.subr.bf16.mxu0 0
        %1343 = vmatpush1.bf16.msra.mxu0 0
        %1344 = vmatprep.subr.bf16.mxu0 0
        %1345 = vmatpush1.bf16.msra.mxu0 0
        %1346 = vmatprep.subr.bf16.mxu0 0
        %1347 = vmatpush1.bf16.msra.mxu0 0
        %1348 = vmatprep.subr.bf16.mxu0 0
        %1349 = vmatpush1.bf16.msra.mxu0 0
        %1350 = vmatprep.subr.bf16.mxu0 0
        %1351 = vmatpush1.bf16.msra.mxu0 0
        %1352 = vmatprep.subr.bf16.mxu0 0
        %1353 = vmatpush1.bf16.msra.mxu0 0
        %1354 = vmatprep.subr.bf16.mxu0 0
        %1355 = vmatpush1.bf16.msra.mxu0 0
        %1356 = vmatprep.subr.bf16.mxu0 0
        %1357 = vmatpush1.bf16.msra.mxu0 0
        %1358 = vmatprep.mubr.bf16.mxu0 0
        %1359 = vmatmul.mubr.bf16.gmra.mrb[0].mxu0 %v1321
        %v1360 = vpop.f32.mrb[0].mxu0
        %v1361 = vadd.f32 0.0, %v1360
        %v1362 = vpop.f32.mrb[0].mxu0
        %v1363 = vpop.f32.mrb[0].mxu0
        %v1364 = vpop.f32.mrb[0].mxu0
        %1365 = vdwg.mxu0
        %v1366 = vmul.f32 %v1361, %v1318
        %v1367 = vpack.c.bf16 %v1366, %v1366
        %v1368 = vld [vmem:[#allocation13 + $0xc] sm:$0xf]
        %v1370 = vsel %vm785, %v1367, 0
        %v1373 = vsel %vm846, %v1368, 0
        %1375 = vmatprep.subr.bf16.mxu0 0
        %1376 = vmatpush1.bf16.msra.mxu0 %v1373
        %1377 = vmatprep.subr.bf16.mxu0 0
        %1378 = vmatpush1.bf16.msra.mxu0 0
        %1379 = vmatprep.subr.bf16.mxu0 0
        %1380 = vmatpush1.bf16.msra.mxu0 0
        %1381 = vmatprep.subr.bf16.mxu0 0
        %1382 = vmatpush1.bf16.msra.mxu0 0
        %1383 = vmatprep.subr.bf16.mxu0 0
        %1384 = vmatpush1.bf16.msra.mxu0 0
        %1385 = vmatprep.subr.bf16.mxu0 0
        %1386 = vmatpush1.bf16.msra.mxu0 0
        %1387 = vmatprep.subr.bf16.mxu0 0
        %1388 = vmatpush1.bf16.msra.mxu0 0
        %1389 = vmatprep.subr.bf16.mxu0 0
        %1390 = vmatpush1.bf16.msra.mxu0 0
        %1391 = vmatprep.subr.bf16.mxu0 0
        %1392 = vmatpush1.bf16.msra.mxu0 0
        %1393 = vmatprep.subr.bf16.mxu0 0
        %1394 = vmatpush1.bf16.msra.mxu0 0
        %1395 = vmatprep.subr.bf16.mxu0 0
        %1396 = vmatpush1.bf16.msra.mxu0 0
        %1397 = vmatprep.subr.bf16.mxu0 0
        %1398 = vmatpush1.bf16.msra.mxu0 0
        %1399 = vmatprep.subr.bf16.mxu0 0
        %1400 = vmatpush1.bf16.msra.mxu0 0
        %1401 = vmatprep.subr.bf16.mxu0 0
        %1402 = vmatpush1.bf16.msra.mxu0 0
        %1403 = vmatprep.subr.bf16.mxu0 0
        %1404 = vmatpush1.bf16.msra.mxu0 0
        %1405 = vmatprep.subr.bf16.mxu0 0
        %1406 = vmatpush1.bf16.msra.mxu0 0
        %1407 = vmatprep.mubr.bf16.mxu0 0
        %1408 = vmatmul.mubr.bf16.gmra.mrb[0].mxu0 %v1370
        %v1409 = vpop.f32.mrb[0].mxu0
        %v1410 = vadd.f32 0.0, %v1409
        %v1411 = vpop.f32.mrb[0].mxu0
        %v1412 = vpop.f32.mrb[0].mxu0
        %v1413 = vpop.f32.mrb[0].mxu0
        %1414 = vdwg.mxu0
        %v1415 = vadd.f32 %v1256, %v1410
        %v1416 = vlaneseq
        %v1417 = vshrl.u32 %v1416, 7
        %v1418 = vsub.s32 3, %v1417
        %v1419 = vrot.slane %v544, %v1418
        %v1420 = vadd.f32 %v1415, %v1419
        %v1421 = vadd.f32 %v716, %v1420
        %v1422 = vsel %vm738, %v1421, 0.0
        %1423 = vadd.xlane.f32.xlu0 %v1422
        %v1424 = vpop.xlane.xlu0 %1423
        %v1425 = vrcp.pop 32.0
        %v1426 = vmul.f32 %v1424, %v1425
        %v1427 = vsub.f32 %v1421, %v1426
        %v1428 = vmul.f32 %v1427, %v1427
        %v1429 = vsel %vm738, %v1428, 0.0
        %1430 = vadd.xlane.f32.xlu0 %v1429
        %v1431 = vpop.xlane.xlu0 %1430
        %v1432 = vmul.f32 %v1431, %v1425
        %v1433 = vadd.f32 %v1432, 1e-05
        %v1434 = vrsqrt.pop %v1433
        %v1435 = vmul.f32 %v1427, %v1434
        %v1436 = vlaneseq
        %v1437 = vshrl.u32 %v1436, 7
        %v1438 = vsub.s32 4, %v1437
        %v1439 = vrot.slane %v544, %v1438
        %v1440 = vmul.f32 %v1435, %v1439
        %v1441 = vlaneseq
        %v1442 = vshrl.u32 %v1441, 7
        %v1443 = vsub.s32 5, %v1442
        %v1444 = vrot.slane %v544, %v1443
        %v1445 = vadd.f32 %v1440, %v1444
        %v1446 = vpack.c.bf16 %v1445, %v1445
        %v1447 = vld [vmem:[#allocation15] sm:$0xf]
        %v1448 = vld [vmem:[#allocation15 + $0x4] sm:$0xf]
        %v1449 = vld [vmem:[#allocation15 + $0x8] sm:$0xf]
        %v1450 = vld [vmem:[#allocation15 + $0xc] sm:$0xf]
        %v1451 = vld [vmem:[#allocation16] sm:$0x1]
        %v1453 = vlaneseq
        %v1454 = vshrl.u32 %v1453, 7
        %v1455 = vsub.s32 0, %v1454
        %v1456 = vrot.slane %v1451, %v1455
        %v1462 = vunpack.c.l.b16 %v1447
        %v1463 = vunpack.c.l.b16 %v1448
        %v1464 = vunpack.c.l.b16 %v1449
        %v1465 = vunpack.c.l.b16 %v1450
        %v1466 = vpack.c.b16 %v1463, %v1462
        %v1467 = vpack.c.b16 %v1465, %v1464
        %v1471 = vsel %vm738, %v1446, 0
        %1473 = vmatprep.subr.bf16.mxu0 0
        %1474 = vmatpush1.bf16.msra.mxu0 %v1466
        %1475 = vmatprep.subr.bf16.mxu0 0
        %1476 = vmatpush1.bf16.msra.mxu0 %v1467
        %1477 = vmatprep.subr.bf16.mxu0 0
        %1478 = vmatpush1.bf16.msra.mxu0 0
        %1479 = vmatprep.subr.bf16.mxu0 0
        %1480 = vmatpush1.bf16.msra.mxu0 0
        %1481 = vmatprep.subr.bf16.mxu0 0
        %1482 = vmatpush1.bf16.msra.mxu0 0
        %1483 = vmatprep.subr.bf16.mxu0 0
        %1484 = vmatpush1.bf16.msra.mxu0 0
        %1485 = vmatprep.subr.bf16.mxu0 0
        %1486 = vmatpush1.bf16.msra.mxu0 0
        %1487 = vmatprep.subr.bf16.mxu0 0
        %1488 = vmatpush1.bf16.msra.mxu0 0
        %1489 = vmatprep.subr.bf16.mxu0 0
        %1490 = vmatpush1.bf16.msra.mxu0 0
        %1491 = vmatprep.subr.bf16.mxu0 0
        %1492 = vmatpush1.bf16.msra.mxu0 0
        %1493 = vmatprep.subr.bf16.mxu0 0
        %1494 = vmatpush1.bf16.msra.mxu0 0
        %1495 = vmatprep.subr.bf16.mxu0 0
        %1496 = vmatpush1.bf16.msra.mxu0 0
        %1497 = vmatprep.subr.bf16.mxu0 0
        %1498 = vmatpush1.bf16.msra.mxu0 0
        %1499 = vmatprep.subr.bf16.mxu0 0
        %1500 = vmatpush1.bf16.msra.mxu0 0
        %1501 = vmatprep.subr.bf16.mxu0 0
        %1502 = vmatpush1.bf16.msra.mxu0 0
        %1503 = vmatprep.subr.bf16.mxu0 0
        %1504 = vmatpush1.bf16.msra.mxu0 0
        %1505 = vmatprep.mubr.bf16.mxu0 0
        %1506 = vmatmul.mubr.bf16.gmra.mrb[0].mxu0 %v1471
        %v1507 = vpop.f32.mrb[0].mxu0
        %v1508 = vadd.f32 %v1456, %v1507
        %v1509 = vpop.f32.mrb[0].mxu0
        %v1510 = vpop.f32.mrb[0].mxu0
        %v1511 = vpop.f32.mrb[0].mxu0
        %1512 = vdwg.mxu0
        %v1513 = vmul.f32 %v1508, 0.5
        %v1514 = vmul.f32 %v1508, 0.70710677
        %v1515 = verf.f32.pop %v1514
        %v1516 = vadd.f32 %v1515, 1.0
        %v1517 = vmul.f32 %v1513, %v1516
        %v1518 = vpack.c.bf16 %v1517, %v1517
        %v1519 = vld [vmem:[#allocation18] sm:$0xf]
        %v1520 = vld [vmem:[#allocation18 + $0x4] sm:$0xf]
        %v1521 = vld [vmem:[#allocation18 + $0x8] sm:$0xf]
        %v1522 = vld [vmem:[#allocation18 + $0xc] sm:$0xf]
        %v1523 = vld [vmem:[#allocation18 + $0x10] sm:$0xf]
        %v1524 = vld [vmem:[#allocation18 + $0x14] sm:$0xf]
        %v1525 = vld [vmem:[#allocation18 + $0x18] sm:$0xf]
        %v1526 = vld [vmem:[#allocation18 + $0x1c] sm:$0xf]
        %v1527 = vld [vmem:[#allocation18 + $0x20] sm:$0xf]
        %v1528 = vld [vmem:[#allocation18 + $0x24] sm:$0xf]
        %v1529 = vld [vmem:[#allocation18 + $0x28] sm:$0xf]
        %v1530 = vld [vmem:[#allocation18 + $0x2c] sm:$0xf]
        %v1531 = vld [vmem:[#allocation18 + $0x30] sm:$0xf]
        %v1532 = vld [vmem:[#allocation18 + $0x34] sm:$0xf]
        %v1533 = vld [vmem:[#allocation18 + $0x38] sm:$0xf]
        %v1534 = vld [vmem:[#allocation18 + $0x3c] sm:$0xf]
        %v1535 = vlaneseq
        %v1536 = vshrl.u32 %v1535, 7
        %v1537 = vsub.s32 6, %v1536
        %v1538 = vrot.slane %v544, %v1537
        %v1555 = vunpack.c.l.b16 %v1519
        %v1556 = vunpack.c.l.b16 %v1520
        %v1557 = vunpack.c.l.b16 %v1521
        %v1558 = vunpack.c.l.b16 %v1522
        %v1559 = vunpack.c.l.b16 %v1523
        %v1560 = vunpack.c.l.b16 %v1524
        %v1561 = vunpack.c.l.b16 %v1525
        %v1562 = vunpack.c.l.b16 %v1526
        %v1563 = vunpack.c.l.b16 %v1527
        %v1564 = vunpack.c.l.b16 %v1528
        %v1565 = vunpack.c.l.b16 %v1529
        %v1566 = vunpack.c.l.b16 %v1530
        %v1567 = vunpack.c.l.b16 %v1531
        %v1568 = vunpack.c.l.b16 %v1532
        %v1569 = vunpack.c.l.b16 %v1533
        %v1570 = vunpack.c.l.b16 %v1534
        %v1571 = vpack.c.b16 %v1556, %v1555
        %v1572 = vpack.c.b16 %v1558, %v1557
        %v1573 = vpack.c.b16 %v1560, %v1559
        %v1574 = vpack.c.b16 %v1562, %v1561
        %v1575 = vpack.c.b16 %v1564, %v1563
        %v1576 = vpack.c.b16 %v1566, %v1565
        %v1577 = vpack.c.b16 %v1568, %v1567
        %v1578 = vpack.c.b16 %v1570, %v1569
        %1587 = vmatprep.subr.bf16.mxu0 0
        %1588 = vmatpush1.bf16.msra.mxu0 %v1571
        %1589 = vmatprep.subr.bf16.mxu0 0
        %1590 = vmatpush1.bf16.msra.mxu0 %v1572
        %1591 = vmatprep.subr.bf16.mxu0 0
        %1592 = vmatpush1.bf16.msra.mxu0 %v1573
        %1593 = vmatprep.subr.bf16.mxu0 0
        %1594 = vmatpush1.bf16.msra.mxu0 %v1574
        %1595 = vmatprep.subr.bf16.mxu0 0
        %1596 = vmatpush1.bf16.msra.mxu0 %v1575
        %1597 = vmatprep.subr.bf16.mxu0 0
        %1598 = vmatpush1.bf16.msra.mxu0 %v1576
        %1599 = vmatprep.subr.bf16.mxu0 0
        %1600 = vmatpush1.bf16.msra.mxu0 %v1577
        %1601 = vmatprep.subr.bf16.mxu0 0
        %1602 = vmatpush1.bf16.msra.mxu0 %v1578
        %1603 = vmatprep.subr.bf16.mxu0 0
        %1604 = vmatpush1.bf16.msra.mxu0 0
        %1605 = vmatprep.subr.bf16.mxu0 0
        %1606 = vmatpush1.bf16.msra.mxu0 0
        %1607 = vmatprep.subr.bf16.mxu0 0
        %1608 = vmatpush1.bf16.msra.mxu0 0
        %1609 = vmatprep.subr.bf16.mxu0 0
        %1610 = vmatpush1.bf16.msra.mxu0 0
        %1611 = vmatprep.subr.bf16.mxu0 0
        %1612 = vmatpush1.bf16.msra.mxu0 0
        %1613 = vmatprep.subr.bf16.mxu0 0
        %1614 = vmatpush1.bf16.msra.mxu0 0
        %1615 = vmatprep.subr.bf16.mxu0 0
        %1616 = vmatpush1.bf16.msra.mxu0 0
        %1617 = vmatprep.subr.bf16.mxu0 0
        %1618 = vmatpush1.bf16.msra.mxu0 0
        %1619 = vmatprep.mubr.bf16.mxu0 0
        %1620 = vmatmul.mubr.bf16.gmra.mrb[0].mxu0 %v1518
        %v1621 = vpop.f32.mrb[0].mxu0
        %v1622 = vadd.f32 %v1538, %v1621
        %v1623 = vpop.f32.mrb[0].mxu0
        %v1624 = vpop.f32.mrb[0].mxu0
        %v1625 = vpop.f32.mrb[0].mxu0
        %1626 = vdwg.mxu0
        %v1627 = vadd.f32 %v1445, %v1622
        %v1628 = vsel %vm738, %v1627, 0.0
        %1629 = vadd.xlane.f32.xlu0 %v1628
        %v1630 = vpop.xlane.xlu0 %1629
        %v1631 = vmul.f32 %v1630, %v1425
        %v1632 = vsub.f32 %v1627, %v1631
        %v1633 = vmul.f32 %v1632, %v1632
        %v1634 = vsel %vm738, %v1633, 0.0
        %1635 = vadd.xlane.f32.xlu0 %v1634
        %v1636 = vpop.xlane.xlu0 %1635
        %v1637 = vmul.f32 %v1636, %v1425
        %v1638 = vadd.f32 %v1637, 1e-05
        %v1639 = vrsqrt.pop %v1638
        %v1640 = vmul.f32 %v1632, %v1639
        %v1641 = vlaneseq
        %v1642 = vshrl.u32 %v1641, 7
        %v1643 = vsub.s32 7, %v1642
        %v1644 = vrot.slane %v544, %v1643
        %v1645 = vmul.f32 %v1640, %v1644
        %v1646 = vlaneseq
        %v1647 = vshrl.u32 %v1646, 7
        %v1648 = vsub.s32 0, %v1647
        %v1649 = vrot.slane %v545, %v1648
        %v1650 = vadd.f32 %v1645, %v1649
        %1651 = vst.msk [vmem:[%s542] sm:$0xff] %vm738, %v1650
        %s1652 = sand.u32 %s278, 1
        %s1653 = scalar_lea.sflag [#allocation6], %s1652
        %s1654 = sand.u32 %s278, 1
        %s1655 = smul.addr %s1654, 8
        %s1656 = scalar_lea.vmem [#allocation21], %s1655
        // Predicated region
        $region105: #{tpu_custom_call.1} parent=59 // pred_check
          %p1657 = pneg %p288
        $region106: #{tpu_custom_call.1} parent=59 // pred_check_branch
          %1659 = sbr.rel (%p1657) target = $region108
        $region107: #{tpu_custom_call.1} parent=59 // pred_region
          %s1661 = ssub.s32 128, 128
          %1662 = vsyncadd %s1653, %s1661
          %s1663 = sadd.s32 %s39, %s38
          %s1664 = smul.addr %s1663, 128
          %s1665 = scalar_lea.hbm %s10, %s1664
          %s1667 = sshll.u32 %s1656, 4
          %s1668 = int_to_ptr.vmem [resolvable:$true] %s1667
          %1670 = dma.vmem_to_hbm [thread:$0]  %s1668, 128, %s1665, %s1653
        $region108: #{tpu_custom_call.1} parent=59 // pred_fallthru
          _
      $region60: #{tpu_custom_call.1} parent=5 // pred_fallthru
        _
      %p1671 = scmp.le.s32.totalorder 2, %s29
      // Predicated region
      $region109: #{tpu_custom_call.1} parent=5 // pred_check
        %p1672 = pneg %p1671
      $region110: #{tpu_custom_call.1} parent=5 // pred_check_branch
        %1674 = sbr.rel (%p1672) target = $region112
      $region111: #{tpu_custom_call.1} parent=5 // pred_region
        %s1675 = ssub.s32 %s29, 2
        // Predicated region
        $region113: #{tpu_custom_call.1} parent=111 // pred_check
          %p1676 = pneg %p294
        $region114: #{tpu_custom_call.1} parent=111 // pred_check_branch
          %1678 = sbr.rel (%p1676) target = $region116
        $region115: #{tpu_custom_call.1} parent=111 // pred_region
          %s1679 = sand.u32 %s279, 1
          %s1680 = scalar_lea.sflag [#allocation6], %s1679
          %s1681 = sand.u32 %s279, 1
          %s1682 = smul.addr %s1681, 8
          %s1683 = scalar_lea.vmem [#allocation21], %s1682
          %1684 = dma.done %s1680, 128
        $region116: #{tpu_custom_call.1} parent=111 // pred_fallthru
          _
      $region112: #{tpu_custom_call.1} parent=5 // pred_fallthru
        _
    $region6: #{tpu_custom_call.1} parent=1 // loop_footer
      %s33 = sadd.s32 1, %s29
    $region7: #{tpu_custom_call.1} parent=1 // loop_footer_branch
      %28 = sbr.rel target = $region3
    $region8: #{tpu_custom_call.1} parent=1 // loop_exit
      _
    %1685 = vsyncpa [#allocation5], 1
    %s1686 = scalar_lea.sflag [#allocation5], 1
    %1687 = vsyncpa %s1686, 1
    %1688 = vsyncpa [#allocation8], 1
    %s1689 = scalar_lea.sflag [#allocation8], 1
    %1690 = vsyncpa %s1689, 1
    %1691 = vsyncpa [#allocation11], 1
    %1692 = vsyncpa [#allocation14], 1
    %1693 = vsyncpa [#allocation17], 1
    %1694 = vsyncpa [#allocation20], 1
    %1695 = vsyncpa [#allocation6], 1
    %s1696 = scalar_lea.sflag [#allocation6], 1
    %1697 = vsyncpa %s1696, 1

// kernel: tpu_custom_call.1
$region0: #{tpu_custom_call.1}
  #allocation0 [shape = 'u32[]', space=smem, size = 0x4, offset = 0x4, fixed_abs, tag = 'smem constant byte address 0x4 - core index']
  #allocation1 [shape = 'u32[144,128]{1,0:T(1,128)}', space=vmem, size = 0x12000, scoped, tag = 'internal scratch']
  #allocation2 [shape = 'bf16[4,8,8]{2,1,0:T(8,128)(2,1)}', space=vmem, size = 0x2000, scoped, tag = 'scratch operand']
  #allocation3 [shape = 'bf16[4,8,8]{2,1,0:T(8,128)(2,1)}', space=vmem, size = 0x2000, scoped, tag = 'scratch operand']
  %s0 = inlined_call_operand.hbm [shape: f32[2,8,32], index: 0, kind: input, shape index: {}]
  %s1 = inlined_call_operand.hbm [shape: bf16[2,8,32], index: 1, kind: input, shape index: {}]
  %s2 = inlined_call_operand.hbm [shape: bf16[32,32], index: 2, kind: input, shape index: {}]
  %s3 = inlined_call_operand.hbm [shape: bf16[32,32], index: 3, kind: input, shape index: {}]
  %s4 = inlined_call_operand.hbm [shape: bf16[32,32], index: 4, kind: input, shape index: {}]
  %s5 = inlined_call_operand.hbm [shape: bf16[32,32], index: 5, kind: input, shape index: {}]
  %s6 = inlined_call_operand.hbm [shape: bf16[32,128], index: 6, kind: input, shape index: {}]
  %s7 = inlined_call_operand.hbm [shape: f32[1,128], index: 7, kind: input, shape index: {}]
  %s8 = inlined_call_operand.hbm [shape: bf16[128,32], index: 8, kind: input, shape index: {}]
  %s9 = inlined_call_operand.hbm [shape: f32[9,32], index: 9, kind: input, shape index: {}]
  %s10 = inlined_call_operand.hbm [shape: f32[2,8,32], index: 10, kind: output, shape index: {}]
  %s11 = sld [smem:[#allocation0]]
  $region117: #{tpu_custom_call.1} parent=0
    _
  %s13 = ssub.s32 1, %s11
  %s14 = scalar_select 0, %s13, %s11
  $region1: #{tpu_custom_call.1} parent=0
    #allocation4 [shape = 'u8[8192]{0}', space=vmem, size = 0x2000, scoped, tag = 'input window, operand 0']
    #allocation5 [shape = 's32[2]{0}', space=sflag, size = 0x8, scoped, tag = 'scoped memory for tpu_custom_call.1']
    #allocation6 [shape = 's32[2]{0}', space=sflag, size = 0x8, scoped, tag = 'scoped memory for tpu_custom_call.1']
    #allocation7 [shape = 'u8[4096]{0}', space=vmem, size = 0x1000, scoped, tag = 'input window, operand 1']
    #allocation8 [shape = 's32[2]{0}', space=sflag, size = 0x8, scoped, tag = 'scoped memory for tpu_custom_call.1']
    #allocation9 [shape = 'u8[8192]{0}', space=vmem, size = 0x2000, scoped, tag = 'input window, operand 2, single buffered']
    #allocation10 [shape = 'u8[8192]{0}', space=vmem, size = 0x2000, scoped, tag = 'input window, operand 3, single buffered']
    #allocation11 [shape = 's32[1]{0}', space=sflag, size = 0x4, scoped, tag = 'scoped memory for tpu_custom_call.1']
    #allocation12 [shape = 'u8[8192]{0}', space=vmem, size = 0x2000, scoped, tag = 'input window, operand 4, single buffered']
    #allocation13 [shape = 'u8[8192]{0}', space=vmem, size = 0x2000, scoped, tag = 'input window, operand 5, single buffered']
    #allocation14 [shape = 's32[1]{0}', space=sflag, size = 0x4, scoped, tag = 'scoped memory for tpu_custom_call.1']
    #allocation15 [shape = 'u8[8192]{0}', space=vmem, size = 0x2000, scoped, tag = 'input window, operand 6, single buffered']
    #allocation16 [shape = 'u8[512]{0}', space=vmem, size = 0x400, scoped, tag = 'input window, operand 7, single buffered']
    #allocation17 [shape = 's32[1]{0}', space=sflag, size = 0x4, scoped, tag = 'scoped memory for tpu_custom_call.1']
    #allocation18 [shape = 'u8[32768]{0}', space=vmem, size = 0x8000, scoped, tag = 'input window, operand 8, single buffered']
    #allocation19 [shape = 'u8[8192]{0}', space=vmem, size = 0x2000, scoped, tag = 'input window, operand 9, single buffered']
    #allocation20 [shape = 's32[1]{0}', space=sflag, size = 0x4, scoped, tag = 'scoped memory for tpu_custom_call.1']
    #allocation21 [shape = 'u8[8192]{0}', space=vmem, size = 0x2000, scoped, tag = 'output window, operand 0']
    %15 = vsyncpa [#allocation5], 0
    %s16 = scalar_lea.sflag [#allocation5], 1
    %17 = vsyncpa %s16, 0
    %18 = vsyncpa [#allocation8], 0
    %s19 = scalar_lea.sflag [#allocation8], 1
    %20 = vsyncpa %s19, 0
    %21 = vsyncpa [#allocation11], 0
    %22 = vsyncpa [#allocation14], 0
    %23 = vsyncpa [#allocation17], 0
    %24 = vsyncpa [#allocation20], 0
    %25 = vsyncpa [#allocation6], 0
    %s26 = scalar_lea.sflag [#allocation6], 1
    %27 = vsyncpa %s26, 0
    loop: start=0, step=1, limit=4
    $region2: #{tpu_custom_call.1} parent=1 // loop_pre_header
      _
    $region3: #{tpu_custom_call.1} parent=1 // loop_header
      %s29 = sphi 0, %s33
      %p30 = scmp.ge.s32.totalorder %s29, 4
      %s36 = sphi 0, %s48
      %s37 = sphi 0, %s44
      %s38 = sphi 0, %s36
      %s39 = sphi 0, %s37
      %s40 = sphi 0, %s38
      %s41 = sphi 0, %s39
      %s53 = sphi 0, %s55
      %s56 = sphi 0, %s53
      %s57 = sphi 0, %s56
      %s73 = sphi 0, %s57
      %s79 = sphi 0, %s81
      %s82 = sphi 0, %s79
      %s83 = sphi 0, %s82
      %s99 = sphi 0, %s83
      %s103 = sphi 0, %s103
      %s105 = sphi 0, %s103
      %s106 = sphi 0, %s105
      %s120 = sphi 0, %s106
      %s124 = sphi 0, %s124
      %s126 = sphi 0, %s124
      %s127 = sphi 0, %s126
      %s141 = sphi 0, %s127
      %s145 = sphi 0, %s145
      %s147 = sphi 0, %s145
      %s148 = sphi 0, %s147
      %s162 = sphi 0, %s148
      %s166 = sphi 0, %s166
      %s168 = sphi 0, %s166
      %s169 = sphi 0, %s168
      %s183 = sphi 0, %s169
      %s187 = sphi 0, %s187
      %s189 = sphi 0, %s187
      %s190 = sphi 0, %s189
      %s204 = sphi 0, %s190
      %s208 = sphi 0, %s208
      %s210 = sphi 0, %s208
      %s211 = sphi 0, %s210
      %s225 = sphi 0, %s211
      %s229 = sphi 0, %s229
      %s231 = sphi 0, %s229
      %s232 = sphi 0, %s231
      %s246 = sphi 0, %s232
      %s250 = sphi 0, %s250
      %s252 = sphi 0, %s250
      %s253 = sphi 0, %s252
      %s267 = sphi 0, %s253
      %s275 = sphi 0, %s277
      %s278 = sphi 0, %s275
      %s279 = sphi 0, %s278
      %s295 = sphi 0, %s279
    $region4: #{tpu_custom_call.1} parent=1 // loop_header_branch
      %32 = sbr.rel (%p30) target = $region8
    $region5: #{tpu_custom_call.1} parent=1 // loop_body
      %s34 = ssub.s32 %s29, 1
      %s35 = ssub.s32 %s29, 2
      %s42 = sadd.s32 1, %s37
      %p43 = scmp.ge.s32.totalorder %s42, 1
      %s44 = scalar_select %p43, 0, %s42
      %s45 = sadd.s32 1, %s36
      %s46 = scalar_select %p43, %s45, %s36
      %p47 = scmp.ge.s32.totalorder %s46, 2
      %s48 = scalar_select %p47, 0, %s46
      %s49 = ssub.s32 %s36, %s48
      %s50 = ssub.s32 %s37, %s44
      %s51 = sor.u32 %s49, %s50
      %p52 = scmp.eq.s32.totalorder %s51, 0
      %s54 = sadd.s32 %s53, 1
      %s55 = scalar_select %p52, %s53, %s54
      %p58 = pneg %p52
      %p59 = scmp.eq.s32.totalorder %s29, 1
      %p60 = por %p58, %p59
      %p61 = scmp.ne.s32.totalorder %s53, %s56
      %p62 = scmp.eq.s32.totalorder %s29, 0
      %p63 = por %p61, %p62
      %p64 = scmp.ne.s32.totalorder %s53, %s56
      %p65 = scmp.eq.s32.totalorder %s34, 1
      %p66 = por %p64, %p65
      %p67 = scmp.ne.s32.totalorder %s56, %s57
      %p68 = scmp.eq.s32.totalorder %s34, 0
      %p69 = por %p67, %p68
      %p70 = scmp.ne.s32.totalorder %s56, %s57
      %p71 = scmp.eq.s32.totalorder %s35, 1
      %p72 = por %p70, %p71
      %p74 = scmp.ne.s32.totalorder %s57, %s73
      %p75 = scmp.eq.s32.totalorder %s35, 0
      %p76 = por %p74, %p75
      %s77 = ssub.s32 %s36, %s48
      %p78 = scmp.eq.s32.totalorder %s77, 0
      %s80 = sadd.s32 %s79, 1
      %s81 = scalar_select %p78, %s79, %s80
      %p84 = pneg %p78
      %p85 = scmp.eq.s32.totalorder %s29, 1
      %p86 = por %p84, %p85
      %p87 = scmp.ne.s32.totalorder %s79, %s82
      %p88 = scmp.eq.s32.totalorder %s29, 0
      %p89 = por %p87, %p88
      %p90 = scmp.ne.s32.totalorder %s79, %s82
      %p91 = scmp.eq.s32.totalorder %s34, 1
      %p92 = por %p90, %p91
      %p93 = scmp.ne.s32.totalorder %s82, %s83
      %p94 = scmp.eq.s32.totalorder %s34, 0
      %p95 = por %p93, %p94
      %p96 = scmp.ne.s32.totalorder %s82, %s83
      %p97 = scmp.eq.s32.totalorder %s35, 1
      %p98 = por %p96, %p97
      %p100 = scmp.ne.s32.totalorder %s83, %s99
      %p101 = scmp.eq.s32.totalorder %s35, 0
      %p102 = por %p100, %p101
      %s104 = sadd.s32 %s103, 1
      %p107 = scmp.eq.s32.totalorder %s29, 1
      %p108 = scmp.ne.s32.totalorder %s103, %s105
      %p109 = scmp.eq.s32.totalorder %s29, 0
      %p110 = por %p108, %p109
      %p111 = scmp.ne.s32.totalorder %s103, %s105
      %p112 = scmp.eq.s32.totalorder %s34, 1
      %p113 = por %p111, %p112
      %p114 = scmp.ne.s32.totalorder %s105, %s106
      %p115 = scmp.eq.s32.totalorder %s34, 0
      %p116 = por %p114, %p115
      %p117 = scmp.ne.s32.totalorder %s105, %s106
      %p118 = scmp.eq.s32.totalorder %s35, 1
      %p119 = por %p117, %p118
      %p121 = scmp.ne.s32.totalorder %s106, %s120
      %p122 = scmp.eq.s32.totalorder %s35, 0
      %p123 = por %p121, %p122
      %s125 = sadd.s32 %s124, 1
      %p128 = scmp.eq.s32.totalorder %s29, 1
      %p129 = scmp.ne.s32.totalorder %s124, %s126
      %p130 = scmp.eq.s32.totalorder %s29, 0
      %p131 = por %p129, %p130
      %p132 = scmp.ne.s32.totalorder %s124, %s126
      %p133 = scmp.eq.s32.totalorder %s34, 1
      %p134 = por %p132, %p133
      %p135 = scmp.ne.s32.totalorder %s126, %s127
      %p136 = scmp.eq.s32.totalorder %s34, 0
      %p137 = por %p135, %p136
      %p138 = scmp.ne.s32.totalorder %s126, %s127
      %p139 = scmp.eq.s32.totalorder %s35, 1
      %p140 = por %p138, %p139
      %p142 = scmp.ne.s32.totalorder %s127, %s141
      %p143 = scmp.eq.s32.totalorder %s35, 0
      %p144 = por %p142, %p143
      %s146 = sadd.s32 %s145, 1
      %p149 = scmp.eq.s32.totalorder %s29, 1
      %p150 = scmp.ne.s32.totalorder %s145, %s147
      %p151 = scmp.eq.s32.totalorder %s29, 0
      %p152 = por %p150, %p151
      %p153 = scmp.ne.s32.totalorder %s145, %s147
      %p154 = scmp.eq.s32.totalorder %s34, 1
      %p155 = por %p153, %p154
      %p156 = scmp.ne.s32.totalorder %s147, %s148
      %p157 = scmp.eq.s32.totalorder %s34, 0
      %p158 = por %p156, %p157
      %p159 = scmp.ne.s32.totalorder %s147, %s148
      %p160 = scmp.eq.s32.totalorder %s35, 1
      %p161 = por %p159, %p160
      %p163 = scmp.ne.s32.totalorder %s148, %s162
      %p164 = scmp.eq.s32.totalorder %s35, 0
      %p165 = por %p163, %p164
      %s167 = sadd.s32 %s166, 1
      %p170 = scmp.eq.s32.totalorder %s29, 1
      %p171 = scmp.ne.s32.totalorder %s166, %s168
      %p172 = scmp.eq.s32.totalorder %s29, 0
      %p173 = por %p171, %p172
      %p174 = scmp.ne.s32.totalorder %s166, %s168
      %p175 = scmp.eq.s32.totalorder %s34, 1
      %p176 = por %p174, %p175
      %p177 = scmp.ne.s32.totalorder %s168, %s169
      %p178 = scmp.eq.s32.totalorder %s34, 0
      %p179 = por %p177, %p178
      %p180 = scmp.ne.s32.totalorder %s168, %s169
      %p181 = scmp.eq.s32.totalorder %s35, 1
      %p182 = por %p180, %p181
      %p184 = scmp.ne.s32.totalorder %s169, %s183
      %p185 = scmp.eq.s32.totalorder %s35, 0
      %p186 = por %p184, %p185
      %s188 = sadd.s32 %s187, 1
      %p191 = scmp.eq.s32.totalorder %s29, 1
      %p192 = scmp.ne.s32.totalorder %s187, %s189
      %p193 = scmp.eq.s32.totalorder %s29, 0
      %p194 = por %p192, %p193
      %p195 = scmp.ne.s32.totalorder %s187, %s189
      %p196 = scmp.eq.s32.totalorder %s34, 1
      %p197 = por %p195, %p196
      %p198 = scmp.ne.s32.totalorder %s189, %s190
      %p199 = scmp.eq.s32.totalorder %s34, 0
      %p200 = por %p198, %p199
      %p201 = scmp.ne.s32.totalorder %s189, %s190
      %p202 = scmp.eq.s32.totalorder %s35, 1
      %p203 = por %p201, %p202
      %p205 = scmp.ne.s32.totalorder %s190, %s204
      %p206 = scmp.eq.s32.totalorder %s35, 0
      %p207 = por %p205, %p206
      %s209 = sadd.s32 %s208, 1
      %p212 = scmp.eq.s32.totalorder %s29, 1
      %p213 = scmp.ne.s32.totalorder %s208, %s210
      %p214 = scmp.eq.s32.totalorder %s29, 0
      %p215 = por %p213, %p214
      %p216 = scmp.ne.s32.totalorder %s208, %s210
      %p217 = scmp.eq.s32.totalorder %s34, 1
      %p218 = por %p216, %p217
      %p219 = scmp.ne.s32.totalorder %s210, %s211
      %p220 = scmp.eq.s32.totalorder %s34, 0
      %p221 = por %p219, %p220
      %p222 = scmp.ne.s32.totalorder %s210, %s211
      %p223 = scmp.eq.s32.totalorder %s35, 1
      %p224 = por %p222, %p223
      %p226 = scmp.ne.s32.totalorder %s211, %s225
      %p227 = scmp.eq.s32.totalorder %s35, 0
      %p228 = por %p226, %p227
      %s230 = sadd.s32 %s229, 1
      %p233 = scmp.eq.s32.totalorder %s29, 1
      %p234 = scmp.ne.s32.totalorder %s229, %s231
      %p235 = scmp.eq.s32.totalorder %s29, 0
      %p236 = por %p234, %p235
      %p237 = scmp.ne.s32.totalorder %s229, %s231
      %p238 = scmp.eq.s32.totalorder %s34, 1
      %p239 = por %p237, %p238
      %p240 = scmp.ne.s32.totalorder %s231, %s232
      %p241 = scmp.eq.s32.totalorder %s34, 0
      %p242 = por %p240, %p241
      %p243 = scmp.ne.s32.totalorder %s231, %s232
      %p244 = scmp.eq.s32.totalorder %s35, 1
      %p245 = por %p243, %p244
      %p247 = scmp.ne.s32.totalorder %s232, %s246
      %p248 = scmp.eq.s32.totalorder %s35, 0
      %p249 = por %p247, %p248
      %s251 = sadd.s32 %s250, 1
      %p254 = scmp.eq.s32.totalorder %s29, 1
      %p255 = scmp.ne.s32.totalorder %s250, %s252
      %p256 = scmp.eq.s32.totalorder %s29, 0
      %p257 = por %p255, %p256
      %p258 = scmp.ne.s32.totalorder %s250, %s252
      %p259 = scmp.eq.s32.totalorder %s34, 1
      %p260 = por %p258, %p259
      %p261 = scmp.ne.s32.totalorder %s252, %s253
      %p262 = scmp.eq.s32.totalorder %s34, 0
      %p263 = por %p261, %p262
      %p264 = scmp.ne.s32.totalorder %s252, %s253
      %p265 = scmp.eq.s32.totalorder %s35, 1
      %p266 = por %p264, %p265
      %p268 = scmp.ne.s32.totalorder %s253, %s267
      %p269 = scmp.eq.s32.totalorder %s35, 0
      %p270 = por %p268, %p269
      %s271 = ssub.s32 %s36, %s48
      %s272 = ssub.s32 %s37, %s44
      %s273 = sor.u32 %s271, %s272
      %p274 = scmp.eq.s32.totalorder %s273, 0
      %s276 = sadd.s32 %s275, 1
      %s277 = scalar_select %p274, %s275, %s276
      %p280 = pneg %p274
      %p281 = scmp.eq.s32.totalorder %s29, 1
      %p282 = por %p280, %p281
      %p283 = scmp.ne.s32.totalorder %s275, %s278
      %p284 = scmp.eq.s32.totalorder %s29, 0
      %p285 = por %p283, %p284
      %p286 = scmp.ne.s32.totalorder %s275, %s278
      %p287 = scmp.eq.s32.totalorder %s34, 1
      %p288 = por %p286, %p287
      %p289 = scmp.ne.s32.totalorder %s278, %s279
      %p290 = scmp.eq.s32.totalorder %s34, 0
      %p291 = por %p289, %p290
      %p292 = scmp.ne.s32.totalorder %s278, %s279
      %p293 = scmp.eq.s32.totalorder %s35, 1
      %p294 = por %p292, %p293
      %p296 = scmp.ne.s32.totalorder %s279, %s295
      %p297 = scmp.eq.s32.totalorder %s35, 0
      %p298 = por %p296, %p297
      %p299 = scmp.le.s32.totalorder 1, %s29
      %p300 = scmp.lt.s32.totalorder %s29, 3
      %p301 = pnand %p299, %p300
      %p302 = pneg %p301
      // Predicated region
      $region9: #{tpu_custom_call.1} parent=5 // pred_check
        _
      $region10: #{tpu_custom_call.1} parent=5 // pred_check_branch
        %304 = sbr.rel (%p301) target = $region12
      $region11: #{tpu_custom_call.1} parent=5 // pred_region
        %s305 = ssub.s32 %s29, 1
        // Predicated region
        $region13: #{tpu_custom_call.1} parent=11 // pred_check
          %p306 = pneg %p116
        $region14: #{tpu_custom_call.1} parent=11 // pred_check_branch
          %308 = sbr.rel (%p306) target = $region16
        $region15: #{tpu_custom_call.1} parent=11 // pred_region
          %s310 = ssub.s32 256, 256
          %311 = vsyncadd [#allocation8], %s310
          %s312 = sshll.u32 [#allocation9], 4
          %s313 = int_to_ptr.vmem [resolvable:$true] %s312
          %318 = dma.hbm_to_vmem [thread:$0]  %s2, 256, %s313, [#allocation8], 64, 64, 4
        $region16: #{tpu_custom_call.1} parent=11 // pred_fallthru
          _
        // Predicated region
        $region17: #{tpu_custom_call.1} parent=11 // pred_check
          %p319 = pneg %p137
        $region18: #{tpu_custom_call.1} parent=11 // pred_check_branch
          %321 = sbr.rel (%p319) target = $region20
        $region19: #{tpu_custom_call.1} parent=11 // pred_region
          %s323 = ssub.s32 256, 256
          %324 = vsyncadd [#allocation11], %s323
          %s325 = sshll.u32 [#allocation10], 4
          %s326 = int_to_ptr.vmem [resolvable:$true] %s325
          %331 = dma.hbm_to_vmem [thread:$0]  %s3, 256, %s326, [#allocation11], 64, 64, 4
        $region20: #{tpu_custom_call.1} parent=11 // pred_fallthru
          _
        // Predicated region
        $region21: #{tpu_custom_call.1} parent=11 // pred_check
          %p332 = pneg %p158
        $region22: #{tpu_custom_call.1} parent=11 // pred_check_branch
          %334 = sbr.rel (%p332) target = $region24
        $region23: #{tpu_custom_call.1} parent=11 // pred_region
          %s336 = ssub.s32 256, 256
          %337 = vsyncadd [#allocation11], %s336
          %s338 = sshll.u32 [#allocation12], 4
          %s339 = int_to_ptr.vmem [resolvable:$true] %s338
          %344 = dma.hbm_to_vmem [thread:$0]  %s4, 256, %s339, [#allocation11], 64, 64, 4
        $region24: #{tpu_custom_call.1} parent=11 // pred_fallthru
          _
        // Predicated region
        $region25: #{tpu_custom_call.1} parent=11 // pred_check
          %p345 = pneg %p179
        $region26: #{tpu_custom_call.1} parent=11 // pred_check_branch
          %347 = sbr.rel (%p345) target = $region28
        $region27: #{tpu_custom_call.1} parent=11 // pred_region
          %s349 = ssub.s32 256, 256
          %350 = vsyncadd [#allocation14], %s349
          %s351 = sshll.u32 [#allocation13], 4
          %s352 = int_to_ptr.vmem [resolvable:$true] %s351
          %357 = dma.hbm_to_vmem [thread:$0]  %s5, 256, %s352, [#allocation14], 64, 64, 4
        $region28: #{tpu_custom_call.1} parent=11 // pred_fallthru
          _
        // Predicated region
        $region29: #{tpu_custom_call.1} parent=11 // pred_check
          %p358 = pneg %p200
        $region30: #{tpu_custom_call.1} parent=11 // pred_check_branch
          %360 = sbr.rel (%p358) target = $region32
        $region31: #{tpu_custom_call.1} parent=11 // pred_region
          %s362 = ssub.s32 256, 256
          %363 = vsyncadd [#allocation14], %s362
          %s364 = sshll.u32 [#allocation15], 4
          %s365 = int_to_ptr.vmem [resolvable:$true] %s364
          %370 = dma.hbm_to_vmem [thread:$0]  %s6, 256, %s365, [#allocation14], 64, 64, 4
        $region32: #{tpu_custom_call.1} parent=11 // pred_fallthru
          _
        // Predicated region
        $region33: #{tpu_custom_call.1} parent=11 // pred_check
          %p371 = pneg %p221
        $region34: #{tpu_custom_call.1} parent=11 // pred_check_branch
          %373 = sbr.rel (%p371) target = $region36
        $region35: #{tpu_custom_call.1} parent=11 // pred_region
          %s375 = ssub.s32 16, 16
          %376 = vsyncadd [#allocation17], %s375
          %s378 = sshll.u32 [#allocation16], 4
          %s379 = int_to_ptr.vmem [resolvable:$true] %s378
          %381 = dma.hbm_to_vmem [thread:$0]  %s7, 16, %s379, [#allocation17]
        $region36: #{tpu_custom_call.1} parent=11 // pred_fallthru
          _
        // Predicated region
        $region37: #{tpu_custom_call.1} parent=11 // pred_check
          %p382 = pneg %p242
        $region38: #{tpu_custom_call.1} parent=11 // pred_check_branch
          %384 = sbr.rel (%p382) target = $region40
        $region39: #{tpu_custom_call.1} parent=11 // pred_region
          %s386 = ssub.s32 1024, 1024
          %387 = vsyncadd [#allocation17], %s386
          %s388 = sshll.u32 [#allocation18], 4
          %s389 = int_to_ptr.vmem [resolvable:$true] %s388
          %394 = dma.hbm_to_vmem [thread:$0]  %s8, 1024, %s389, [#allocation17], 64, 64, 4
        $region40: #{tpu_custom_call.1} parent=11 // pred_fallthru
          _
        // Predicated region
        $region41: #{tpu_custom_call.1} parent=11 // pred_check
          %p395 = pneg %p263
        $region42: #{tpu_custom_call.1} parent=11 // pred_check_branch
          %397 = sbr.rel (%p395) target = $region44
        $region43: #{tpu_custom_call.1} parent=11 // pred_region
          %s399 = ssub.s32 256, 256
          %400 = vsyncadd [#allocation20], %s399
          %s401 = sshll.u32 [#allocation19], 4
          %s402 = int_to_ptr.vmem [resolvable:$true] %s401
          %407 = dma.hbm_to_vmem [thread:$0]  %s9, 256, %s402, [#allocation20], 128, 128, 8
        $region44: #{tpu_custom_call.1} parent=11 // pred_fallthru
          _
      $region12: #{tpu_custom_call.1} parent=5 // pred_fallthru
        _
      %p408 = scmp.lt.s32.totalorder %s29, 2
      // Predicated region
      $region45: #{tpu_custom_call.1} parent=5 // pred_check
        %p409 = pneg %p408
      $region46: #{tpu_custom_call.1} parent=5 // pred_check_branch
        %411 = sbr.rel (%p409) target = $region48
      $region47: #{tpu_custom_call.1} parent=5 // pred_region
        // Predicated region
        $region49: #{tpu_custom_call.1} parent=47 // pred_check
          %p412 = pneg %p63
        $region50: #{tpu_custom_call.1} parent=47 // pred_check_branch
          %414 = sbr.rel (%p412) target = $region52
        $region51: #{tpu_custom_call.1} parent=47 // pred_region
          %s415 = sand.u32 %s53, 1
          %s416 = scalar_lea.sflag [#allocation5], %s415
          %s417 = sand.u32 %s53, 1
          %s418 = smul.addr %s417, 8
          %s419 = scalar_lea.vmem [#allocation4], %s418
          %s421 = ssub.s32 128, 128
          %422 = vsyncadd %s416, %s421
          %s423 = sadd.s32 %s37, %s36
          %s424 = smul.addr %s423, 128
          %s425 = scalar_lea.hbm %s0, %s424
          %s427 = sshll.u32 %s419, 4
          %s428 = int_to_ptr.vmem [resolvable:$true] %s427
          %430 = dma.hbm_to_vmem [thread:$0]  %s425, 128, %s428, %s416
        $region52: #{tpu_custom_call.1} parent=47 // pred_fallthru
          _
        // Predicated region
        $region53: #{tpu_custom_call.1} parent=47 // pred_check
          %p431 = pneg %p89
        $region54: #{tpu_custom_call.1} parent=47 // pred_check_branch
          %433 = sbr.rel (%p431) target = $region56
        $region55: #{tpu_custom_call.1} parent=47 // pred_region
          %s434 = sand.u32 %s29, 1
          %s435 = scalar_lea.sflag [#allocation8], %s434
          %s436 = sand.u32 %s79, 1
          %s437 = smul.addr %s436, 4
          %s438 = scalar_lea.vmem [#allocation7], %s437
          %s440 = ssub.s32 64, 64
          %441 = vsyncadd %s435, %s440
          %s442 = smul.addr %s36, 64
          %s443 = scalar_lea.hbm %s1, %s442
          %s445 = sshll.u32 %s438, 4
          %s446 = int_to_ptr.vmem [resolvable:$true] %s445
          %448 = dma.hbm_to_vmem [thread:$0]  %s443, 64, %s446, %s435
        $region56: #{tpu_custom_call.1} parent=47 // pred_fallthru
          _
      $region48: #{tpu_custom_call.1} parent=5 // pred_fallthru
        _
      %p449 = scmp.le.s32.totalorder 1, %s29
      %p450 = scmp.lt.s32.totalorder %s29, 3
      %p451 = pnand %p449, %p450
      %p452 = pneg %p451
      // Predicated region
      $region57: #{tpu_custom_call.1} parent=5 // pred_check
        _
      $region58: #{tpu_custom_call.1} parent=5 // pred_check_branch
        %454 = sbr.rel (%p451) target = $region60
      $region59: #{tpu_custom_call.1} parent=5 // pred_region
        %s455 = ssub.s32 %s29, 1
        %s456 = sand.u32 %s56, 1
        %s457 = scalar_lea.sflag [#allocation5], %s456
        %s458 = sand.u32 %s56, 1
        %s459 = smul.addr %s458, 8
        %s460 = scalar_lea.vmem [#allocation4], %s459
        // Predicated region
        $region61: #{tpu_custom_call.1} parent=59 // pred_check
          %p461 = pneg %p69
        $region62: #{tpu_custom_call.1} parent=59 // pred_check_branch
          %463 = sbr.rel (%p461) target = $region64
        $region63: #{tpu_custom_call.1} parent=59 // pred_region
          %464 = dma.done %s457, 128
        $region64: #{tpu_custom_call.1} parent=59 // pred_fallthru
          _
        %s465 = sand.u32 %s34, 1
        %s466 = scalar_lea.sflag [#allocation8], %s465
        %s467 = sand.u32 %s82, 1
        %s468 = smul.addr %s467, 4
        %s469 = scalar_lea.vmem [#allocation7], %s468
        // Predicated region
        $region65: #{tpu_custom_call.1} parent=59 // pred_check
          %p470 = pneg %p95
        $region66: #{tpu_custom_call.1} parent=59 // pred_check_branch
          %472 = sbr.rel (%p470) target = $region68
        $region67: #{tpu_custom_call.1} parent=59 // pred_region
          %473 = dma.done %s466, 64
        $region68: #{tpu_custom_call.1} parent=59 // pred_fallthru
          _
        // Predicated region
        $region69: #{tpu_custom_call.1} parent=59 // pred_check
          %p474 = pneg %p116
        $region70: #{tpu_custom_call.1} parent=59 // pred_check_branch
          %476 = sbr.rel (%p474) target = $region72
        $region71: #{tpu_custom_call.1} parent=59 // pred_region
          %477 = dma.done [#allocation8], 256
        $region72: #{tpu_custom_call.1} parent=59 // pred_fallthru
          _
        // Predicated region
        $region73: #{tpu_custom_call.1} parent=59 // pred_check
          %p478 = pneg %p137
        $region74: #{tpu_custom_call.1} parent=59 // pred_check_branch
          %480 = sbr.rel (%p478) target = $region76
        $region75: #{tpu_custom_call.1} parent=59 // pred_region
          %481 = dma.done [#allocation11], 256
        $region76: #{tpu_custom_call.1} parent=59 // pred_fallthru
          _
        // Predicated region
        $region77: #{tpu_custom_call.1} parent=59 // pred_check
          %p482 = pneg %p158
        $region78: #{tpu_custom_call.1} parent=59 // pred_check_branch
          %484 = sbr.rel (%p482) target = $region80
        $region79: #{tpu_custom_call.1} parent=59 // pred_region
          %485 = dma.done [#allocation11], 256
        $region80: #{tpu_custom_call.1} parent=59 // pred_fallthru
          _
        // Predicated region
        $region81: #{tpu_custom_call.1} parent=59 // pred_check
          %p486 = pneg %p179
        $region82: #{tpu_custom_call.1} parent=59 // pred_check_branch
          %488 = sbr.rel (%p486) target = $region84
        $region83: #{tpu_custom_call.1} parent=59 // pred_region
          %489 = dma.done [#allocation14], 256
        $region84: #{tpu_custom_call.1} parent=59 // pred_fallthru
          _
        // Predicated region
        $region85: #{tpu_custom_call.1} parent=59 // pred_check
          %p490 = pneg %p200
        $region86: #{tpu_custom_call.1} parent=59 // pred_check_branch
          %492 = sbr.rel (%p490) target = $region88
        $region87: #{tpu_custom_call.1} parent=59 // pred_region
          %493 = dma.done [#allocation14], 256
        $region88: #{tpu_custom_call.1} parent=59 // pred_fallthru
          _
        // Predicated region
        $region89: #{tpu_custom_call.1} parent=59 // pred_check
          %p494 = pneg %p221
        $region90: #{tpu_custom_call.1} parent=59 // pred_check_branch
          %496 = sbr.rel (%p494) target = $region92
        $region91: #{tpu_custom_call.1} parent=59 // pred_region
          %497 = dma.done [#allocation17], 16
        $region92: #{tpu_custom_call.1} parent=59 // pred_fallthru
          _
        // Predicated region
        $region93: #{tpu_custom_call.1} parent=59 // pred_check
          %p498 = pneg %p242
        $region94: #{tpu_custom_call.1} parent=59 // pred_check_branch
          %500 = sbr.rel (%p498) target = $region96
        $region95: #{tpu_custom_call.1} parent=59 // pred_region
          %501 = dma.done [#allocation17], 1024
        $region96: #{tpu_custom_call.1} parent=59 // pred_fallthru
          _
        // Predicated region
        $region97: #{tpu_custom_call.1} parent=59 // pred_check
          %p502 = pneg %p263
        $region98: #{tpu_custom_call.1} parent=59 // pred_check_branch
          %504 = sbr.rel (%p502) target = $region100
        $region99: #{tpu_custom_call.1} parent=59 // pred_region
          %505 = dma.done [#allocation20], 256
        $region100: #{tpu_custom_call.1} parent=59 // pred_fallthru
          _
        %s506 = sand.u32 %s56, 1
        %s507 = scalar_lea.sflag [#allocation5], %s506
        %s508 = sand.u32 %s56, 1
        %s509 = smul.addr %s508, 8
        %s510 = scalar_lea.vmem [#allocation4], %s509
        %p511 = pneg %p69
        %p512 = pneg %p66
        %s513 = sand.u32 %s34, 1
        %s514 = scalar_lea.sflag [#allocation8], %s513
        %s515 = sand.u32 %s82, 1
        %s516 = smul.addr %s515, 4
        %s517 = scalar_lea.vmem [#allocation7], %s516
        %p518 = pneg %p95
        %p519 = pneg %p92
        %p520 = pneg %p116
        %p521 = pneg %p113
        %p522 = pneg %p137
        %p523 = pneg %p134
        %p524 = pneg %p158
        %p525 = pneg %p155
        %p526 = pneg %p179
        %p527 = pneg %p176
        %p528 = pneg %p200
        %p529 = pneg %p197
        %p530 = pneg %p221
        %p531 = pneg %p218
        %p532 = pneg %p242
        %p533 = pneg %p239
        %p534 = pneg %p263
        %p535 = pneg %p260
        %p536 = pneg %p291
        %p537 = pneg %p288
        %s538 = sand.u32 %s278, 1
        %s539 = scalar_lea.sflag [#allocation6], %s538
        %s540 = sand.u32 %s278, 1
        %s541 = smul.addr %s540, 8
        %s542 = scalar_lea.vmem [#allocation21], %s541
        %v544 = vld [vmem:[#allocation19] sm:$0xff]
        %v545 = vld [vmem:[#allocation19 + $0x8] sm:$0x1]
        %p546 = scmp.eq.s32.totalorder %s39, 0
        // Predicated region
        $region101: #{tpu_custom_call.1} parent=59 // pred_check
          %p547 = pneg %p546
        $region102: #{tpu_custom_call.1} parent=59 // pred_check_branch
          %549 = sbr.rel (%p547) target = $region104
        $region103: #{tpu_custom_call.1} parent=59 // pred_region
          %v550 = vld [vmem:[%s469] sm:$0xf]
          %v551 = vld [vmem:[#allocation10] sm:$0xf]
          %v552 = vld [vmem:[#allocation10 + $0x4] sm:$0xf]
          %v553 = vld [vmem:[#allocation10 + $0x8] sm:$0xf]
          %v554 = vld [vmem:[#allocation10 + $0xc] sm:$0xf]
          %v555 = vlaneseq
          %v556 = vshrl.u32 %v555, 7
          %v557 = vsub.s32 1, %v556
          %v558 = vrot.slane %v544, %v557
          %v563 = vunpack.c.l.b16 %v551
          %v564 = vunpack.c.l.b16 %v552
          %v565 = vunpack.c.l.b16 %v553
          %v566 = vunpack.c.l.b16 %v554
          %v567 = vpack.c.b16 %v564, %v563
          %v568 = vpack.c.b16 %v566, %v565
          %vm571 = vcmask 261120
          %v573 = vsel %vm571, %v550, 0
          %575 = vmatprep.subr.bf16.mxu0 0
          %576 = vmatpush1.bf16.msra.mxu0 %v567
          %577 = vmatprep.subr.bf16.mxu0 0
          %578 = vmatpush1.bf16.msra.mxu0 %v568
          %579 = vmatprep.subr.bf16.mxu0 0
          %580 = vmatpush1.bf16.msra.mxu0 0
          %581 = vmatprep.subr.bf16.mxu0 0
          %582 = vmatpush1.bf16.msra.mxu0 0
          %583 = vmatprep.subr.bf16.mxu0 0
          %584 = vmatpush1.bf16.msra.mxu0 0
          %585 = vmatprep.subr.bf16.mxu0 0
          %586 = vmatpush1.bf16.msra.mxu0 0
          %587 = vmatprep.subr.bf16.mxu0 0
          %588 = vmatpush1.bf16.msra.mxu0 0
          %589 = vmatprep.subr.bf16.mxu0 0
          %590 = vmatpush1.bf16.msra.mxu0 0
          %591 = vmatprep.subr.bf16.mxu0 0
          %592 = vmatpush1.bf16.msra.mxu0 0
          %593 = vmatprep.subr.bf16.mxu0 0
          %594 = vmatpush1.bf16.msra.mxu0 0
          %595 = vmatprep.subr.bf16.mxu0 0
          %596 = vmatpush1.bf16.msra.mxu0 0
          %597 = vmatprep.subr.bf16.mxu0 0
          %598 = vmatpush1.bf16.msra.mxu0 0
          %599 = vmatprep.subr.bf16.mxu0 0
          %600 = vmatpush1.bf16.msra.mxu0 0
          %601 = vmatprep.subr.bf16.mxu0 0
          %602 = vmatpush1.bf16.msra.mxu0 0
          %603 = vmatprep.subr.bf16.mxu0 0
          %604 = vmatpush1.bf16.msra.mxu0 0
          %605 = vmatprep.subr.bf16.mxu0 0
          %606 = vmatpush1.bf16.msra.mxu0 0
          %607 = vmatprep.mubr.bf16.mxu0 0
          %608 = vmatmul.mubr.bf16.gmra.mrb[0].mxu0 %v573
          %v609 = vpop.f32.mrb[0].mxu0
          %v610 = vadd.f32 %v558, %v609
          %v611 = vpop.f32.mrb[0].mxu0
          %v612 = vpop.f32.mrb[0].mxu0
          %v613 = vpop.f32.mrb[0].mxu0
          %614 = vdwg.mxu0
          %v615 = vpack.c.bf16 %v610, %v610
          %v616 = vld [vmem:[#allocation12] sm:$0xf]
          %v617 = vld [vmem:[#allocation12 + $0x4] sm:$0xf]
          %v618 = vld [vmem:[#allocation12 + $0x8] sm:$0xf]
          %v619 = vld [vmem:[#allocation12 + $0xc] sm:$0xf]
          %v620 = vlaneseq
          %v621 = vshrl.u32 %v620, 7
          %v622 = vsub.s32 2, %v621
          %v623 = vrot.slane %v544, %v622
          %v628 = vunpack.c.l.b16 %v616
          %v629 = vunpack.c.l.b16 %v617
          %v630 = vunpack.c.l.b16 %v618
          %v631 = vunpack.c.l.b16 %v619
          %v632 = vpack.c.b16 %v629, %v628
          %v633 = vpack.c.b16 %v631, %v630
          %636 = vmatprep.subr.bf16.mxu0 0
          %637 = vmatpush1.bf16.msra.mxu0 %v632
          %638 = vmatprep.subr.bf16.mxu0 0
          %639 = vmatpush1.bf16.msra.mxu0 %v633
          %640 = vmatprep.subr.bf16.mxu0 0
          %641 = vmatpush1.bf16.msra.mxu0 0
          %642 = vmatprep.subr.bf16.mxu0 0
          %643 = vmatpush1.bf16.msra.mxu0 0
          %644 = vmatprep.subr.bf16.mxu0 0
          %645 = vmatpush1.bf16.msra.mxu0 0
          %646 = vmatprep.subr.bf16.mxu0 0
          %647 = vmatpush1.bf16.msra.mxu0 0
          %648 = vmatprep.subr.bf16.mxu0 0
          %649 = vmatpush1.bf16.msra.mxu0 0
          %650 = vmatprep.subr.bf16.mxu0 0
          %651 = vmatpush1.bf16.msra.mxu0 0
          %652 = vmatprep.subr.bf16.mxu0 0
          %653 = vmatpush1.bf16.msra.mxu0 0
          %654 = vmatprep.subr.bf16.mxu0 0
          %655 = vmatpush1.bf16.msra.mxu0 0
          %656 = vmatprep.subr.bf16.mxu0 0
          %657 = vmatpush1.bf16.msra.mxu0 0
          %658 = vmatprep.subr.bf16.mxu0 0
          %659 = vmatpush1.bf16.msra.mxu0 0
          %660 = vmatprep.subr.bf16.mxu0 0
          %661 = vmatpush1.bf16.msra.mxu0 0
          %662 = vmatprep.subr.bf16.mxu0 0
          %663 = vmatpush1.bf16.msra.mxu0 0
          %664 = vmatprep.subr.bf16.mxu0 0
          %665 = vmatpush1.bf16.msra.mxu0 0
          %666 = vmatprep.subr.bf16.mxu0 0
          %667 = vmatpush1.bf16.msra.mxu0 0
          %668 = vmatprep.mubr.bf16.mxu0 0
          %669 = vmatmul.mubr.bf16.gmra.mrb[0].mxu0 %v573
          %v670 = vpop.f32.mrb[0].mxu0
          %v671 = vadd.f32 %v623, %v670
          %v672 = vpop.f32.mrb[0].mxu0
          %v673 = vpop.f32.mrb[0].mxu0
          %v674 = vpop.f32.mrb[0].mxu0
          %675 = vdwg.mxu0
          %v676 = vpack.c.bf16 %v671, %v671
          %vm677 = vcmask 60416
          %678 = vst.msk [vmem:[#allocation2] sm:$0xf] %vm677, %v615
          %679 = vst.msk [vmem:[#allocation3] sm:$0xf] %vm677, %v676
          %v681 = vunpack.c.l.b16 %v615
          %v682 = vpack.c.b16 %v681, %v681
          %683 = vrot.lane.b32.xlu0 %v682, 120
          %v684 = vpop.permute.xlu0 %683
          %s686 = scalar_lea.vmem [#allocation2], 4
          %687 = vst.msk [vmem:[%s686] sm:$0xf] %vm677, %v684
          %v689 = vunpack.c.l.b16 %v676
          %v690 = vpack.c.b16 %v689, %v689
          %691 = vrot.lane.b32.xlu0 %v690, 120
          %v692 = vpop.permute.xlu0 %691
          %s694 = scalar_lea.vmem [#allocation3], 4
          %695 = vst.msk [vmem:[%s694] sm:$0xf] %vm677, %v692
          %696 = vrot.lane.b32.xlu0 %v682, 112
          %v697 = vpop.permute.xlu0 %696
          %s699 = scalar_lea.vmem [#allocation2], 8
          %700 = vst.msk [vmem:[%s699] sm:$0xf] %vm677, %v697
          %701 = vrot.lane.b32.xlu0 %v690, 112
          %v702 = vpop.permute.xlu0 %701
          %s704 = scalar_lea.vmem [#allocation3], 8
          %705 = vst.msk [vmem:[%s704] sm:$0xf] %vm677, %v702
          %706 = vrot.lane.b32.xlu0 %v682, 104
          %v707 = vpop.permute.xlu0 %706
          %s709 = scalar_lea.vmem [#allocation2], 12
          %710 = vst.msk [vmem:[%s709] sm:$0xf] %vm677, %v707
          %711 = vrot.lane.b32.xlu0 %v690, 104
          %v712 = vpop.permute.xlu0 %711
          %s714 = scalar_lea.vmem [#allocation3], 12
          %715 = vst.msk [vmem:[%s714] sm:$0xf] %vm677, %v712
        $region104: #{tpu_custom_call.1} parent=59 // pred_fallthru
          _
        %v716 = vld [vmem:[%s460] sm:$0xff]
        %v717 = vpack.c.bf16 %v716, %v716
        %v718 = vld [vmem:[#allocation9] sm:$0xf]
        %v719 = vld [vmem:[#allocation9 + $0x4] sm:$0xf]
        %v720 = vld [vmem:[#allocation9 + $0x8] sm:$0xf]
        %v721 = vld [vmem:[#allocation9 + $0xc] sm:$0xf]
        %v722 = vlaneseq
        %v723 = vshrl.u32 %v722, 7
        %v724 = vsub.s32 0, %v723
        %v725 = vrot.slane %v544, %v724
        %v730 = vunpack.c.l.b16 %v718
        %v731 = vunpack.c.l.b16 %v719
        %v732 = vunpack.c.l.b16 %v720
        %v733 = vunpack.c.l.b16 %v721
        %v734 = vpack.c.b16 %v731, %v730
        %v735 = vpack.c.b16 %v733, %v732
        %vm738 = vcmask 261120
        %v740 = vsel %vm738, %v717, 0
        %742 = vmatprep.subr.bf16.mxu0 0
        %743 = vmatpush1.bf16.msra.mxu0 %v734
        %744 = vmatprep.subr.bf16.mxu0 0
        %745 = vmatpush1.bf16.msra.mxu0 %v735
        %746 = vmatprep.subr.bf16.mxu0 0
        %747 = vmatpush1.bf16.msra.mxu0 0
        %748 = vmatprep.subr.bf16.mxu0 0
        %749 = vmatpush1.bf16.msra.mxu0 0
        %750 = vmatprep.subr.bf16.mxu0 0
        %751 = vmatpush1.bf16.msra.mxu0 0
        %752 = vmatprep.subr.bf16.mxu0 0
        %753 = vmatpush1.bf16.msra.mxu0 0
        %754 = vmatprep.subr.bf16.mxu0 0
        %755 = vmatpush1.bf16.msra.mxu0 0
        %756 = vmatprep.subr.bf16.mxu0 0
        %757 = vmatpush1.bf16.msra.mxu0 0
        %758 = vmatprep.subr.bf16.mxu0 0
        %759 = vmatpush1.bf16.msra.mxu0 0
        %760 = vmatprep.subr.bf16.mxu0 0
        %761 = vmatpush1.bf16.msra.mxu0 0
        %762 = vmatprep.subr.bf16.mxu0 0
        %763 = vmatpush1.bf16.msra.mxu0 0
        %764 = vmatprep.subr.bf16.mxu0 0
        %765 = vmatpush1.bf16.msra.mxu0 0
        %766 = vmatprep.subr.bf16.mxu0 0
        %767 = vmatpush1.bf16.msra.mxu0 0
        %768 = vmatprep.subr.bf16.mxu0 0
        %769 = vmatpush1.bf16.msra.mxu0 0
        %770 = vmatprep.subr.bf16.mxu0 0
        %771 = vmatpush1.bf16.msra.mxu0 0
        %772 = vmatprep.subr.bf16.mxu0 0
        %773 = vmatpush1.bf16.msra.mxu0 0
        %774 = vmatprep.mubr.bf16.mxu0 0
        %775 = vmatmul.mubr.bf16.gmra.mrb[0].mxu0 %v740
        %v776 = vpop.f32.mrb[0].mxu0
        %v777 = vadd.f32 %v725, %v776
        %v778 = vpop.f32.mrb[0].mxu0
        %v779 = vpop.f32.mrb[0].mxu0
        %v780 = vpop.f32.mrb[0].mxu0
        %781 = vdwg.mxu0
        %v782 = vpack.c.bf16 %v777, %v777
        %v783 = vld [vmem:[#allocation2] sm:$0xf]
        %v784 = vld [vmem:[#allocation3] sm:$0xf]
        %vm785 = vcmask 64512
        %v787 = vsel %vm785, %v782, 0
        %v790 = vsel %vm785, %v783, 0
        %792 = vmatprep.subr.bf16.mxu0 0
        %793 = vmatpush1.bf16.xpose.msra.mxu0 %v790
        %794 = vmatprep.subr.bf16.mxu0 0
        %795 = vmatpush1.bf16.xpose.msra.mxu0 0
        %796 = vmatprep.subr.bf16.mxu0 0
        %797 = vmatpush1.bf16.xpose.msra.mxu0 0
        %798 = vmatprep.subr.bf16.mxu0 0
        %799 = vmatpush1.bf16.xpose.msra.mxu0 0
        %800 = vmatprep.subr.bf16.mxu0 0
        %801 = vmatpush1.bf16.xpose.msra.mxu0 0
        %802 = vmatprep.subr.bf16.mxu0 0
        %803 = vmatpush1.bf16.xpose.msra.mxu0 0
        %804 = vmatprep.subr.bf16.mxu0 0
        %805 = vmatpush1.bf16.xpose.msra.mxu0 0
        %806 = vmatprep.subr.bf16.mxu0 0
        %807 = vmatpush1.bf16.xpose.msra.mxu0 0
        %808 = vmatprep.subr.bf16.mxu0 0
        %809 = vmatpush1.bf16.xpose.msra.mxu0 0
        %810 = vmatprep.subr.bf16.mxu0 0
        %811 = vmatpush1.bf16.xpose.msra.mxu0 0
        %812 = vmatprep.subr.bf16.mxu0 0
        %813 = vmatpush1.bf16.xpose.msra.mxu0 0
        %814 = vmatprep.subr.bf16.mxu0 0
        %815 = vmatpush1.bf16.xpose.msra.mxu0 0
        %816 = vmatprep.subr.bf16.mxu0 0
        %817 = vmatpush1.bf16.xpose.msra.mxu0 0
        %818 = vmatprep.subr.bf16.mxu0 0
        %819 = vmatpush1.bf16.xpose.msra.mxu0 0
        %820 = vmatprep.subr.bf16.mxu0 0
        %821 = vmatpush1.bf16.xpose.msra.mxu0 0
        %822 = vmatprep.subr.bf16.mxu0 0
        %823 = vmatpush1.bf16.xpose.msra.mxu0 0
        %824 = vmatprep.mubr.bf16.mxu0 0
        %825 = vmatmul.mubr.bf16.gmra.mrb[0].mxu0 %v787
        %v826 = vpop.f32.mrb[0].mxu0
        %v827 = vadd.f32 0.0, %v826
        %v828 = vpop.f32.mrb[0].mxu0
        %v829 = vpop.f32.mrb[0].mxu0
        %v830 = vpop.f32.mrb[0].mxu0
        %831 = vdwg.mxu0
        %v832 = vsel %vm785, %v827, -inf
        %833 = vmax.xlane.f32.xlu0 %v832
        %v834 = vpop.xlane.xlu0 %833
        %v835 = vsub.f32 %v827, %v834
        %v836 = vmul.f32 %v835, 1.442695
        %v837 = vpow.pop %v836
        %v838 = vsel %vm785, %v837, 0.0
        %839 = vadd.xlane.f32.xlu0 %v838
        %v840 = vpop.xlane.xlu0 %839
        %v841 = vrcp.pop %v840
        %v842 = vpack.c.bf16 %v837, %v837
        %v844 = vsel %vm785, %v842, 0
        %vm846 = vcmask 1043456
        %v848 = vsel %vm846, %v784, 0
        %850 = vmatprep.subr.bf16.mxu0 0
        %851 = vmatpush1.bf16.msra.mxu0 %v848
        %852 = vmatprep.subr.bf16.mxu0 0
        %853 = vmatpush1.bf16.msra.mxu0 0
        %854 = vmatprep.subr.bf16.mxu0 0
        %855 = vmatpush1.bf16.msra.mxu0 0
        %856 = vmatprep.subr.bf16.mxu0 0
        %857 = vmatpush1.bf16.msra.mxu0 0
        %858 = vmatprep.subr.bf16.mxu0 0
        %859 = vmatpush1.bf16.msra.mxu0 0
        %860 = vmatprep.subr.bf16.mxu0 0
        %861 = vmatpush1.bf16.msra.mxu0 0
        %862 = vmatprep.subr.bf16.mxu0 0
        %863 = vmatpush1.bf16.msra.mxu0 0
        %864 = vmatprep.subr.bf16.mxu0 0
        %865 = vmatpush1.bf16.msra.mxu0 0
        %866 = vmatprep.subr.bf16.mxu0 0
        %867 = vmatpush1.bf16.msra.mxu0 0
        %868 = vmatprep.subr.bf16.mxu0 0
        %869 = vmatpush1.bf16.msra.mxu0 0
        %870 = vmatprep.subr.bf16.mxu0 0
        %871 = vmatpush1.bf16.msra.mxu0 0
        %872 = vmatprep.subr.bf16.mxu0 0
        %873 = vmatpush1.bf16.msra.mxu0 0
        %874 = vmatprep.subr.bf16.mxu0 0
        %875 = vmatpush1.bf16.msra.mxu0 0
        %876 = vmatprep.subr.bf16.mxu0 0
        %877 = vmatpush1.bf16.msra.mxu0 0
        %878 = vmatprep.subr.bf16.mxu0 0
        %879 = vmatpush1.bf16.msra.mxu0 0
        %880 = vmatprep.subr.bf16.mxu0 0
        %881 = vmatpush1.bf16.msra.mxu0 0
        %882 = vmatprep.mubr.bf16.mxu0 0
        %883 = vmatmul.mubr.bf16.gmra.mrb[0].mxu0 %v844
        %v884 = vpop.f32.mrb[0].mxu0
        %v885 = vadd.f32 0.0, %v884
        %v886 = vpop.f32.mrb[0].mxu0
        %v887 = vpop.f32.mrb[0].mxu0
        %v888 = vpop.f32.mrb[0].mxu0
        %889 = vdwg.mxu0
        %v890 = vmul.f32 %v885, %v841
        %v891 = vpack.c.bf16 %v890, %v890
        %v892 = vld [vmem:[#allocation13] sm:$0xf]
        %s893 = scalar_lea.vmem [#allocation2], 4
        %v894 = vld [vmem:[%s893] sm:$0xf]
        %s895 = scalar_lea.vmem [#allocation3], 4
        %v896 = vld [vmem:[%s895] sm:$0xf]
        %898 = vrot.lane.b32.xlu0 %v782, 120
        %v899 = vpop.permute.xlu0 %898
        %v901 = vsel %vm785, %v899, 0
        %v904 = vsel %vm785, %v894, 0
        %906 = vmatprep.subr.bf16.mxu0 0
        %907 = vmatpush1.bf16.xpose.msra.mxu0 %v904
        %908 = vmatprep.subr.bf16.mxu0 0
        %909 = vmatpush1.bf16.xpose.msra.mxu0 0
        %910 = vmatprep.subr.bf16.mxu0 0
        %911 = vmatpush1.bf16.xpose.msra.mxu0 0
        %912 = vmatprep.subr.bf16.mxu0 0
        %913 = vmatpush1.bf16.xpose.msra.mxu0 0
        %914 = vmatprep.subr.bf16.mxu0 0
        %915 = vmatpush1.bf16.xpose.msra.mxu0 0
        %916 = vmatprep.subr.bf16.mxu0 0
        %917 = vmatpush1.bf16.xpose.msra.mxu0 0
        %918 = vmatprep.subr.bf16.mxu0 0
        %919 = vmatpush1.bf16.xpose.msra.mxu0 0
        %920 = vmatprep.subr.bf16.mxu0 0
        %921 = vmatpush1.bf16.xpose.msra.mxu0 0
        %922 = vmatprep.subr.bf16.mxu0 0
        %923 = vmatpush1.bf16.xpose.msra.mxu0 0
        %924 = vmatprep.subr.bf16.mxu0 0
        %925 = vmatpush1.bf16.xpose.msra.mxu0 0
        %926 = vmatprep.subr.bf16.mxu0 0
        %927 = vmatpush1.bf16.xpose.msra.mxu0 0
        %928 = vmatprep.subr.bf16.mxu0 0
        %929 = vmatpush1.bf16.xpose.msra.mxu0 0
        %930 = vmatprep.subr.bf16.mxu0 0
        %931 = vmatpush1.bf16.xpose.msra.mxu0 0
        %932 = vmatprep.subr.bf16.mxu0 0
        %933 = vmatpush1.bf16.xpose.msra.mxu0 0
        %934 = vmatprep.subr.bf16.mxu0 0
        %935 = vmatpush1.bf16.xpose.msra.mxu0 0
        %936 = vmatprep.subr.bf16.mxu0 0
        %937 = vmatpush1.bf16.xpose.msra.mxu0 0
        %938 = vmatprep.mubr.bf16.mxu0 0
        %939 = vmatmul.mubr.bf16.gmra.mrb[0].mxu0 %v901
        %v940 = vpop.f32.mrb[0].mxu0
        %v941 = vadd.f32 0.0, %v940
        %v942 = vpop.f32.mrb[0].mxu0
        %v943 = vpop.f32.mrb[0].mxu0
        %v944 = vpop.f32.mrb[0].mxu0
        %945 = vdwg.mxu0
        %v946 = vsel %vm785, %v941, -inf
        %947 = vmax.xlane.f32.xlu0 %v946
        %v948 = vpop.xlane.xlu0 %947
        %v949 = vsub.f32 %v941, %v948
        %v950 = vmul.f32 %v949, 1.442695
        %v951 = vpow.pop %v950
        %v952 = vsel %vm785, %v951, 0.0
        %953 = vadd.xlane.f32.xlu0 %v952
        %v954 = vpop.xlane.xlu0 %953
        %v955 = vrcp.pop %v954
        %v956 = vpack.c.bf16 %v951, %v951
        %v958 = vsel %vm785, %v956, 0
        %v961 = vsel %vm846, %v896, 0
        %963 = vmatprep.subr.bf16.mxu0 0
        %964 = vmatpush1.bf16.msra.mxu0 %v961
        %965 = vmatprep.subr.bf16.mxu0 0
        %966 = vmatpush1.bf16.msra.mxu0 0
        %967 = vmatprep.subr.bf16.mxu0 0
        %968 = vmatpush1.bf16.msra.mxu0 0
        %969 = vmatprep.subr.bf16.mxu0 0
        %970 = vmatpush1.bf16.msra.mxu0 0
        %971 = vmatprep.subr.bf16.mxu0 0
        %972 = vmatpush1.bf16.msra.mxu0 0
        %973 = vmatprep.subr.bf16.mxu0 0
        %974 = vmatpush1.bf16.msra.mxu0 0
        %975 = vmatprep.subr.bf16.mxu0 0
        %976 = vmatpush1.bf16.msra.mxu0 0
        %977 = vmatprep.subr.bf16.mxu0 0
        %978 = vmatpush1.bf16.msra.mxu0 0
        %979 = vmatprep.subr.bf16.mxu0 0
        %980 = vmatpush1.bf16.msra.mxu0 0
        %981 = vmatprep.subr.bf16.mxu0 0
        %982 = vmatpush1.bf16.msra.mxu0 0
        %983 = vmatprep.subr.bf16.mxu0 0
        %984 = vmatpush1.bf16.msra.mxu0 0
        %985 = vmatprep.subr.bf16.mxu0 0
        %986 = vmatpush1.bf16.msra.mxu0 0
        %987 = vmatprep.subr.bf16.mxu0 0
        %988 = vmatpush1.bf16.msra.mxu0 0
        %989 = vmatprep.subr.bf16.mxu0 0
        %990 = vmatpush1.bf16.msra.mxu0 0
        %991 = vmatprep.subr.bf16.mxu0 0
        %992 = vmatpush1.bf16.msra.mxu0 0
        %993 = vmatprep.subr.bf16.mxu0 0
        %994 = vmatpush1.bf16.msra.mxu0 0
        %995 = vmatprep.mubr.bf16.mxu0 0
        %996 = vmatmul.mubr.bf16.gmra.mrb[0].mxu0 %v958
        %v997 = vpop.f32.mrb[0].mxu0
        %v998 = vadd.f32 0.0, %v997
        %v999 = vpop.f32.mrb[0].mxu0
        %v1000 = vpop.f32.mrb[0].mxu0
        %v1001 = vpop.f32.mrb[0].mxu0
        %1002 = vdwg.mxu0
        %v1003 = vmul.f32 %v998, %v955
        %v1004 = vpack.c.bf16 %v1003, %v1003
        %v1005 = vld [vmem:[#allocation13 + $0x4] sm:$0xf]
        %v1007 = vsel %vm785, %v1004, 0
        %v1010 = vsel %vm846, %v1005, 0
        %1012 = vmatprep.subr.bf16.mxu0 0
        %1013 = vmatpush1.bf16.msra.mxu0 %v1010
        %1014 = vmatprep.subr.bf16.mxu0 0
        %1015 = vmatpush1.bf16.msra.mxu0 0
        %1016 = vmatprep.subr.bf16.mxu0 0
        %1017 = vmatpush1.bf16.msra.mxu0 0
        %1018 = vmatprep.subr.bf16.mxu0 0
        %1019 = vmatpush1.bf16.msra.mxu0 0
        %1020 = vmatprep.subr.bf16.mxu0 0
        %1021 = vmatpush1.bf16.msra.mxu0 0
        %1022 = vmatprep.subr.bf16.mxu0 0
        %1023 = vmatpush1.bf16.msra.mxu0 0
        %1024 = vmatprep.subr.bf16.mxu0 0
        %1025 = vmatpush1.bf16.msra.mxu0 0
        %1026 = vmatprep.subr.bf16.mxu0 0
        %1027 = vmatpush1.bf16.msra.mxu0 0
        %1028 = vmatprep.subr.bf16.mxu0 0
        %1029 = vmatpush1.bf16.msra.mxu0 0
        %1030 = vmatprep.subr.bf16.mxu0 0
        %1031 = vmatpush1.bf16.msra.mxu0 0
        %1032 = vmatprep.subr.bf16.mxu0 0
        %1033 = vmatpush1.bf16.msra.mxu0 0
        %1034 = vmatprep.subr.bf16.mxu0 0
        %1035 = vmatpush1.bf16.msra.mxu0 0
        %1036 = vmatprep.subr.bf16.mxu0 0
        %1037 = vmatpush1.bf16.msra.mxu0 0
        %1038 = vmatprep.subr.bf16.mxu0 0
        %1039 = vmatpush1.bf16.msra.mxu0 0
        %1040 = vmatprep.subr.bf16.mxu0 0
        %1041 = vmatpush1.bf16.msra.mxu0 0
        %1042 = vmatprep.subr.bf16.mxu0 0
        %1043 = vmatpush1.bf16.msra.mxu0 0
        %1044 = vmatprep.mubr.bf16.mxu0 0
        %1045 = vmatmul.mubr.bf16.gmra.mrb[0].mxu0 %v1007
        %v1046 = vpop.f32.mrb[0].mxu0
        %v1047 = vadd.f32 0.0, %v1046
        %v1048 = vpop.f32.mrb[0].mxu0
        %v1049 = vpop.f32.mrb[0].mxu0
        %v1050 = vpop.f32.mrb[0].mxu0
        %1051 = vdwg.mxu0
        %v1053 = vsel %vm785, %v891, 0
        %v1056 = vsel %vm846, %v892, 0
        %1058 = vmatprep.subr.bf16.mxu0 0
        %1059 = vmatpush1.bf16.msra.mxu0 %v1056
        %1060 = vmatprep.subr.bf16.mxu0 0
        %1061 = vmatpush1.bf16.msra.mxu0 0
        %1062 = vmatprep.subr.bf16.mxu0 0
        %1063 = vmatpush1.bf16.msra.mxu0 0
        %1064 = vmatprep.subr.bf16.mxu0 0
        %1065 = vmatpush1.bf16.msra.mxu0 0
        %1066 = vmatprep.subr.bf16.mxu0 0
        %1067 = vmatpush1.bf16.msra.mxu0 0
        %1068 = vmatprep.subr.bf16.mxu0 0
        %1069 = vmatpush1.bf16.msra.mxu0 0
        %1070 = vmatprep.subr.bf16.mxu0 0
        %1071 = vmatpush1.bf16.msra.mxu0 0
        %1072 = vmatprep.subr.bf16.mxu0 0
        %1073 = vmatpush1.bf16.msra.mxu0 0
        %1074 = vmatprep.subr.bf16.mxu0 0
        %1075 = vmatpush1.bf16.msra.mxu0 0
        %1076 = vmatprep.subr.bf16.mxu0 0
        %1077 = vmatpush1.bf16.msra.mxu0 0
        %1078 = vmatprep.subr.bf16.mxu0 0
        %1079 = vmatpush1.bf16.msra.mxu0 0
        %1080 = vmatprep.subr.bf16.mxu0 0
        %1081 = vmatpush1.bf16.msra.mxu0 0
        %1082 = vmatprep.subr.bf16.mxu0 0
        %1083 = vmatpush1.bf16.msra.mxu0 0
        %1084 = vmatprep.subr.bf16.mxu0 0
        %1085 = vmatpush1.bf16.msra.mxu0 0
        %1086 = vmatprep.subr.bf16.mxu0 0
        %1087 = vmatpush1.bf16.msra.mxu0 0
        %1088 = vmatprep.subr.bf16.mxu0 0
        %1089 = vmatpush1.bf16.msra.mxu0 0
        %1090 = vmatprep.mubr.bf16.mxu0 0
        %1091 = vmatmul.mubr.bf16.gmra.mrb[0].mxu0 %v1053
        %v1092 = vpop.f32.mrb[0].mxu0
        %v1093 = vadd.f32 %v1047, %v1092
        %v1094 = vpop.f32.mrb[0].mxu0
        %v1095 = vpop.f32.mrb[0].mxu0
        %v1096 = vpop.f32.mrb[0].mxu0
        %1097 = vdwg.mxu0
        %s1098 = scalar_lea.vmem [#allocation2], 8
        %v1099 = vld [vmem:[%s1098] sm:$0xf]
        %s1100 = scalar_lea.vmem [#allocation3], 8
        %v1101 = vld [vmem:[%s1100] sm:$0xf]
        %1102 = vrot.lane.b32.xlu0 %v782, 112
        %v1103 = vpop.permute.xlu0 %1102
        %v1105 = vsel %vm785, %v1103, 0
        %v1108 = vsel %vm785, %v1099, 0
        %1110 = vmatprep.subr.bf16.mxu0 0
        %1111 = vmatpush1.bf16.xpose.msra.mxu0 %v1108
        %1112 = vmatprep.subr.bf16.mxu0 0
        %1113 = vmatpush1.bf16.xpose.msra.mxu0 0
        %1114 = vmatprep.subr.bf16.mxu0 0
        %1115 = vmatpush1.bf16.xpose.msra.mxu0 0
        %1116 = vmatprep.subr.bf16.mxu0 0
        %1117 = vmatpush1.bf16.xpose.msra.mxu0 0
        %1118 = vmatprep.subr.bf16.mxu0 0
        %1119 = vmatpush1.bf16.xpose.msra.mxu0 0
        %1120 = vmatprep.subr.bf16.mxu0 0
        %1121 = vmatpush1.bf16.xpose.msra.mxu0 0
        %1122 = vmatprep.subr.bf16.mxu0 0
        %1123 = vmatpush1.bf16.xpose.msra.mxu0 0
        %1124 = vmatprep.subr.bf16.mxu0 0
        %1125 = vmatpush1.bf16.xpose.msra.mxu0 0
        %1126 = vmatprep.subr.bf16.mxu0 0
        %1127 = vmatpush1.bf16.xpose.msra.mxu0 0
        %1128 = vmatprep.subr.bf16.mxu0 0
        %1129 = vmatpush1.bf16.xpose.msra.mxu0 0
        %1130 = vmatprep.subr.bf16.mxu0 0
        %1131 = vmatpush1.bf16.xpose.msra.mxu0 0
        %1132 = vmatprep.subr.bf16.mxu0 0
        %1133 = vmatpush1.bf16.xpose.msra.mxu0 0
        %1134 = vmatprep.subr.bf16.mxu0 0
        %1135 = vmatpush1.bf16.xpose.msra.mxu0 0
        %1136 = vmatprep.subr.bf16.mxu0 0
        %1137 = vmatpush1.bf16.xpose.msra.mxu0 0
        %1138 = vmatprep.subr.bf16.mxu0 0
        %1139 = vmatpush1.bf16.xpose.msra.mxu0 0
        %1140 = vmatprep.subr.bf16.mxu0 0
        %1141 = vmatpush1.bf16.xpose.msra.mxu0 0
        %1142 = vmatprep.mubr.bf16.mxu0 0
        %1143 = vmatmul.mubr.bf16.gmra.mrb[0].mxu0 %v1105
        %v1144 = vpop.f32.mrb[0].mxu0
        %v1145 = vadd.f32 0.0, %v1144
        %v1146 = vpop.f32.mrb[0].mxu0
        %v1147 = vpop.f32.mrb[0].mxu0
        %v1148 = vpop.f32.mrb[0].mxu0
        %1149 = vdwg.mxu0
        %v1150 = vsel %vm785, %v1145, -inf
        %1151 = vmax.xlane.f32.xlu0 %v1150
        %v1152 = vpop.xlane.xlu0 %1151
        %v1153 = vsub.f32 %v1145, %v1152
        %v1154 = vmul.f32 %v1153, 1.442695
        %v1155 = vpow.pop %v1154
        %v1156 = vsel %vm785, %v1155, 0.0
        %1157 = vadd.xlane.f32.xlu0 %v1156
        %v1158 = vpop.xlane.xlu0 %1157
        %v1159 = vrcp.pop %v1158
        %v1160 = vpack.c.bf16 %v1155, %v1155
        %v1162 = vsel %vm785, %v1160, 0
        %v1165 = vsel %vm846, %v1101, 0
        %1167 = vmatprep.subr.bf16.mxu0 0
        %1168 = vmatpush1.bf16.msra.mxu0 %v1165
        %1169 = vmatprep.subr.bf16.mxu0 0
        %1170 = vmatpush1.bf16.msra.mxu0 0
        %1171 = vmatprep.subr.bf16.mxu0 0
        %1172 = vmatpush1.bf16.msra.mxu0 0
        %1173 = vmatprep.subr.bf16.mxu0 0
        %1174 = vmatpush1.bf16.msra.mxu0 0
        %1175 = vmatprep.subr.bf16.mxu0 0
        %1176 = vmatpush1.bf16.msra.mxu0 0
        %1177 = vmatprep.subr.bf16.mxu0 0
        %1178 = vmatpush1.bf16.msra.mxu0 0
        %1179 = vmatprep.subr.bf16.mxu0 0
        %1180 = vmatpush1.bf16.msra.mxu0 0
        %1181 = vmatprep.subr.bf16.mxu0 0
        %1182 = vmatpush1.bf16.msra.mxu0 0
        %1183 = vmatprep.subr.bf16.mxu0 0
        %1184 = vmatpush1.bf16.msra.mxu0 0
        %1185 = vmatprep.subr.bf16.mxu0 0
        %1186 = vmatpush1.bf16.msra.mxu0 0
        %1187 = vmatprep.subr.bf16.mxu0 0
        %1188 = vmatpush1.bf16.msra.mxu0 0
        %1189 = vmatprep.subr.bf16.mxu0 0
        %1190 = vmatpush1.bf16.msra.mxu0 0
        %1191 = vmatprep.subr.bf16.mxu0 0
        %1192 = vmatpush1.bf16.msra.mxu0 0
        %1193 = vmatprep.subr.bf16.mxu0 0
        %1194 = vmatpush1.bf16.msra.mxu0 0
        %1195 = vmatprep.subr.bf16.mxu0 0
        %1196 = vmatpush1.bf16.msra.mxu0 0
        %1197 = vmatprep.subr.bf16.mxu0 0
        %1198 = vmatpush1.bf16.msra.mxu0 0
        %1199 = vmatprep.mubr.bf16.mxu0 0
        %1200 = vmatmul.mubr.bf16.gmra.mrb[0].mxu0 %v1162
        %v1201 = vpop.f32.mrb[0].mxu0
        %v1202 = vadd.f32 0.0, %v1201
        %v1203 = vpop.f32.mrb[0].mxu0
        %v1204 = vpop.f32.mrb[0].mxu0
        %v1205 = vpop.f32.mrb[0].mxu0
        %1206 = vdwg.mxu0
        %v1207 = vmul.f32 %v1202, %v1159
        %v1208 = vpack.c.bf16 %v1207, %v1207
        %v1209 = vld [vmem:[#allocation13 + $0x8] sm:$0xf]
        %v1211 = vsel %vm785, %v1208, 0
        %v1214 = vsel %vm846, %v1209, 0
        %1216 = vmatprep.subr.bf16.mxu0 0
        %1217 = vmatpush1.bf16.msra.mxu0 %v1214
        %1218 = vmatprep.subr.bf16.mxu0 0
        %1219 = vmatpush1.bf16.msra.mxu0 0
        %1220 = vmatprep.subr.bf16.mxu0 0
        %1221 = vmatpush1.bf16.msra.mxu0 0
        %1222 = vmatprep.subr.bf16.mxu0 0
        %1223 = vmatpush1.bf16.msra.mxu0 0
        %1224 = vmatprep.subr.bf16.mxu0 0
        %1225 = vmatpush1.bf16.msra.mxu0 0
        %1226 = vmatprep.subr.bf16.mxu0 0
        %1227 = vmatpush1.bf16.msra.mxu0 0
        %1228 = vmatprep.subr.bf16.mxu0 0
        %1229 = vmatpush1.bf16.msra.mxu0 0
        %1230 = vmatprep.subr.bf16.mxu0 0
        %1231 = vmatpush1.bf16.msra.mxu0 0
        %1232 = vmatprep.subr.bf16.mxu0 0
        %1233 = vmatpush1.bf16.msra.mxu0 0
        %1234 = vmatprep.subr.bf16.mxu0 0
        %1235 = vmatpush1.bf16.msra.mxu0 0
        %1236 = vmatprep.subr.bf16.mxu0 0
        %1237 = vmatpush1.bf16.msra.mxu0 0
        %1238 = vmatprep.subr.bf16.mxu0 0
        %1239 = vmatpush1.bf16.msra.mxu0 0
        %1240 = vmatprep.subr.bf16.mxu0 0
        %1241 = vmatpush1.bf16.msra.mxu0 0
        %1242 = vmatprep.subr.bf16.mxu0 0
        %1243 = vmatpush1.bf16.msra.mxu0 0
        %1244 = vmatprep.subr.bf16.mxu0 0
        %1245 = vmatpush1.bf16.msra.mxu0 0
        %1246 = vmatprep.subr.bf16.mxu0 0
        %1247 = vmatpush1.bf16.msra.mxu0 0
        %1248 = vmatprep.mubr.bf16.mxu0 0
        %1249 = vmatmul.mubr.bf16.gmra.mrb[0].mxu0 %v1211
        %v1250 = vpop.f32.mrb[0].mxu0
        %v1251 = vadd.f32 0.0, %v1250
        %v1252 = vpop.f32.mrb[0].mxu0
        %v1253 = vpop.f32.mrb[0].mxu0
        %v1254 = vpop.f32.mrb[0].mxu0
        %1255 = vdwg.mxu0
        %v1256 = vadd.f32 %v1093, %v1251
        %s1257 = scalar_lea.vmem [#allocation2], 12
        %v1258 = vld [vmem:[%s1257] sm:$0xf]
        %s1259 = scalar_lea.vmem [#allocation3], 12
        %v1260 = vld [vmem:[%s1259] sm:$0xf]
        %1261 = vrot.lane.b32.xlu0 %v782, 104
        %v1262 = vpop.permute.xlu0 %1261
        %v1264 = vsel %vm785, %v1262, 0
        %v1267 = vsel %vm785, %v1258, 0
        %1269 = vmatprep.subr.bf16.mxu0 0
        %1270 = vmatpush1.bf16.xpose.msra.mxu0 %v1267
        %1271 = vmatprep.subr.bf16.mxu0 0
        %1272 = vmatpush1.bf16.xpose.msra.mxu0 0
        %1273 = vmatprep.subr.bf16.mxu0 0
        %1274 = vmatpush1.bf16.xpose.msra.mxu0 0
        %1275 = vmatprep.subr.bf16.mxu0 0
        %1276 = vmatpush1.bf16.xpose.msra.mxu0 0
        %1277 = vmatprep.subr.bf16.mxu0 0
        %1278 = vmatpush1.bf16.xpose.msra.mxu0 0
        %1279 = vmatprep.subr.bf16.mxu0 0
        %1280 = vmatpush1.bf16.xpose.msra.mxu0 0
        %1281 = vmatprep.subr.bf16.mxu0 0
        %1282 = vmatpush1.bf16.xpose.msra.mxu0 0
        %1283 = vmatprep.subr.bf16.mxu0 0
        %1284 = vmatpush1.bf16.xpose.msra.mxu0 0
        %1285 = vmatprep.subr.bf16.mxu0 0
        %1286 = vmatpush1.bf16.xpose.msra.mxu0 0
        %1287 = vmatprep.subr.bf16.mxu0 0
        %1288 = vmatpush1.bf16.xpose.msra.mxu0 0
        %1289 = vmatprep.subr.bf16.mxu0 0
        %1290 = vmatpush1.bf16.xpose.msra.mxu0 0
        %1291 = vmatprep.subr.bf16.mxu0 0
        %1292 = vmatpush1.bf16.xpose.msra.mxu0 0
        %1293 = vmatprep.subr.bf16.mxu0 0
        %1294 = vmatpush1.bf16.xpose.msra.mxu0 0
        %1295 = vmatprep.subr.bf16.mxu0 0
        %1296 = vmatpush1.bf16.xpose.msra.mxu0 0
        %1297 = vmatprep.subr.bf16.mxu0 0
        %1298 = vmatpush1.bf16.xpose.msra.mxu0 0
        %1299 = vmatprep.subr.bf16.mxu0 0
        %1300 = vmatpush1.bf16.xpose.msra.mxu0 0
        %1301 = vmatprep.mubr.bf16.mxu0 0
        %1302 = vmatmul.mubr.bf16.gmra.mrb[0].mxu0 %v1264
        %v1303 = vpop.f32.mrb[0].mxu0
        %v1304 = vadd.f32 0.0, %v1303
        %v1305 = vpop.f32.mrb[0].mxu0
        %v1306 = vpop.f32.mrb[0].mxu0
        %v1307 = vpop.f32.mrb[0].mxu0
        %1308 = vdwg.mxu0
        %v1309 = vsel %vm785, %v1304, -inf
        %1310 = vmax.xlane.f32.xlu0 %v1309
        %v1311 = vpop.xlane.xlu0 %1310
        %v1312 = vsub.f32 %v1304, %v1311
        %v1313 = vmul.f32 %v1312, 1.442695
        %v1314 = vpow.pop %v1313
        %v1315 = vsel %vm785, %v1314, 0.0
        %1316 = vadd.xlane.f32.xlu0 %v1315
        %v1317 = vpop.xlane.xlu0 %1316
        %v1318 = vrcp.pop %v1317
        %v1319 = vpack.c.bf16 %v1314, %v1314
        %v1321 = vsel %vm785, %v1319, 0
        %v1324 = vsel %vm846, %v1260, 0
        %1326 = vmatprep.subr.bf16.mxu0 0
        %1327 = vmatpush1.bf16.msra.mxu0 %v1324
        %1328 = vmatprep.subr.bf16.mxu0 0
        %1329 = vmatpush1.bf16.msra.mxu0 0
        %1330 = vmatprep.subr.bf16.mxu0 0
        %1331 = vmatpush1.bf16.msra.mxu0 0
        %1332 = vmatprep.subr.bf16.mxu0 0
        %1333 = vmatpush1.bf16.msra.mxu0 0
        %1334 = vmatprep.subr.bf16.mxu0 0
        %1335 = vmatpush1.bf16.msra.mxu0 0
        %1336 = vmatprep.subr.bf16.mxu0 0
        %1337 = vmatpush1.bf16.msra.mxu0 0
        %1338 = vmatprep.subr.bf16.mxu0 0
        %1339 = vmatpush1.bf16.msra.mxu0 0
        %1340 = vmatprep.subr.bf16.mxu0 0
        %1341 = vmatpush1.bf16.msra.mxu0 0
        %1342 = vmatprep.subr.bf16.mxu0 0
        %1343 = vmatpush1.bf16.msra.mxu0 0
        %1344 = vmatprep.subr.bf16.mxu0 0
        %1345 = vmatpush1.bf16.msra.mxu0 0
        %1346 = vmatprep.subr.bf16.mxu0 0
        %1347 = vmatpush1.bf16.msra.mxu0 0
        %1348 = vmatprep.subr.bf16.mxu0 0
        %1349 = vmatpush1.bf16.msra.mxu0 0
        %1350 = vmatprep.subr.bf16.mxu0 0
        %1351 = vmatpush1.bf16.msra.mxu0 0
        %1352 = vmatprep.subr.bf16.mxu0 0
        %1353 = vmatpush1.bf16.msra.mxu0 0
        %1354 = vmatprep.subr.bf16.mxu0 0
        %1355 = vmatpush1.bf16.msra.mxu0 0
        %1356 = vmatprep.subr.bf16.mxu0 0
        %1357 = vmatpush1.bf16.msra.mxu0 0
        %1358 = vmatprep.mubr.bf16.mxu0 0
        %1359 = vmatmul.mubr.bf16.gmra.mrb[0].mxu0 %v1321
        %v1360 = vpop.f32.mrb[0].mxu0
        %v1361 = vadd.f32 0.0, %v1360
        %v1362 = vpop.f32.mrb[0].mxu0
        %v1363 = vpop.f32.mrb[0].mxu0
        %v1364 = vpop.f32.mrb[0].mxu0
        %1365 = vdwg.mxu0
        %v1366 = vmul.f32 %v1361, %v1318
        %v1367 = vpack.c.bf16 %v1366, %v1366
        %v1368 = vld [vmem:[#allocation13 + $0xc] sm:$0xf]
        %v1370 = vsel %vm785, %v1367, 0
        %v1373 = vsel %vm846, %v1368, 0
        %1375 = vmatprep.subr.bf16.mxu0 0
        %1376 = vmatpush1.bf16.msra.mxu0 %v1373
        %1377 = vmatprep.subr.bf16.mxu0 0
        %1378 = vmatpush1.bf16.msra.mxu0 0
        %1379 = vmatprep.subr.bf16.mxu0 0
        %1380 = vmatpush1.bf16.msra.mxu0 0
        %1381 = vmatprep.subr.bf16.mxu0 0
        %1382 = vmatpush1.bf16.msra.mxu0 0
        %1383 = vmatprep.subr.bf16.mxu0 0
        %1384 = vmatpush1.bf16.msra.mxu0 0
        %1385 = vmatprep.subr.bf16.mxu0 0
        %1386 = vmatpush1.bf16.msra.mxu0 0
        %1387 = vmatprep.subr.bf16.mxu0 0
        %1388 = vmatpush1.bf16.msra.mxu0 0
        %1389 = vmatprep.subr.bf16.mxu0 0
        %1390 = vmatpush1.bf16.msra.mxu0 0
        %1391 = vmatprep.subr.bf16.mxu0 0
        %1392 = vmatpush1.bf16.msra.mxu0 0
        %1393 = vmatprep.subr.bf16.mxu0 0
        %1394 = vmatpush1.bf16.msra.mxu0 0
        %1395 = vmatprep.subr.bf16.mxu0 0
        %1396 = vmatpush1.bf16.msra.mxu0 0
        %1397 = vmatprep.subr.bf16.mxu0 0
        %1398 = vmatpush1.bf16.msra.mxu0 0
        %1399 = vmatprep.subr.bf16.mxu0 0
        %1400 = vmatpush1.bf16.msra.mxu0 0
        %1401 = vmatprep.subr.bf16.mxu0 0
        %1402 = vmatpush1.bf16.msra.mxu0 0
        %1403 = vmatprep.subr.bf16.mxu0 0
        %1404 = vmatpush1.bf16.msra.mxu0 0
        %1405 = vmatprep.subr.bf16.mxu0 0
        %1406 = vmatpush1.bf16.msra.mxu0 0
        %1407 = vmatprep.mubr.bf16.mxu0 0
        %1408 = vmatmul.mubr.bf16.gmra.mrb[0].mxu0 %v1370
        %v1409 = vpop.f32.mrb[0].mxu0
        %v1410 = vadd.f32 0.0, %v1409
        %v1411 = vpop.f32.mrb[0].mxu0
        %v1412 = vpop.f32.mrb[0].mxu0
        %v1413 = vpop.f32.mrb[0].mxu0
        %1414 = vdwg.mxu0
        %v1415 = vadd.f32 %v1256, %v1410
        %v1416 = vlaneseq
        %v1417 = vshrl.u32 %v1416, 7
        %v1418 = vsub.s32 3, %v1417
        %v1419 = vrot.slane %v544, %v1418
        %v1420 = vadd.f32 %v1415, %v1419
        %v1421 = vadd.f32 %v716, %v1420
        %v1422 = vsel %vm738, %v1421, 0.0
        %1423 = vadd.xlane.f32.xlu0 %v1422
        %v1424 = vpop.xlane.xlu0 %1423
        %v1425 = vrcp.pop 32.0
        %v1426 = vmul.f32 %v1424, %v1425
        %v1427 = vsub.f32 %v1421, %v1426
        %v1428 = vmul.f32 %v1427, %v1427
        %v1429 = vsel %vm738, %v1428, 0.0
        %1430 = vadd.xlane.f32.xlu0 %v1429
        %v1431 = vpop.xlane.xlu0 %1430
        %v1432 = vmul.f32 %v1431, %v1425
        %v1433 = vadd.f32 %v1432, 1e-05
        %v1434 = vrsqrt.pop %v1433
        %v1435 = vmul.f32 %v1427, %v1434
        %v1436 = vlaneseq
        %v1437 = vshrl.u32 %v1436, 7
        %v1438 = vsub.s32 4, %v1437
        %v1439 = vrot.slane %v544, %v1438
        %v1440 = vmul.f32 %v1435, %v1439
        %v1441 = vlaneseq
        %v1442 = vshrl.u32 %v1441, 7
        %v1443 = vsub.s32 5, %v1442
        %v1444 = vrot.slane %v544, %v1443
        %v1445 = vadd.f32 %v1440, %v1444
        %v1446 = vpack.c.bf16 %v1445, %v1445
        %v1447 = vld [vmem:[#allocation15] sm:$0xf]
        %v1448 = vld [vmem:[#allocation15 + $0x4] sm:$0xf]
        %v1449 = vld [vmem:[#allocation15 + $0x8] sm:$0xf]
        %v1450 = vld [vmem:[#allocation15 + $0xc] sm:$0xf]
        %v1451 = vld [vmem:[#allocation16] sm:$0x1]
        %v1453 = vlaneseq
        %v1454 = vshrl.u32 %v1453, 7
        %v1455 = vsub.s32 0, %v1454
        %v1456 = vrot.slane %v1451, %v1455
        %v1462 = vunpack.c.l.b16 %v1447
        %v1463 = vunpack.c.l.b16 %v1448
        %v1464 = vunpack.c.l.b16 %v1449
        %v1465 = vunpack.c.l.b16 %v1450
        %v1466 = vpack.c.b16 %v1463, %v1462
        %v1467 = vpack.c.b16 %v1465, %v1464
        %v1471 = vsel %vm738, %v1446, 0
        %1473 = vmatprep.subr.bf16.mxu0 0
        %1474 = vmatpush1.bf16.msra.mxu0 %v1466
        %1475 = vmatprep.subr.bf16.mxu0 0
        %1476 = vmatpush1.bf16.msra.mxu0 %v1467
        %1477 = vmatprep.subr.bf16.mxu0 0
        %1478 = vmatpush1.bf16.msra.mxu0 0
        %1479 = vmatprep.subr.bf16.mxu0 0
        %1480 = vmatpush1.bf16.msra.mxu0 0
        %1481 = vmatprep.subr.bf16.mxu0 0
        %1482 = vmatpush1.bf16.msra.mxu0 0
        %1483 = vmatprep.subr.bf16.mxu0 0
        %1484 = vmatpush1.bf16.msra.mxu0 0
        %1485 = vmatprep.subr.bf16.mxu0 0
        %1486 = vmatpush1.bf16.msra.mxu0 0
        %1487 = vmatprep.subr.bf16.mxu0 0
        %1488 = vmatpush1.bf16.msra.mxu0 0
        %1489 = vmatprep.subr.bf16.mxu0 0
        %1490 = vmatpush1.bf16.msra.mxu0 0
        %1491 = vmatprep.subr.bf16.mxu0 0
        %1492 = vmatpush1.bf16.msra.mxu0 0
        %1493 = vmatprep.subr.bf16.mxu0 0
        %1494 = vmatpush1.bf16.msra.mxu0 0
        %1495 = vmatprep.subr.bf16.mxu0 0
        %1496 = vmatpush1.bf16.msra.mxu0 0
        %1497 = vmatprep.subr.bf16.mxu0 0
        %1498 = vmatpush1.bf16.msra.mxu0 0
        %1499 = vmatprep.subr.bf16.mxu0 0
        %1500 = vmatpush1.bf16.msra.mxu0 0
        %1501 = vmatprep.subr.bf16.mxu0 0
        %1502 = vmatpush1.bf16.msra.mxu0 0
        %1503 = vmatprep.subr.bf16.mxu0 0
        %1504 = vmatpush1.bf16.msra.mxu0 0
        %1505 = vmatprep.mubr.bf16.mxu0 0
        %1506 = vmatmul.mubr.bf16.gmra.mrb[0].mxu0 %v1471
        %v1507 = vpop.f32.mrb[0].mxu0
        %v1508 = vadd.f32 %v1456, %v1507
        %v1509 = vpop.f32.mrb[0].mxu0
        %v1510 = vpop.f32.mrb[0].mxu0
        %v1511 = vpop.f32.mrb[0].mxu0
        %1512 = vdwg.mxu0
        %v1513 = vmul.f32 %v1508, 0.5
        %v1514 = vmul.f32 %v1508, 0.70710677
        %v1515 = verf.f32.pop %v1514
        %v1516 = vadd.f32 %v1515, 1.0
        %v1517 = vmul.f32 %v1513, %v1516
        %v1518 = vpack.c.bf16 %v1517, %v1517
        %v1519 = vld [vmem:[#allocation18] sm:$0xf]
        %v1520 = vld [vmem:[#allocation18 + $0x4] sm:$0xf]
        %v1521 = vld [vmem:[#allocation18 + $0x8] sm:$0xf]
        %v1522 = vld [vmem:[#allocation18 + $0xc] sm:$0xf]
        %v1523 = vld [vmem:[#allocation18 + $0x10] sm:$0xf]
        %v1524 = vld [vmem:[#allocation18 + $0x14] sm:$0xf]
        %v1525 = vld [vmem:[#allocation18 + $0x18] sm:$0xf]
        %v1526 = vld [vmem:[#allocation18 + $0x1c] sm:$0xf]
        %v1527 = vld [vmem:[#allocation18 + $0x20] sm:$0xf]
        %v1528 = vld [vmem:[#allocation18 + $0x24] sm:$0xf]
        %v1529 = vld [vmem:[#allocation18 + $0x28] sm:$0xf]
        %v1530 = vld [vmem:[#allocation18 + $0x2c] sm:$0xf]
        %v1531 = vld [vmem:[#allocation18 + $0x30] sm:$0xf]
        %v1532 = vld [vmem:[#allocation18 + $0x34] sm:$0xf]
        %v1533 = vld [vmem:[#allocation18 + $0x38] sm:$0xf]
        %v1534 = vld [vmem:[#allocation18 + $0x3c] sm:$0xf]
        %v1535 = vlaneseq
        %v1536 = vshrl.u32 %v1535, 7
        %v1537 = vsub.s32 6, %v1536
        %v1538 = vrot.slane %v544, %v1537
        %v1555 = vunpack.c.l.b16 %v1519
        %v1556 = vunpack.c.l.b16 %v1520
        %v1557 = vunpack.c.l.b16 %v1521
        %v1558 = vunpack.c.l.b16 %v1522
        %v1559 = vunpack.c.l.b16 %v1523
        %v1560 = vunpack.c.l.b16 %v1524
        %v1561 = vunpack.c.l.b16 %v1525
        %v1562 = vunpack.c.l.b16 %v1526
        %v1563 = vunpack.c.l.b16 %v1527
        %v1564 = vunpack.c.l.b16 %v1528
        %v1565 = vunpack.c.l.b16 %v1529
        %v1566 = vunpack.c.l.b16 %v1530
        %v1567 = vunpack.c.l.b16 %v1531
        %v1568 = vunpack.c.l.b16 %v1532
        %v1569 = vunpack.c.l.b16 %v1533
        %v1570 = vunpack.c.l.b16 %v1534
        %v1571 = vpack.c.b16 %v1556, %v1555
        %v1572 = vpack.c.b16 %v1558, %v1557
        %v1573 = vpack.c.b16 %v1560, %v1559
        %v1574 = vpack.c.b16 %v1562, %v1561
        %v1575 = vpack.c.b16 %v1564, %v1563
        %v1576 = vpack.c.b16 %v1566, %v1565
        %v1577 = vpack.c.b16 %v1568, %v1567
        %v1578 = vpack.c.b16 %v1570, %v1569
        %1587 = vmatprep.subr.bf16.mxu0 0
        %1588 = vmatpush1.bf16.msra.mxu0 %v1571
        %1589 = vmatprep.subr.bf16.mxu0 0
        %1590 = vmatpush1.bf16.msra.mxu0 %v1572
        %1591 = vmatprep.subr.bf16.mxu0 0
        %1592 = vmatpush1.bf16.msra.mxu0 %v1573
        %1593 = vmatprep.subr.bf16.mxu0 0
        %1594 = vmatpush1.bf16.msra.mxu0 %v1574
        %1595 = vmatprep.subr.bf16.mxu0 0
        %1596 = vmatpush1.bf16.msra.mxu0 %v1575
        %1597 = vmatprep.subr.bf16.mxu0 0
        %1598 = vmatpush1.bf16.msra.mxu0 %v1576
        %1599 = vmatprep.subr.bf16.mxu0 0
        %1600 = vmatpush1.bf16.msra.mxu0 %v1577
        %1601 = vmatprep.subr.bf16.mxu0 0
        %1602 = vmatpush1.bf16.msra.mxu0 %v1578
        %1603 = vmatprep.subr.bf16.mxu0 0
        %1604 = vmatpush1.bf16.msra.mxu0 0
        %1605 = vmatprep.subr.bf16.mxu0 0
        %1606 = vmatpush1.bf16.msra.mxu0 0
        %1607 = vmatprep.subr.bf16.mxu0 0
        %1608 = vmatpush1.bf16.msra.mxu0 0
        %1609 = vmatprep.subr.bf16.mxu0 0
        %1610 = vmatpush1.bf16.msra.mxu0 0
        %1611 = vmatprep.subr.bf16.mxu0 0
        %1612 = vmatpush1.bf16.msra.mxu0 0
        %1613 = vmatprep.subr.bf16.mxu0 0
        %1614 = vmatpush1.bf16.msra.mxu0 0
        %1615 = vmatprep.subr.bf16.mxu0 0
        %1616 = vmatpush1.bf16.msra.mxu0 0
        %1617 = vmatprep.subr.bf16.mxu0 0
        %1618 = vmatpush1.bf16.msra.mxu0 0
        %1619 = vmatprep.mubr.bf16.mxu0 0
        %1620 = vmatmul.mubr.bf16.gmra.mrb[0].mxu0 %v1518
        %v1621 = vpop.f32.mrb[0].mxu0
        %v1622 = vadd.f32 %v1538, %v1621
        %v1623 = vpop.f32.mrb[0].mxu0
        %v1624 = vpop.f32.mrb[0].mxu0
        %v1625 = vpop.f32.mrb[0].mxu0
        %1626 = vdwg.mxu0
        %v1627 = vadd.f32 %v1445, %v1622
        %v1628 = vsel %vm738, %v1627, 0.0
        %1629 = vadd.xlane.f32.xlu0 %v1628
        %v1630 = vpop.xlane.xlu0 %1629
        %v1631 = vmul.f32 %v1630, %v1425
        %v1632 = vsub.f32 %v1627, %v1631
        %v1633 = vmul.f32 %v1632, %v1632
        %v1634 = vsel %vm738, %v1633, 0.0
        %1635 = vadd.xlane.f32.xlu0 %v1634
        %v1636 = vpop.xlane.xlu0 %1635
        %v1637 = vmul.f32 %v1636, %v1425
        %v1638 = vadd.f32 %v1637, 1e-05
        %v1639 = vrsqrt.pop %v1638
        %v1640 = vmul.f32 %v1632, %v1639
        %v1641 = vlaneseq
        %v1642 = vshrl.u32 %v1641, 7
        %v1643 = vsub.s32 7, %v1642
        %v1644 = vrot.slane %v544, %v1643
        %v1645 = vmul.f32 %v1640, %v1644
        %v1646 = vlaneseq
        %v1647 = vshrl.u32 %v1646, 7
        %v1648 = vsub.s32 0, %v1647
        %v1649 = vrot.slane %v545, %v1648
        %v1650 = vadd.f32 %v1645, %v1649
        %1651 = vst.msk [vmem:[%s542] sm:$0xff] %vm738, %v1650
        %s1652 = sand.u32 %s278, 1
        %s1653 = scalar_lea.sflag [#allocation6], %s1652
        %s1654 = sand.u32 %s278, 1
        %s1655 = smul.addr %s1654, 8
        %s1656 = scalar_lea.vmem [#allocation21], %s1655
        // Predicated region
        $region105: #{tpu_custom_call.1} parent=59 // pred_check
          %p1657 = pneg %p288
        $region106: #{tpu_custom_call.1} parent=59 // pred_check_branch
          %1659 = sbr.rel (%p1657) target = $region108
        $region107: #{tpu_custom_call.1} parent=59 // pred_region
          %s1661 = ssub.s32 128, 128
          %1662 = vsyncadd %s1653, %s1661
          %s1663 = sadd.s32 %s39, %s38
          %s1664 = smul.addr %s1663, 128
          %s1665 = scalar_lea.hbm %s10, %s1664
          %s1667 = sshll.u32 %s1656, 4
          %s1668 = int_to_ptr.vmem [resolvable:$true] %s1667
          %1670 = dma.vmem_to_hbm [thread:$0]  %s1668, 128, %s1665, %s1653
        $region108: #{tpu_custom_call.1} parent=59 // pred_fallthru
          _
      $region60: #{tpu_custom_call.1} parent=5 // pred_fallthru
        _
      %p1671 = scmp.le.s32.totalorder 2, %s29
      // Predicated region
      $region109: #{tpu_custom_call.1} parent=5 // pred_check
        %p1672 = pneg %p1671
      $region110: #{tpu_custom_call.1} parent=5 // pred_check_branch
        %1674 = sbr.rel (%p1672) target = $region112
      $region111: #{tpu_custom_call.1} parent=5 // pred_region
        %s1675 = ssub.s32 %s29, 2
        // Predicated region
        $region113: #{tpu_custom_call.1} parent=111 // pred_check
          %p1676 = pneg %p294
        $region114: #{tpu_custom_call.1} parent=111 // pred_check_branch
          %1678 = sbr.rel (%p1676) target = $region116
        $region115: #{tpu_custom_call.1} parent=111 // pred_region
          %s1679 = sand.u32 %s279, 1
          %s1680 = scalar_lea.sflag [#allocation6], %s1679
          %s1681 = sand.u32 %s279, 1
          %s1682 = smul.addr %s1681, 8
          %s1683 = scalar_lea.vmem [#allocation21], %s1682
          %1684 = dma.done %s1680, 128
        $region116: #{tpu_custom_call.1} parent=111 // pred_fallthru
          _
      $region112: #{tpu_custom_call.1} parent=5 // pred_fallthru
        _
    $region6: #{tpu_custom_call.1} parent=1 // loop_footer
      %s33 = sadd.s32 1, %s29
    $region7: #{tpu_custom_call.1} parent=1 // loop_footer_branch
      %28 = sbr.rel target = $region3
    $region8: #{tpu_custom_call.1} parent=1 // loop_exit
      _
    %1685 = vsyncpa [#allocation5], 1
    %s1686 = scalar_lea.sflag [#allocation5], 1
    %1687 = vsyncpa %s1686, 1
    %1688 = vsyncpa [#allocation8], 1
    %s1689 = scalar_lea.sflag [#allocation8], 1
    %1690 = vsyncpa %s1689, 1
    %1691 = vsyncpa [#allocation11], 1
    %1692 = vsyncpa [#allocation14], 1
    %1693 = vsyncpa [#allocation17], 1
    %1694 = vsyncpa [#allocation20], 1
    %1695 = vsyncpa [#allocation6], 1
    %s1696 = scalar_lea.sflag [#allocation6], 1
    %1697 = vsyncpa %s1696, 1

</llo_original>
